<compile_context>
chip_gen: v7x
topology: tpu7x:2x2x1
jax: 0.10.0
libtpu: 0.0.40
codegen_flags: <defaults>
</compile_context>

<pallas_src>
import functools
import math

import jax
import jax.numpy as jnp
from jax import lax
from jax.experimental import pallas as pl
from jax.experimental.pallas import tpu as pltpu

EPS = 1e-5     # PyTorch BatchNorm2d default eps
LANE = 128     # TPU lane width


def _round_up(x, m):
    return ((x + m - 1) // m) * m


# -----------------------------------------------------------------------------
# In-kernel helpers
# -----------------------------------------------------------------------------
def _conv3x3_from_padded(xp, w_ref, bias, *, Ho, Wo, stride):
    """Direct 3x3 conv on a spatially zero-padded VMEM value.

    xp    : (Hp, Wp, Cin)       bf16 value (already zero-padded by 1 pixel)
    w_ref : (3, 3*Cin, Cout)    bf16 ref, indexed by kh; K ordered (kw, cin)
    bias  : (1, Cout)           f32 value
    returns (Ho*Wo, Cout) f32 pre-activation.
    """
    Hp, Wp, cin = xp.shape
    # Build the 3 kw-shifted windows ONCE (sublane-offset slices), reuse across kh.
    cols = []
    for dj in range(3):
        if stride == 1:
            cols.append(xp[:, dj:dj + Wo, :])
        else:
            cols.append(lax.slice(xp, (0, dj, 0),
                                  (Hp, dj + stride * (Wo - 1) + 1, cin),
                                  (1, stride, 1)))
    xcat = jnp.concatenate(cols, axis=-1)                # (Hp, Wo, 3*Cin)

    acc = None
    for di in range(3):
        if stride == 1:
            win = xcat[di:di + Ho]                       # major-dim slice: free
        else:
            win = lax.slice(xcat, (di, 0, 0),
                            (di + stride * (Ho - 1) + 1, Wo, 3 * cin),
                            (stride, 1, 1))
        d = jnp.dot(win.reshape(Ho * Wo, 3 * cin), w_ref[di],
                    preferred_element_type=jnp.float32)
        acc = d if acc is None else acc + d
    return acc + bias


def _basic_block_kernel(x_ref, w1_ref, b1_ref, w2_ref, b2_ref, *rest,
                        stride, has_downsample):
    """Whole BasicBlock for one sample.

    x_ref : (1, H, W, Cin_p)      bf16
    w1_ref: (3, 3*Cin_p, Cout_p)  bf16 (BN-folded)
    b1_ref: (1, Cout_p)           f32
    w2_ref: (3, 3*Cout_p, Cout_p) bf16 (BN-folded)
    b2_ref: (1, Cout_p)           f32
    rest  : [wd_ref (Cin_p,Cout_p) bf16, bd_ref (1,Cout_p) f32,]
            o_ref (1, Ho, Wo, Cout_p) bf16,
            p1_ref VMEM (H+2, W+2, Cin_p) bf16, p2_ref VMEM (Ho+2, Wo+2, Cout_p) bf16
    """
    if has_downsample:
        wd_ref, bd_ref, o_ref, p1_ref, p2_ref = rest
    else:
        o_ref, p1_ref, p2_ref = rest

    H, W, cin = x_ref.shape[1], x_ref.shape[2], x_ref.shape[3]
    Ho, Wo, cout = o_ref.shape[1], o_ref.shape[2], o_ref.shape[3]

    x = x_ref[0]                                         # (H, W, Cin_p) bf16

    # ---- conv1 + bn1 + relu --------------------------------------------------
    # Spatial zero-pad inside the kernel (VMEM-only traffic).
    p1_ref[...] = jnp.zeros_like(p1_ref)
    p1_ref[1:H + 1, 1:W + 1, :] = x
    y1 = _conv3x3_from_padded(p1_ref[...], w1_ref, b1_ref[...],
                              Ho=Ho, Wo=Wo, stride=stride)
    y1 = jnp.maximum(y1, 0.0)

    # Intermediate activation stays in VMEM, bf16, spatially padded for conv2.
    p2_ref[...] = jnp.zeros_like(p2_ref)
    p2_ref[1:Ho + 1, 1:Wo + 1, :] = y1.reshape(Ho, Wo, cout).astype(p2_ref.dtype)

    # ---- residual path -------------------------------------------------------
    if has_downsample:
        if stride == 1:
            xs = x
        else:
            xs = lax.slice(x, (0, 0, 0),
                           (stride * (Ho - 1) + 1, stride * (Wo - 1) + 1, cin),
                           (stride, stride, 1))
        res = jnp.dot(xs.reshape(Ho * Wo, cin), wd_ref[...],
                      preferred_element_type=jnp.float32) + bd_ref[...]
    else:
        # stride == 1 and cin_p == cout_p (asserted in the wrapper)
        res = x.reshape(Ho * Wo, cin).astype(jnp.float32)

    # ---- conv2 + bn2 + residual + relu --------------------------------------
    y2 = _conv3x3_from_padded(p2_ref[...], w2_ref, b2_ref[...],
                              Ho=Ho, Wo=Wo, stride=1)
    y2 = jnp.maximum(y2 + res, 0.0)
    o_ref[0] = y2.reshape(Ho, Wo, cout).astype(o_ref.dtype)


# -----------------------------------------------------------------------------
# pallas_call wrapper
# -----------------------------------------------------------------------------
def basic_block_fused(x_nhwc, params):
    """x_nhwc: (N, H, W, Cin_p) bf16, channel-padded.  Returns (N, Ho, Wo, Cout_p) bf16."""
    N, H, W, cin_p = x_nhwc.shape
    stride = params["stride"]
    cout_p = params["cout_p"]
    Ho = (H + 2 - 3) // stride + 1
    Wo = (W + 2 - 3) // stride + 1
    has_ds = params["wd"] is not None
    if not has_ds:
        assert stride == 1 and cin_p == cout_p, (
            "identity residual requires stride=1 and matching channel counts")

    in_specs = [
        pl.BlockSpec((1, H, W, cin_p), lambda n: (n, 0, 0, 0)),
        pl.BlockSpec((3, 3 * cin_p, cout_p), lambda n: (0, 0, 0)),
        pl.BlockSpec((1, cout_p), lambda n: (0, 0)),
        pl.BlockSpec((3, 3 * cout_p, cout_p), lambda n: (0, 0, 0)),
        pl.BlockSpec((1, cout_p), lambda n: (0, 0)),
    ]
    args = [x_nhwc, params["w1"], params["b1"], params["w2"], params["b2"]]
    if has_ds:
        in_specs += [pl.BlockSpec((cin_p, cout_p), lambda n: (0, 0)),
                     pl.BlockSpec((1, cout_p), lambda n: (0, 0))]
        args += [params["wd"], params["bd"]]

    kernel = functools.partial(_basic_block_kernel, stride=stride,
                               has_downsample=has_ds)
    return pl.pallas_call(
        kernel,
        out_shape=jax.ShapeDtypeStruct((N, Ho, Wo, cout_p), jnp.bfloat16),
        grid=(N,),
        in_specs=in_specs,
        out_specs=pl.BlockSpec((1, Ho, Wo, cout_p), lambda n: (n, 0, 0, 0)),
        scratch_shapes=[pltpu.VMEM((H + 2, W + 2, cin_p), jnp.bfloat16),
                        pltpu.VMEM((Ho + 2, Wo + 2, cout_p), jnp.bfloat16)],
        compiler_params=pltpu.CompilerParams(
            dimension_semantics=("parallel",)),
    )(*args)


# -----------------------------------------------------------------------------
# Parameter construction (mirrors BasicBlock.__init__, BN folded for inference)
# -----------------------------------------------------------------------------
def _conv_weight(key, cout, cin, kh, kw):
    std = math.sqrt(2.0 / (kh * kw * cout))
    return jax.random.normal(key, (cout, cin, kh, kw), jnp.float32) * std


def _fold_bn(w_oihw, gamma, beta, mean, var):
    scale = gamma / jnp.sqrt(var + EPS)
    return w_oihw * scale[:, None, None, None], beta - mean * scale


def _prep_conv3x3(w_oihw, cin_p, cout_p):
    """OIHW -> (kh, kw*Cin_p, Cout_p) bf16, K ordered (kw, cin), zero-padded channels."""
    cout, cin, kh, kw = w_oihw.shape
    w = jnp.transpose(w_oihw, (2, 3, 1, 0))                       # (kh, kw, cin, cout)
    w = jnp.pad(w, ((0, 0), (0, 0), (0, cin_p - cin), (0, cout_p - cout)))
    return w.reshape(kh, kw * cin_p, cout_p).astype(jnp.bfloat16)


def _prep_bias(b, cout_p):
    return jnp.pad(b, (0, cout_p - b.shape[0])).reshape(1, cout_p).astype(jnp.float32)


def build_basic_block_params(key, inplanes, planes, stride=1, with_downsample=False):
    """BatchNorm uses freshly-initialized stats (mean=0, var=1, gamma=1, beta=0)."""
    k1, k2, kd = jax.random.split(key, 3)
    cin_p = _round_up(inplanes, LANE)
    cout_p = _round_up(planes, LANE)
    ones = jnp.ones((planes,), jnp.float32)
    zeros = jnp.zeros((planes,), jnp.float32)

    w1, b1 = _fold_bn(_conv_weight(k1, planes, inplanes, 3, 3), ones, zeros, zeros, ones)
    w2, b2 = _fold_bn(_conv_weight(k2, planes, planes, 3, 3), ones, zeros, zeros, ones)
    params = {
        "inplanes": inplanes, "planes": planes, "stride": stride,
        "cin_p": cin_p, "cout_p": cout_p,
        "w1": _prep_conv3x3(w1, cin_p, cout_p), "b1": _prep_bias(b1, cout_p),
        "w2": _prep_conv3x3(w2, cout_p, cout_p), "b2": _prep_bias(b2, cout_p),
        "wd": None, "bd": None,
    }
    if with_downsample:
        wd, bd = _fold_bn(_conv_weight(kd, planes, inplanes, 1, 1),
                          ones, zeros, zeros, ones)
        wdm = jnp.pad(wd[:, :, 0, 0].T, ((0, cin_p - inplanes), (0, cout_p - planes)))
        params["wd"] = wdm.astype(jnp.bfloat16)
        params["bd"] = _prep_bias(bd, cout_p)
    return params


# -----------------------------------------------------------------------------
# Forward pass (matches BasicBlock.forward)
# -----------------------------------------------------------------------------
def basic_block_forward(params, x_nchw):
    inplanes, planes = params["inplanes"], params["planes"]
    cin_p = params["cin_p"]

    x = jnp.transpose(x_nchw, (0, 2, 3, 1)).astype(jnp.float32)                 # NHWC
    xpad = jnp.pad(x, ((0, 0), (0, 0), (0, 0), (0, cin_p - inplanes))).astype(jnp.bfloat16)

    out = basic_block_fused(xpad, params)              # (N, Ho, Wo, Cout_p) bf16
    out = out[..., :planes]
    return jnp.transpose(out, (0, 3, 1, 2)).astype(jnp.float32)                 # NCHW f32


# -----------------------------------------------------------------------------
# Pure-JAX reference (f32, HIGHEST precision) on the same bf16-quantized params
# -----------------------------------------------------------------------------
def _ref_forward(params, x_nchw):
    inplanes, planes = params["inplanes"], params["planes"]
    cin_p = params["cin_p"]
    stride = params["stride"]
    x = jnp.transpose(x_nchw, (0, 2, 3, 1)).astype(jnp.float32)
    xpad = jnp.pad(x, ((0, 0), (0, 0), (0, 0), (0, cin_p - inplanes)))
    xpad = xpad.astype(jnp.bfloat16).astype(jnp.float32)

    def conv(h, w3, b, s):
        cin = w3.shape[1] // 3
        w = w3.astype(jnp.float32).reshape(3, 3, cin, w3.shape[2])   # HWIO
        y = lax.conv_general_dilated(h, w, (s, s), ((1, 1), (1, 1)),
                                     dimension_numbers=("NHWC", "HWIO", "NHWC"),
                                     precision=lax.Precision.HIGHEST)
        return y + b.reshape(1, 1, 1, -1)

    h = jnp.maximum(conv(xpad, params["w1"], params["b1"], stride), 0.0)
    h = h.astype(jnp.bfloat16).astype(jnp.float32)       # mirror the kernel's bf16 intermediate
    if params["wd"] is not None:
        res = xpad[:, ::stride, ::stride, :] @ params["wd"].astype(jnp.float32)
        res = res + params["bd"].reshape(1, 1, 1, -1)
    else:
        res = xpad
    y = jnp.maximum(conv(h, params["w2"], params["b2"], 1) + res, 0.0)
    y = y.astype(jnp.bfloat16).astype(jnp.float32)       # mirror the kernel's bf16 output
    return jnp.transpose(y[..., :planes], (0, 3, 1, 2))


if __name__ == "__main__":
    key = jax.random.PRNGKey(0)
    pkey, xkey = jax.random.split(key)

    # Canonical BasicBlock usage: stride=1, downsample=None, inplanes == planes.
    inplanes = planes = 64
    N, H, W = 2, 16, 16
    params = build_basic_block_params(pkey, inplanes, planes, stride=1,
                                      with_downsample=False)
    x = jax.random.normal(xkey, (N, inplanes, H, W), jnp.float32)      # NCHW input

    fwd = jax.jit(lambda inp: basic_block_forward(params, inp))
    y = jax.block_until_ready(fwd(x))

    assert y.shape == (N, planes, H, W), y.shape
    assert bool(jnp.isfinite(y).all())

    # Numerical check against a plain-JAX reference (same bf16-quantized weights).
    y_ref = _ref_forward(params, x)
    assert bool(jnp.allclose(y, y_ref, atol=0.1, rtol=0.1)), float(
        jnp.max(jnp.abs(y - y_ref)))

    print("KERNEL_OK")
</pallas_src>

<mosaic_0001>
module attributes {stable_mosaic.version = 11 : i64} {
  func.func @_basic_block_kernel(%arg0: i32, %arg1: memref<1x16x16x128xbf16, #tpu.memory_space<vmem>>, %arg2: memref<3x384x128xbf16, #tpu.memory_space<vmem>>, %arg3: memref<1x128xf32, #tpu.memory_space<vmem>>, %arg4: memref<3x384x128xbf16, #tpu.memory_space<vmem>>, %arg5: memref<1x128xf32, #tpu.memory_space<vmem>>, %arg6: memref<1x16x16x128xbf16, #tpu.memory_space<vmem>>, %arg7: memref<18x18x128xbf16, #tpu.memory_space<vmem>>, %arg8: memref<18x18x128xbf16, #tpu.memory_space<vmem>>) attributes {dimension_semantics = [#tpu.dimension_semantics<parallel>], iteration_bounds = array<i64: 2>, scalar_prefetch = 0 : i64, scratch_operands = 2 : i64, tpu.core_type = #tpu.core_type<tc>, window_params = [{transform_indices = @transform_0, window_bounds = array<i64: 1, 16, 16, 128>}, {pipeline_mode = #tpu.pipeline_mode<synchronous>, transform_indices = @transform_1, window_bounds = array<i64: 3, 384, 128>}, {pipeline_mode = #tpu.pipeline_mode<synchronous>, transform_indices = @transform_2, window_bounds = array<i64: 1, 128>}, {pipeline_mode = #tpu.pipeline_mode<synchronous>, transform_indices = @transform_3, window_bounds = array<i64: 3, 384, 128>}, {pipeline_mode = #tpu.pipeline_mode<synchronous>, transform_indices = @transform_4, window_bounds = array<i64: 1, 128>}, {transform_indices = @transform_5, window_bounds = array<i64: 1, 16, 16, 128>}]} {
    %c0 = arith.constant 0 : index
    %c0_0 = arith.constant 0 : index
    %c0_1 = arith.constant 0 : index
    %c0_2 = arith.constant 0 : index
    %0 = vector.load %arg1[%c0, %c0_0, %c0_1, %c0_2] : memref<1x16x16x128xbf16, #tpu.memory_space<vmem>>, vector<1x16x16x128xbf16>
    %1 = vector.shape_cast %0 : vector<1x16x16x128xbf16> to vector<16x16x128xbf16>
    %cst = arith.constant 0.000000e+00 : bf16
    %2 = vector.broadcast %cst : bf16 to vector<18x18x128xbf16>
    %c0_3 = arith.constant 0 : index
    %c0_4 = arith.constant 0 : index
    %c0_5 = arith.constant 0 : index
    %3 = vector.load %arg7[%c0_3, %c0_4, %c0_5] : memref<18x18x128xbf16, #tpu.memory_space<vmem>>, vector<18x18x128xbf16>
    tpu.vector_store %arg7[%c0_3, %c0_4, %c0_5], %2 {strides = array<i32>} : memref<18x18x128xbf16, #tpu.memory_space<vmem>>, vector<18x18x128xbf16>,
    %c1 = arith.constant 1 : index
    %c1_6 = arith.constant 1 : index
    %c0_7 = arith.constant 0 : index
    %4 = vector.load %arg7[%c1, %c1_6, %c0_7] : memref<18x18x128xbf16, #tpu.memory_space<vmem>>, vector<16x16x128xbf16>
    tpu.vector_store %arg7[%c1, %c1_6, %c0_7], %1 {strides = array<i32>} : memref<18x18x128xbf16, #tpu.memory_space<vmem>>, vector<16x16x128xbf16>,
    %c0_8 = arith.constant 0 : index
    %c0_9 = arith.constant 0 : index
    %c0_10 = arith.constant 0 : index
    %5 = vector.load %arg7[%c0_8, %c0_9, %c0_10] : memref<18x18x128xbf16, #tpu.memory_space<vmem>>, vector<18x18x128xbf16>
    %c0_11 = arith.constant 0 : index
    %c0_12 = arith.constant 0 : index
    %6 = vector.load %arg3[%c0_11, %c0_12] : memref<1x128xf32, #tpu.memory_space<vmem>>, vector<1x128xf32>
    %7 = vector.extract_strided_slice %5 {offsets = [0, 0, 0], sizes = [18, 16, 128], strides = [1, 1, 1]} : vector<18x18x128xbf16> to vector<18x16x128xbf16>
    %8 = vector.extract_strided_slice %5 {offsets = [0, 1, 0], sizes = [18, 16, 128], strides = [1, 1, 1]} : vector<18x18x128xbf16> to vector<18x16x128xbf16>
    %9 = vector.extract_strided_slice %5 {offsets = [0, 2, 0], sizes = [18, 16, 128], strides = [1, 1, 1]} : vector<18x18x128xbf16> to vector<18x16x128xbf16>
    %10 = tpu.concatenate %7, %8, %9 in 2 : vector<18x16x128xbf16>, vector<18x16x128xbf16>, vector<18x16x128xbf16> -> vector<18x16x384xbf16>
    %11 = vector.extract_strided_slice %10 {offsets = [0, 0, 0], sizes = [16, 16, 384], strides = [1, 1, 1]} : vector<18x16x384xbf16> to vector<16x16x384xbf16>
    %12 = vector.shape_cast %11 : vector<16x16x384xbf16> to vector<256x384xbf16>
    %c0_13 = arith.constant 0 : index
    %c0_14 = arith.constant 0 : index
    %c0_15 = arith.constant 0 : index
    %13 = vector.load %arg2[%c0_13, %c0_14, %c0_15] : memref<3x384x128xbf16, #tpu.memory_space<vmem>>, vector<1x384x128xbf16>
    %14 = vector.shape_cast %13 : vector<1x384x128xbf16> to vector<384x128xbf16>
    %cst_16 = arith.constant dense<0.000000e+00> : vector<256x128xf32>
    %15 = tpu.matmul %12, %14, %cst_16 {dimension_numbers = #tpu.dot_dimension_numbers<[1], [0], [0], [1], [0, 0, 1, 1], [], []>} : vector<256x384xbf16>, vector<384x128xbf16>, vector<256x128xf32> -> vector<256x128xf32>
    %16 = vector.extract_strided_slice %10 {offsets = [1, 0, 0], sizes = [16, 16, 384], strides = [1, 1, 1]} : vector<18x16x384xbf16> to vector<16x16x384xbf16>
    %17 = vector.shape_cast %16 : vector<16x16x384xbf16> to vector<256x384xbf16>
    %c1_17 = arith.constant 1 : index
    %c0_18 = arith.constant 0 : index
    %c0_19 = arith.constant 0 : index
    %18 = vector.load %arg2[%c1_17, %c0_18, %c0_19] : memref<3x384x128xbf16, #tpu.memory_space<vmem>>, vector<1x384x128xbf16>
    %19 = vector.shape_cast %18 : vector<1x384x128xbf16> to vector<384x128xbf16>
    %cst_20 = arith.constant dense<0.000000e+00> : vector<256x128xf32>
    %20 = tpu.matmul %17, %19, %cst_20 {dimension_numbers = #tpu.dot_dimension_numbers<[1], [0], [0], [1], [0, 0, 1, 1], [], []>} : vector<256x384xbf16>, vector<384x128xbf16>, vector<256x128xf32> -> vector<256x128xf32>
    %21 = arith.addf %15, %20 : vector<256x128xf32>
    %22 = vector.extract_strided_slice %10 {offsets = [2, 0, 0], sizes = [16, 16, 384], strides = [1, 1, 1]} : vector<18x16x384xbf16> to vector<16x16x384xbf16>
    %23 = vector.shape_cast %22 : vector<16x16x384xbf16> to vector<256x384xbf16>
    %c2 = arith.constant 2 : index
    %c0_21 = arith.constant 0 : index
    %c0_22 = arith.constant 0 : index
    %24 = vector.load %arg2[%c2, %c0_21, %c0_22] : memref<3x384x128xbf16, #tpu.memory_space<vmem>>, vector<1x384x128xbf16>
    %25 = vector.shape_cast %24 : vector<1x384x128xbf16> to vector<384x128xbf16>
    %cst_23 = arith.constant dense<0.000000e+00> : vector<256x128xf32>
    %26 = tpu.matmul %23, %25, %cst_23 {dimension_numbers = #tpu.dot_dimension_numbers<[1], [0], [0], [1], [0, 0, 1, 1], [], []>} : vector<256x384xbf16>, vector<384x128xbf16>, vector<256x128xf32> -> vector<256x128xf32>
    %27 = arith.addf %21, %26 : vector<256x128xf32>
    %28 = vector.broadcast %6 : vector<1x128xf32> to vector<256x128xf32>
    %29 = arith.addf %27, %28 : vector<256x128xf32>
    %cst_24 = arith.constant 0.000000e+00 : f32
    %30 = vector.broadcast %cst_24 : f32 to vector<256x128xf32>
    %31 = arith.maximumf %29, %30 : vector<256x128xf32>
    %cst_25 = arith.constant 0.000000e+00 : bf16
    %32 = vector.broadcast %cst_25 : bf16 to vector<18x18x128xbf16>
    %c0_26 = arith.constant 0 : index
    %c0_27 = arith.constant 0 : index
    %c0_28 = arith.constant 0 : index
    %33 = vector.load %arg8[%c0_26, %c0_27, %c0_28] : memref<18x18x128xbf16, #tpu.memory_space<vmem>>, vector<18x18x128xbf16>
    tpu.vector_store %arg8[%c0_26, %c0_27, %c0_28], %32 {strides = array<i32>} : memref<18x18x128xbf16, #tpu.memory_space<vmem>>, vector<18x18x128xbf16>,
    %34 = vector.shape_cast %31 : vector<256x128xf32> to vector<16x16x128xf32>
    %35 = arith.truncf %34 : vector<16x16x128xf32> to vector<16x16x128xbf16>
    %c1_29 = arith.constant 1 : index
    %c1_30 = arith.constant 1 : index
    %c0_31 = arith.constant 0 : index
    %36 = vector.load %arg8[%c1_29, %c1_30, %c0_31] : memref<18x18x128xbf16, #tpu.memory_space<vmem>>, vector<16x16x128xbf16>
    tpu.vector_store %arg8[%c1_29, %c1_30, %c0_31], %35 {strides = array<i32>} : memref<18x18x128xbf16, #tpu.memory_space<vmem>>, vector<16x16x128xbf16>,
    %37 = vector.shape_cast %1 : vector<16x16x128xbf16> to vector<256x128xbf16>
    %38 = arith.extf %37 : vector<256x128xbf16> to vector<256x128xf32>
    %c0_32 = arith.constant 0 : index
    %c0_33 = arith.constant 0 : index
    %c0_34 = arith.constant 0 : index
    %39 = vector.load %arg8[%c0_32, %c0_33, %c0_34] : memref<18x18x128xbf16, #tpu.memory_space<vmem>>, vector<18x18x128xbf16>
    %c0_35 = arith.constant 0 : index
    %c0_36 = arith.constant 0 : index
    %40 = vector.load %arg5[%c0_35, %c0_36] : memref<1x128xf32, #tpu.memory_space<vmem>>, vector<1x128xf32>
    %41 = vector.extract_strided_slice %39 {offsets = [0, 0, 0], sizes = [18, 16, 128], strides = [1, 1, 1]} : vector<18x18x128xbf16> to vector<18x16x128xbf16>
    %42 = vector.extract_strided_slice %39 {offsets = [0, 1, 0], sizes = [18, 16, 128], strides = [1, 1, 1]} : vector<18x18x128xbf16> to vector<18x16x128xbf16>
    %43 = vector.extract_strided_slice %39 {offsets = [0, 2, 0], sizes = [18, 16, 128], strides = [1, 1, 1]} : vector<18x18x128xbf16> to vector<18x16x128xbf16>
    %44 = tpu.concatenate %41, %42, %43 in 2 : vector<18x16x128xbf16>, vector<18x16x128xbf16>, vector<18x16x128xbf16> -> vector<18x16x384xbf16>
    %45 = vector.extract_strided_slice %44 {offsets = [0, 0, 0], sizes = [16, 16, 384], strides = [1, 1, 1]} : vector<18x16x384xbf16> to vector<16x16x384xbf16>
    %46 = vector.shape_cast %45 : vector<16x16x384xbf16> to vector<256x384xbf16>
    %c0_37 = arith.constant 0 : index
    %c0_38 = arith.constant 0 : index
    %c0_39 = arith.constant 0 : index
    %47 = vector.load %arg4[%c0_37, %c0_38, %c0_39] : memref<3x384x128xbf16, #tpu.memory_space<vmem>>, vector<1x384x128xbf16>
    %48 = vector.shape_cast %47 : vector<1x384x128xbf16> to vector<384x128xbf16>
    %cst_40 = arith.constant dense<0.000000e+00> : vector<256x128xf32>
    %49 = tpu.matmul %46, %48, %cst_40 {dimension_numbers = #tpu.dot_dimension_numbers<[1], [0], [0], [1], [0, 0, 1, 1], [], []>} : vector<256x384xbf16>, vector<384x128xbf16>, vector<256x128xf32> -> vector<256x128xf32>
    %50 = vector.extract_strided_slice %44 {offsets = [1, 0, 0], sizes = [16, 16, 384], strides = [1, 1, 1]} : vector<18x16x384xbf16> to vector<16x16x384xbf16>
    %51 = vector.shape_cast %50 : vector<16x16x384xbf16> to vector<256x384xbf16>
    %c1_41 = arith.constant 1 : index
    %c0_42 = arith.constant 0 : index
    %c0_43 = arith.constant 0 : index
    %52 = vector.load %arg4[%c1_41, %c0_42, %c0_43] : memref<3x384x128xbf16, #tpu.memory_space<vmem>>, vector<1x384x128xbf16>
    %53 = vector.shape_cast %52 : vector<1x384x128xbf16> to vector<384x128xbf16>
    %cst_44 = arith.constant dense<0.000000e+00> : vector<256x128xf32>
    %54 = tpu.matmul %51, %53, %cst_44 {dimension_numbers = #tpu.dot_dimension_numbers<[1], [0], [0], [1], [0, 0, 1, 1], [], []>} : vector<256x384xbf16>, vector<384x128xbf16>, vector<256x128xf32> -> vector<256x128xf32>
    %55 = arith.addf %49, %54 : vector<256x128xf32>
    %56 = vector.extract_strided_slice %44 {offsets = [2, 0, 0], sizes = [16, 16, 384], strides = [1, 1, 1]} : vector<18x16x384xbf16> to vector<16x16x384xbf16>
    %57 = vector.shape_cast %56 : vector<16x16x384xbf16> to vector<256x384xbf16>
    %c2_45 = arith.constant 2 : index
    %c0_46 = arith.constant 0 : index
    %c0_47 = arith.constant 0 : index
    %58 = vector.load %arg4[%c2_45, %c0_46, %c0_47] : memref<3x384x128xbf16, #tpu.memory_space<vmem>>, vector<1x384x128xbf16>
    %59 = vector.shape_cast %58 : vector<1x384x128xbf16> to vector<384x128xbf16>
    %cst_48 = arith.constant dense<0.000000e+00> : vector<256x128xf32>
    %60 = tpu.matmul %57, %59, %cst_48 {dimension_numbers = #tpu.dot_dimension_numbers<[1], [0], [0], [1], [0, 0, 1, 1], [], []>} : vector<256x384xbf16>, vector<384x128xbf16>, vector<256x128xf32> -> vector<256x128xf32>
    %61 = arith.addf %55, %60 : vector<256x128xf32>
    %62 = vector.broadcast %40 : vector<1x128xf32> to vector<256x128xf32>
    %63 = arith.addf %61, %62 : vector<256x128xf32>
    %64 = arith.addf %63, %38 : vector<256x128xf32>
    %cst_49 = arith.constant 0.000000e+00 : f32
    %65 = vector.broadcast %cst_49 : f32 to vector<256x128xf32>
    %66 = arith.maximumf %64, %65 : vector<256x128xf32>
    %67 = vector.shape_cast %66 : vector<256x128xf32> to vector<16x16x128xf32>
    %68 = arith.truncf %67 : vector<16x16x128xf32> to vector<16x16x128xbf16>
    %c0_50 = arith.constant 0 : index
    %c0_51 = arith.constant 0 : index
    %c0_52 = arith.constant 0 : index
    %c0_53 = arith.constant 0 : index
    %69 = vector.load %arg6[%c0_50, %c0_51, %c0_52, %c0_53] : memref<1x16x16x128xbf16, #tpu.memory_space<vmem>>, vector<1x16x16x128xbf16>
    %70 = vector.shape_cast %69 : vector<1x16x16x128xbf16> to vector<16x16x128xbf16>
    %71 = vector.shape_cast %68 : vector<16x16x128xbf16> to vector<1x16x16x128xbf16>
    tpu.vector_store %arg6[%c0_50, %c0_51, %c0_52, %c0_53], %71 {strides = array<i32>} : memref<1x16x16x128xbf16, #tpu.memory_space<vmem>>, vector<1x16x16x128xbf16>,
    return
  }
  func.func @transform_0(%arg0: i32) -> (i32, i32, i32, i32) {
    %c0_i32 = arith.constant 0 : i32
    %c0_i32_0 = arith.constant 0 : i32
    %c0_i32_1 = arith.constant 0 : i32
    %c0_i32_2 = arith.constant 0 : i32
    return %arg0, %c0_i32, %c0_i32_0, %c0_i32_1 : i32, i32, i32, i32
  }
  func.func @transform_1(%arg0: i32) -> (i32, i32, i32) {
    %c0_i32 = arith.constant 0 : i32
    %c0_i32_0 = arith.constant 0 : i32
    %c0_i32_1 = arith.constant 0 : i32
    %c0_i32_2 = arith.constant 0 : i32
    return %c0_i32, %c0_i32_0, %c0_i32_1 : i32, i32, i32
  }
  func.func @transform_2(%arg0: i32) -> (i32, i32) {
    %c0_i32 = arith.constant 0 : i32
    %c0_i32_0 = arith.constant 0 : i32
    %c0_i32_1 = arith.constant 0 : i32
    return %c0_i32, %c0_i32_0 : i32, i32
  }
  func.func @transform_3(%arg0: i32) -> (i32, i32, i32) {
    %c0_i32 = arith.constant 0 : i32
    %c0_i32_0 = arith.constant 0 : i32
    %c0_i32_1 = arith.constant 0 : i32
    %c0_i32_2 = arith.constant 0 : i32
    return %c0_i32, %c0_i32_0, %c0_i32_1 : i32, i32, i32
  }
  func.func @transform_4(%arg0: i32) -> (i32, i32) {
    %c0_i32 = arith.constant 0 : i32
    %c0_i32_0 = arith.constant 0 : i32
    %c0_i32_1 = arith.constant 0 : i32
    return %c0_i32, %c0_i32_0 : i32, i32
  }
  func.func @transform_5(%arg0: i32) -> (i32, i32, i32, i32) {
    %c0_i32 = arith.constant 0 : i32
    %c0_i32_0 = arith.constant 0 : i32
    %c0_i32_1 = arith.constant 0 : i32
    %c0_i32_2 = arith.constant 0 : i32
    return %arg0, %c0_i32, %c0_i32_0, %c0_i32_1 : i32, i32, i32, i32
  }
}

</mosaic_0001>

<llo_original>
// kernel: _lambda_.1
$region0: #{_lambda_.1}
  #allocation0 [shape = 'u32[]', space=smem, size = 0x4, offset = 0x4, fixed_abs, tag = 'smem constant byte address 0x4 - core index']
  #allocation1 [shape = 'u32[144,128]{1,0:T(1,128)}', space=vmem, size = 0x12000, scoped, tag = 'internal scratch']
  #allocation2 [shape = 'bf16[18,18,128]{2,1,0:T(8,128)(2,1)}', space=vmem, size = 0x1b000, scoped, tag = 'scratch operand']
  #allocation3 [shape = 'bf16[18,18,128]{2,1,0:T(8,128)(2,1)}', space=vmem, size = 0x1b000, scoped, tag = 'scratch operand']
  %s0 = inlined_call_operand.vmem [shape: bf16[2,16,16,128], index: 0, kind: input, shape index: {}]
  %s1 = inlined_call_operand.vmem [shape: bf16[3,384,128], index: 1, kind: input, shape index: {}]
  %s2 = inlined_call_operand.vmem [shape: f32[1,128], index: 2, kind: input, shape index: {}, may-alias: {2,4}]
  %s3 = inlined_call_operand.vmem [shape: bf16[3,384,128], index: 3, kind: input, shape index: {}]
  %s4 = inlined_call_operand.vmem [shape: f32[1,128], index: 4, kind: input, shape index: {}, may-alias: {2,4}]
  %s5 = inlined_call_operand.vmem [shape: bf16[2,16,16,128], index: 5, kind: output, shape index: {}]
  %s6 = sld [smem:[#allocation0]]
  $region53: #{_lambda_.1} parent=0
    _
  %s8 = ssub.s32 1, %s6
  %s9 = scalar_select 0, %s8, %s6
  loop: start=0, step=1, limit=4
  $region2: #{_lambda_.1} parent=0 // loop_pre_header
    _
  $region3: #{_lambda_.1} parent=0 // loop_header
    %s11 = sphi 0, %s15
    %p12 = scmp.ge.s32.totalorder %s11, 4
    %s21 = sphi 0, %s23
    %s24 = sphi 0, %s21
    %s25 = sphi 0, %s24
    %s41 = sphi 0, %s25
    %s45 = sphi 0, %s45
    %s47 = sphi 0, %s45
    %s48 = sphi 0, %s47
    %s62 = sphi 0, %s48
    %s66 = sphi 0, %s66
    %s68 = sphi 0, %s66
    %s69 = sphi 0, %s68
    %s83 = sphi 0, %s69
    %s87 = sphi 0, %s87
    %s89 = sphi 0, %s87
    %s90 = sphi 0, %s89
    %s104 = sphi 0, %s90
    %s108 = sphi 0, %s108
    %s110 = sphi 0, %s108
    %s111 = sphi 0, %s110
    %s125 = sphi 0, %s111
    %s131 = sphi 0, %s133
    %s134 = sphi 0, %s131
    %s135 = sphi 0, %s134
    %s151 = sphi 0, %s135
  $region4: #{_lambda_.1} parent=0 // loop_header_branch
    %14 = sbr.rel (%p12) target = $region8
  $region5: #{_lambda_.1} parent=0 // loop_body
    %s16 = ssub.s32 %s11, 1
    %s17 = ssub.s32 %s11, 2
    %s18 = sadd.s32 %s11, 1
    %s19 = ssub.s32 %s11, %s18
    %p20 = scmp.eq.s32.totalorder %s19, 0
    %s22 = sadd.s32 %s21, 1
    %s23 = scalar_select %p20, %s21, %s22
    %p26 = pneg %p20
    %p27 = scmp.eq.s32.totalorder %s11, 1
    %p28 = por %p26, %p27
    %p29 = scmp.ne.s32.totalorder %s21, %s24
    %p30 = scmp.eq.s32.totalorder %s11, 0
    %p31 = por %p29, %p30
    %p32 = scmp.ne.s32.totalorder %s21, %s24
    %p33 = scmp.eq.s32.totalorder %s16, 1
    %p34 = por %p32, %p33
    %p35 = scmp.ne.s32.totalorder %s24, %s25
    %p36 = scmp.eq.s32.totalorder %s16, 0
    %p37 = por %p35, %p36
    %p38 = scmp.ne.s32.totalorder %s24, %s25
    %p39 = scmp.eq.s32.totalorder %s17, 1
    %p40 = por %p38, %p39
    %p42 = scmp.ne.s32.totalorder %s25, %s41
    %p43 = scmp.eq.s32.totalorder %s17, 0
    %p44 = por %p42, %p43
    %s46 = sadd.s32 %s45, 1
    %p49 = scmp.eq.s32.totalorder %s11, 1
    %p50 = scmp.ne.s32.totalorder %s45, %s47
    %p51 = scmp.eq.s32.totalorder %s11, 0
    %p52 = por %p50, %p51
    %p53 = scmp.ne.s32.totalorder %s45, %s47
    %p54 = scmp.eq.s32.totalorder %s16, 1
    %p55 = por %p53, %p54
    %p56 = scmp.ne.s32.totalorder %s47, %s48
    %p57 = scmp.eq.s32.totalorder %s16, 0
    %p58 = por %p56, %p57
    %p59 = scmp.ne.s32.totalorder %s47, %s48
    %p60 = scmp.eq.s32.totalorder %s17, 1
    %p61 = por %p59, %p60
    %p63 = scmp.ne.s32.totalorder %s48, %s62
    %p64 = scmp.eq.s32.totalorder %s17, 0
    %p65 = por %p63, %p64
    %s67 = sadd.s32 %s66, 1
    %p70 = scmp.eq.s32.totalorder %s11, 1
    %p71 = scmp.ne.s32.totalorder %s66, %s68
    %p72 = scmp.eq.s32.totalorder %s11, 0
    %p73 = por %p71, %p72
    %p74 = scmp.ne.s32.totalorder %s66, %s68
    %p75 = scmp.eq.s32.totalorder %s16, 1
    %p76 = por %p74, %p75
    %p77 = scmp.ne.s32.totalorder %s68, %s69
    %p78 = scmp.eq.s32.totalorder %s16, 0
    %p79 = por %p77, %p78
    %p80 = scmp.ne.s32.totalorder %s68, %s69
    %p81 = scmp.eq.s32.totalorder %s17, 1
    %p82 = por %p80, %p81
    %p84 = scmp.ne.s32.totalorder %s69, %s83
    %p85 = scmp.eq.s32.totalorder %s17, 0
    %p86 = por %p84, %p85
    %s88 = sadd.s32 %s87, 1
    %p91 = scmp.eq.s32.totalorder %s11, 1
    %p92 = scmp.ne.s32.totalorder %s87, %s89
    %p93 = scmp.eq.s32.totalorder %s11, 0
    %p94 = por %p92, %p93
    %p95 = scmp.ne.s32.totalorder %s87, %s89
    %p96 = scmp.eq.s32.totalorder %s16, 1
    %p97 = por %p95, %p96
    %p98 = scmp.ne.s32.totalorder %s89, %s90
    %p99 = scmp.eq.s32.totalorder %s16, 0
    %p100 = por %p98, %p99
    %p101 = scmp.ne.s32.totalorder %s89, %s90
    %p102 = scmp.eq.s32.totalorder %s17, 1
    %p103 = por %p101, %p102
    %p105 = scmp.ne.s32.totalorder %s90, %s104
    %p106 = scmp.eq.s32.totalorder %s17, 0
    %p107 = por %p105, %p106
    %s109 = sadd.s32 %s108, 1
    %p112 = scmp.eq.s32.totalorder %s11, 1
    %p113 = scmp.ne.s32.totalorder %s108, %s110
    %p114 = scmp.eq.s32.totalorder %s11, 0
    %p115 = por %p113, %p114
    %p116 = scmp.ne.s32.totalorder %s108, %s110
    %p117 = scmp.eq.s32.totalorder %s16, 1
    %p118 = por %p116, %p117
    %p119 = scmp.ne.s32.totalorder %s110, %s111
    %p120 = scmp.eq.s32.totalorder %s16, 0
    %p121 = por %p119, %p120
    %p122 = scmp.ne.s32.totalorder %s110, %s111
    %p123 = scmp.eq.s32.totalorder %s17, 1
    %p124 = por %p122, %p123
    %p126 = scmp.ne.s32.totalorder %s111, %s125
    %p127 = scmp.eq.s32.totalorder %s17, 0
    %p128 = por %p126, %p127
    %s129 = ssub.s32 %s11, %s18
    %p130 = scmp.eq.s32.totalorder %s129, 0
    %s132 = sadd.s32 %s131, 1
    %s133 = scalar_select %p130, %s131, %s132
    %p136 = pneg %p130
    %p137 = scmp.eq.s32.totalorder %s11, 1
    %p138 = por %p136, %p137
    %p139 = scmp.ne.s32.totalorder %s131, %s134
    %p140 = scmp.eq.s32.totalorder %s11, 0
    %p141 = por %p139, %p140
    %p142 = scmp.ne.s32.totalorder %s131, %s134
    %p143 = scmp.eq.s32.totalorder %s16, 1
    %p144 = por %p142, %p143
    %p145 = scmp.ne.s32.totalorder %s134, %s135
    %p146 = scmp.eq.s32.totalorder %s16, 0
    %p147 = por %p145, %p146
    %p148 = scmp.ne.s32.totalorder %s134, %s135
    %p149 = scmp.eq.s32.totalorder %s17, 1
    %p150 = por %p148, %p149
    %p152 = scmp.ne.s32.totalorder %s135, %s151
    %p153 = scmp.eq.s32.totalorder %s17, 0
    %p154 = por %p152, %p153
    %p155 = scmp.le.s32.totalorder 1, %s11
    %p156 = scmp.lt.s32.totalorder %s11, 3
    %p157 = pnand %p155, %p156
    %p158 = pneg %p157
    // Predicated region
    $region9: #{_lambda_.1} parent=5 // pred_check
      _
    $region10: #{_lambda_.1} parent=5 // pred_check_branch
      %160 = sbr.rel (%p157) target = $region12
    $region11: #{_lambda_.1} parent=5 // pred_region
      %s161 = ssub.s32 %s11, 1
      // Predicated region
      $region13: #{_lambda_.1} parent=11 // pred_check
        %p162 = pneg %p58
      $region14: #{_lambda_.1} parent=11 // pred_check_branch
        %164 = sbr.rel (%p162) target = $region16
      $region15: #{_lambda_.1} parent=11 // pred_region
        _
      $region16: #{_lambda_.1} parent=11 // pred_fallthru
        _
      // Predicated region
      $region17: #{_lambda_.1} parent=11 // pred_check
        %p165 = pneg %p79
      $region18: #{_lambda_.1} parent=11 // pred_check_branch
        %167 = sbr.rel (%p165) target = $region20
      $region19: #{_lambda_.1} parent=11 // pred_region
        _
      $region20: #{_lambda_.1} parent=11 // pred_fallthru
        _
      // Predicated region
      $region21: #{_lambda_.1} parent=11 // pred_check
        %p168 = pneg %p100
      $region22: #{_lambda_.1} parent=11 // pred_check_branch
        %170 = sbr.rel (%p168) target = $region24
      $region23: #{_lambda_.1} parent=11 // pred_region
        _
      $region24: #{_lambda_.1} parent=11 // pred_fallthru
        _
      // Predicated region
      $region25: #{_lambda_.1} parent=11 // pred_check
        %p171 = pneg %p121
      $region26: #{_lambda_.1} parent=11 // pred_check_branch
        %173 = sbr.rel (%p171) target = $region28
      $region27: #{_lambda_.1} parent=11 // pred_region
        _
      $region28: #{_lambda_.1} parent=11 // pred_fallthru
        _
    $region12: #{_lambda_.1} parent=5 // pred_fallthru
      _
    %p174 = scmp.lt.s32.totalorder %s11, 2
    // Predicated region
    $region29: #{_lambda_.1} parent=5 // pred_check
      %p175 = pneg %p174
    $region30: #{_lambda_.1} parent=5 // pred_check_branch
      %177 = sbr.rel (%p175) target = $region32
    $region31: #{_lambda_.1} parent=5 // pred_region
      // Predicated region
      $region33: #{_lambda_.1} parent=31 // pred_check
        %p178 = pneg %p31
      $region34: #{_lambda_.1} parent=31 // pred_check_branch
        %180 = sbr.rel (%p178) target = $region36
      $region35: #{_lambda_.1} parent=31 // pred_region
        %p181 = scmp.lt.s32.totalorder %s11, 1
        %s182 = scalar_select %p181, %s11, 1
        %s183 = smul.addr %s182, 32
        %s184 = smul.addr %s183, 4
        %s185 = scalar_lea.vmem %s0, %s184
      $region36: #{_lambda_.1} parent=31 // pred_fallthru
        _
    $region32: #{_lambda_.1} parent=5 // pred_fallthru
      _
    %p186 = scmp.le.s32.totalorder 1, %s11
    %p187 = scmp.lt.s32.totalorder %s11, 3
    %p188 = pnand %p186, %p187
    %p189 = pneg %p188
    // Predicated region
    $region37: #{_lambda_.1} parent=5 // pred_check
      _
    $region38: #{_lambda_.1} parent=5 // pred_check_branch
      %191 = sbr.rel (%p188) target = $region40
    $region39: #{_lambda_.1} parent=5 // pred_region
      %s192 = ssub.s32 %s11, 1
      %p193 = scmp.lt.s32.totalorder %s16, 1
      %s194 = scalar_select %p193, %s16, 1
      %s195 = smul.addr %s194, 32
      %s196 = smul.addr %s195, 4
      %s197 = scalar_lea.vmem %s0, %s196
      %p198 = pneg %p37
      %p199 = pneg %p34
      %p200 = pneg %p58
      %p201 = pneg %p55
      %p202 = pneg %p79
      %p203 = pneg %p76
      %p204 = pneg %p100
      %p205 = pneg %p97
      %p206 = pneg %p121
      %p207 = pneg %p118
      %p208 = pneg %p147
      %p209 = pneg %p144
      %p210 = scmp.lt.s32.totalorder %s16, 1
      %s211 = scalar_select %p210, %s16, 1
      %s212 = smul.addr %s211, 32
      %s213 = smul.addr %s212, 4
      %s214 = scalar_lea.vmem %s5, %s213
      %p215 = scmp.lt.s32.totalorder %s16, 1
      %s216 = scalar_select %p215, %s16, 1
      %s217 = smul.addr %s216, 32
      %s218 = smul.addr %s217, 4
      %s219 = scalar_lea.vmem %s0, %s218
      %p220 = scmp.lt.s32.totalorder %s16, 1
      %s221 = scalar_select %p220, %s16, 1
      %s222 = smul.addr %s221, 32
      %s223 = smul.addr %s222, 4
      %s224 = scalar_lea.vmem %s5, %s223
      %v226 = vld [vmem:[%s219] sm:$0xf]
      %v227 = vld [vmem:[%s219 + $0x4] sm:$0xf]
      %v228 = vld [vmem:[%s219 + $0x8] sm:$0xf]
      %v229 = vld [vmem:[%s219 + $0xc] sm:$0xf]
      %v230 = vld [vmem:[%s219 + $0x10] sm:$0xf]
      %v231 = vld [vmem:[%s219 + $0x14] sm:$0xf]
      %v232 = vld [vmem:[%s219 + $0x18] sm:$0xf]
      %v233 = vld [vmem:[%s219 + $0x1c] sm:$0xf]
      %v234 = vld [vmem:[%s219 + $0x20] sm:$0xf]
      %v235 = vld [vmem:[%s219 + $0x24] sm:$0xf]
      %v236 = vld [vmem:[%s219 + $0x28] sm:$0xf]
      %v237 = vld [vmem:[%s219 + $0x2c] sm:$0xf]
      %v238 = vld [vmem:[%s219 + $0x30] sm:$0xf]
      %v239 = vld [vmem:[%s219 + $0x34] sm:$0xf]
      %v240 = vld [vmem:[%s219 + $0x38] sm:$0xf]
      %v241 = vld [vmem:[%s219 + $0x3c] sm:$0xf]
      %v242 = vld [vmem:[%s219 + $0x40] sm:$0xf]
      %v243 = vld [vmem:[%s219 + $0x44] sm:$0xf]
      %v244 = vld [vmem:[%s219 + $0x48] sm:$0xf]
      %v245 = vld [vmem:[%s219 + $0x4c] sm:$0xf]
      %v246 = vld [vmem:[%s219 + $0x50] sm:$0xf]
      %v247 = vld [vmem:[%s219 + $0x54] sm:$0xf]
      %v248 = vld [vmem:[%s219 + $0x58] sm:$0xf]
      %v249 = vld [vmem:[%s219 + $0x5c] sm:$0xf]
      %v250 = vld [vmem:[%s219 + $0x60] sm:$0xf]
      %v251 = vld [vmem:[%s219 + $0x64] sm:$0xf]
      %v252 = vld [vmem:[%s219 + $0x68] sm:$0xf]
      %v253 = vld [vmem:[%s219 + $0x6c] sm:$0xf]
      %v254 = vld [vmem:[%s219 + $0x70] sm:$0xf]
      %v255 = vld [vmem:[%s219 + $0x74] sm:$0xf]
      %v256 = vld [vmem:[%s219 + $0x78] sm:$0xf]
      %v257 = vld [vmem:[%s219 + $0x7c] sm:$0xf]
      %258 = vst [vmem:[#allocation2] sm:$0xf] 0
      %259 = vst [vmem:[#allocation2 + $0x4] sm:$0xf] 0
      %260 = vst [vmem:[#allocation2 + $0x8] sm:$0x1] 0
      %261 = vst [vmem:[#allocation2 + $0xc] sm:$0xf] 0
      %262 = vst [vmem:[#allocation2 + $0x10] sm:$0xf] 0
      %263 = vst [vmem:[#allocation2 + $0x14] sm:$0x1] 0
      %264 = vst [vmem:[#allocation2 + $0x18] sm:$0xf] 0
      %265 = vst [vmem:[#allocation2 + $0x1c] sm:$0xf] 0
      %266 = vst [vmem:[#allocation2 + $0x20] sm:$0x1] 0
      %267 = vst [vmem:[#allocation2 + $0x24] sm:$0xf] 0
      %268 = vst [vmem:[#allocation2 + $0x28] sm:$0xf] 0
      %269 = vst [vmem:[#allocation2 + $0x2c] sm:$0x1] 0
      %270 = vst [vmem:[#allocation2 + $0x30] sm:$0xf] 0
      %271 = vst [vmem:[#allocation2 + $0x34] sm:$0xf] 0
      %272 = vst [vmem:[#allocation2 + $0x38] sm:$0x1] 0
      %273 = vst [vmem:[#allocation2 + $0x3c] sm:$0xf] 0
      %274 = vst [vmem:[#allocation2 + $0x40] sm:$0xf] 0
      %275 = vst [vmem:[#allocation2 + $0x44] sm:$0x1] 0
      %276 = vst [vmem:[#allocation2 + $0x48] sm:$0xf] 0
      %277 = vst [vmem:[#allocation2 + $0x4c] sm:$0xf] 0
      %278 = vst [vmem:[#allocation2 + $0x50] sm:$0x1] 0
      %279 = vst [vmem:[#allocation2 + $0x54] sm:$0xf] 0
      %280 = vst [vmem:[#allocation2 + $0x58] sm:$0xf] 0
      %281 = vst [vmem:[#allocation2 + $0x5c] sm:$0x1] 0
      %282 = vst [vmem:[#allocation2 + $0x60] sm:$0xf] 0
      %283 = vst [vmem:[#allocation2 + $0x64] sm:$0xf] 0
      %284 = vst [vmem:[#allocation2 + $0x68] sm:$0x1] 0
      %285 = vst [vmem:[#allocation2 + $0x6c] sm:$0xf] 0
      %286 = vst [vmem:[#allocation2 + $0x70] sm:$0xf] 0
      %287 = vst [vmem:[#allocation2 + $0x74] sm:$0x1] 0
      %288 = vst [vmem:[#allocation2 + $0x78] sm:$0xf] 0
      %289 = vst [vmem:[#allocation2 + $0x7c] sm:$0xf] 0
      %290 = vst [vmem:[#allocation2 + $0x80] sm:$0x1] 0
      %291 = vst [vmem:[#allocation2 + $0x84] sm:$0xf] 0
      %292 = vst [vmem:[#allocation2 + $0x88] sm:$0xf] 0
      %293 = vst [vmem:[#allocation2 + $0x8c] sm:$0x1] 0
      %294 = vst [vmem:[#allocation2 + $0x90] sm:$0xf] 0
      %295 = vst [vmem:[#allocation2 + $0x94] sm:$0xf] 0
      %296 = vst [vmem:[#allocation2 + $0x98] sm:$0x1] 0
      %297 = vst [vmem:[#allocation2 + $0x9c] sm:$0xf] 0
      %298 = vst [vmem:[#allocation2 + $0xa0] sm:$0xf] 0
      %299 = vst [vmem:[#allocation2 + $0xa4] sm:$0x1] 0
      %300 = vst [vmem:[#allocation2 + $0xa8] sm:$0xf] 0
      %301 = vst [vmem:[#allocation2 + $0xac] sm:$0xf] 0
      %302 = vst [vmem:[#allocation2 + $0xb0] sm:$0x1] 0
      %303 = vst [vmem:[#allocation2 + $0xb4] sm:$0xf] 0
      %304 = vst [vmem:[#allocation2 + $0xb8] sm:$0xf] 0
      %305 = vst [vmem:[#allocation2 + $0xbc] sm:$0x1] 0
      %306 = vst [vmem:[#allocation2 + $0xc0] sm:$0xf] 0
      %307 = vst [vmem:[#allocation2 + $0xc4] sm:$0xf] 0
      %308 = vst [vmem:[#allocation2 + $0xc8] sm:$0x1] 0
      %309 = vst [vmem:[#allocation2 + $0xcc] sm:$0xf] 0
      %310 = vst [vmem:[#allocation2 + $0xd0] sm:$0xf] 0
      %311 = vst [vmem:[#allocation2 + $0xd4] sm:$0x1] 0
      %vm312 = vsmask.f32 256
      %vm313 = vsmask.f32 4368
      %vm314 = vmor %vm312, %vm313
      %v316 = vshrl.u32 %v226, 16
      %v318 = vrot.slane %v316, 7
      %v319 = vshll.u32 %v226, 16
      %v321 = vor.u32 %v318, %v319
      %v322 = vrot.slane %v318, 4
      %v324 = vshrl.u32 %v227, 16
      %v326 = vrot.slane %v324, 7
      %v327 = vshll.u32 %v227, 16
      %v329 = vor.u32 %v326, %v327
      %v330 = vsel %vm314, %v322, %v329
      %v331 = vrot.slane %v326, 4
      %v333 = vshrl.u32 %v228, 16
      %v335 = vrot.slane %v333, 7
      %v336 = vshll.u32 %v228, 16
      %v338 = vor.u32 %v335, %v336
      %v339 = vrot.slane %v335, 4
      %v341 = vshrl.u32 %v229, 16
      %v343 = vrot.slane %v341, 7
      %v344 = vshll.u32 %v229, 16
      %v346 = vor.u32 %v343, %v344
      %v347 = vsel %vm314, %v339, %v346
      %v348 = vrot.slane %v343, 4
      %v350 = vshrl.u32 %v230, 16
      %v352 = vrot.slane %v350, 7
      %v353 = vshll.u32 %v230, 16
      %v355 = vor.u32 %v352, %v353
      %v356 = vrot.slane %v352, 4
      %v358 = vshrl.u32 %v231, 16
      %v360 = vrot.slane %v358, 7
      %v361 = vshll.u32 %v231, 16
      %v363 = vor.u32 %v360, %v361
      %v364 = vsel %vm314, %v356, %v363
      %v365 = vrot.slane %v360, 4
      %v367 = vshrl.u32 %v232, 16
      %v369 = vrot.slane %v367, 7
      %v370 = vshll.u32 %v232, 16
      %v372 = vor.u32 %v369, %v370
      %v373 = vrot.slane %v369, 4
      %v375 = vshrl.u32 %v233, 16
      %v377 = vrot.slane %v375, 7
      %v378 = vshll.u32 %v233, 16
      %v380 = vor.u32 %v377, %v378
      %v381 = vsel %vm314, %v373, %v380
      %v382 = vrot.slane %v377, 4
      %v384 = vshrl.u32 %v234, 16
      %v386 = vrot.slane %v384, 7
      %v387 = vshll.u32 %v234, 16
      %v389 = vor.u32 %v386, %v387
      %v390 = vrot.slane %v386, 4
      %v392 = vshrl.u32 %v235, 16
      %v394 = vrot.slane %v392, 7
      %v395 = vshll.u32 %v235, 16
      %v397 = vor.u32 %v394, %v395
      %v398 = vsel %vm314, %v390, %v397
      %v399 = vrot.slane %v394, 4
      %v401 = vshrl.u32 %v236, 16
      %v403 = vrot.slane %v401, 7
      %v404 = vshll.u32 %v236, 16
      %v406 = vor.u32 %v403, %v404
      %v407 = vrot.slane %v403, 4
      %v409 = vshrl.u32 %v237, 16
      %v411 = vrot.slane %v409, 7
      %v412 = vshll.u32 %v237, 16
      %v414 = vor.u32 %v411, %v412
      %v415 = vsel %vm314, %v407, %v414
      %v416 = vrot.slane %v411, 4
      %v418 = vshrl.u32 %v238, 16
      %v420 = vrot.slane %v418, 7
      %v421 = vshll.u32 %v238, 16
      %v423 = vor.u32 %v420, %v421
      %v424 = vrot.slane %v420, 4
      %v426 = vshrl.u32 %v239, 16
      %v428 = vrot.slane %v426, 7
      %v429 = vshll.u32 %v239, 16
      %v431 = vor.u32 %v428, %v429
      %v432 = vsel %vm314, %v424, %v431
      %v433 = vrot.slane %v428, 4
      %v435 = vshrl.u32 %v240, 16
      %v437 = vrot.slane %v435, 7
      %v438 = vshll.u32 %v240, 16
      %v440 = vor.u32 %v437, %v438
      %v441 = vrot.slane %v437, 4
      %v443 = vshrl.u32 %v241, 16
      %v445 = vrot.slane %v443, 7
      %v446 = vshll.u32 %v241, 16
      %v448 = vor.u32 %v445, %v446
      %v449 = vsel %vm314, %v441, %v448
      %v450 = vrot.slane %v445, 4
      %v452 = vshrl.u32 %v242, 16
      %v454 = vrot.slane %v452, 7
      %v455 = vshll.u32 %v242, 16
      %v457 = vor.u32 %v454, %v455
      %v458 = vrot.slane %v454, 4
      %v460 = vshrl.u32 %v243, 16
      %v462 = vrot.slane %v460, 7
      %v463 = vshll.u32 %v243, 16
      %v465 = vor.u32 %v462, %v463
      %v466 = vsel %vm314, %v458, %v465
      %v467 = vrot.slane %v462, 4
      %v469 = vshrl.u32 %v244, 16
      %v471 = vrot.slane %v469, 7
      %v472 = vshll.u32 %v244, 16
      %v474 = vor.u32 %v471, %v472
      %v475 = vrot.slane %v471, 4
      %v477 = vshrl.u32 %v245, 16
      %v479 = vrot.slane %v477, 7
      %v480 = vshll.u32 %v245, 16
      %v482 = vor.u32 %v479, %v480
      %v483 = vsel %vm314, %v475, %v482
      %v484 = vrot.slane %v479, 4
      %v486 = vshrl.u32 %v246, 16
      %v488 = vrot.slane %v486, 7
      %v489 = vshll.u32 %v246, 16
      %v491 = vor.u32 %v488, %v489
      %v492 = vrot.slane %v488, 4
      %v494 = vshrl.u32 %v247, 16
      %v496 = vrot.slane %v494, 7
      %v497 = vshll.u32 %v247, 16
      %v499 = vor.u32 %v496, %v497
      %v500 = vsel %vm314, %v492, %v499
      %v501 = vrot.slane %v496, 4
      %v503 = vshrl.u32 %v248, 16
      %v505 = vrot.slane %v503, 7
      %v506 = vshll.u32 %v248, 16
      %v508 = vor.u32 %v505, %v506
      %v509 = vrot.slane %v505, 4
      %v511 = vshrl.u32 %v249, 16
      %v513 = vrot.slane %v511, 7
      %v514 = vshll.u32 %v249, 16
      %v516 = vor.u32 %v513, %v514
      %v517 = vsel %vm314, %v509, %v516
      %v518 = vrot.slane %v513, 4
      %v520 = vshrl.u32 %v250, 16
      %v522 = vrot.slane %v520, 7
      %v523 = vshll.u32 %v250, 16
      %v525 = vor.u32 %v522, %v523
      %v526 = vrot.slane %v522, 4
      %v528 = vshrl.u32 %v251, 16
      %v530 = vrot.slane %v528, 7
      %v531 = vshll.u32 %v251, 16
      %v533 = vor.u32 %v530, %v531
      %v534 = vsel %vm314, %v526, %v533
      %v535 = vrot.slane %v530, 4
      %v537 = vshrl.u32 %v252, 16
      %v539 = vrot.slane %v537, 7
      %v540 = vshll.u32 %v252, 16
      %v542 = vor.u32 %v539, %v540
      %v543 = vrot.slane %v539, 4
      %v545 = vshrl.u32 %v253, 16
      %v547 = vrot.slane %v545, 7
      %v548 = vshll.u32 %v253, 16
      %v550 = vor.u32 %v547, %v548
      %v551 = vsel %vm314, %v543, %v550
      %v552 = vrot.slane %v547, 4
      %v554 = vshrl.u32 %v254, 16
      %v556 = vrot.slane %v554, 7
      %v557 = vshll.u32 %v254, 16
      %v559 = vor.u32 %v556, %v557
      %v560 = vrot.slane %v556, 4
      %v562 = vshrl.u32 %v255, 16
      %v564 = vrot.slane %v562, 7
      %v565 = vshll.u32 %v255, 16
      %v567 = vor.u32 %v564, %v565
      %v568 = vsel %vm314, %v560, %v567
      %v569 = vrot.slane %v564, 4
      %v571 = vshrl.u32 %v256, 16
      %v573 = vrot.slane %v571, 7
      %v574 = vshll.u32 %v256, 16
      %v576 = vor.u32 %v573, %v574
      %v577 = vrot.slane %v573, 4
      %v579 = vshrl.u32 %v257, 16
      %v581 = vrot.slane %v579, 7
      %v582 = vshll.u32 %v257, 16
      %v584 = vor.u32 %v581, %v582
      %v585 = vsel %vm314, %v577, %v584
      %v586 = vrot.slane %v581, 4
      %s635 = scalar_lea.vmem [#allocation2], 12
      %vm636 = vcmask 1043456
      %vm637 = vsmask.f32 7938
      %vm638 = vmand %vm636, %vm637
      %v639 = vld [vmem:[%s635] sm:$0xf]
      %v640 = vsel %vm638, %v321, %v639
      %641 = vst [vmem:[%s635] sm:$0xf] %v640
      %642 = vst [vmem:[%s635 + $0x4] sm:$0xf] %v330
      %vm643 = vcmask 1040384
      %vm644 = vmand %vm643, %vm312
      %v645 = vld [vmem:[%s635 + $0x8] sm:$0x1]
      %v646 = vsel %vm644, %v331, %v645
      %647 = vst [vmem:[%s635 + $0x8] sm:$0x1] %v646
      %v648 = vld [vmem:[%s635 + $0xc] sm:$0xf]
      %v649 = vsel %vm638, %v338, %v648
      %650 = vst [vmem:[%s635 + $0xc] sm:$0xf] %v649
      %651 = vst [vmem:[%s635 + $0x10] sm:$0xf] %v347
      %v652 = vld [vmem:[%s635 + $0x14] sm:$0x1]
      %v653 = vsel %vm644, %v348, %v652
      %654 = vst [vmem:[%s635 + $0x14] sm:$0x1] %v653
      %v655 = vld [vmem:[%s635 + $0x18] sm:$0xf]
      %v656 = vsel %vm638, %v355, %v655
      %657 = vst [vmem:[%s635 + $0x18] sm:$0xf] %v656
      %658 = vst [vmem:[%s635 + $0x1c] sm:$0xf] %v364
      %v659 = vld [vmem:[%s635 + $0x20] sm:$0x1]
      %v660 = vsel %vm644, %v365, %v659
      %661 = vst [vmem:[%s635 + $0x20] sm:$0x1] %v660
      %v662 = vld [vmem:[%s635 + $0x24] sm:$0xf]
      %v663 = vsel %vm638, %v372, %v662
      %664 = vst [vmem:[%s635 + $0x24] sm:$0xf] %v663
      %665 = vst [vmem:[%s635 + $0x28] sm:$0xf] %v381
      %v666 = vld [vmem:[%s635 + $0x2c] sm:$0x1]
      %v667 = vsel %vm644, %v382, %v666
      %668 = vst [vmem:[%s635 + $0x2c] sm:$0x1] %v667
      %v669 = vld [vmem:[%s635 + $0x30] sm:$0xf]
      %v670 = vsel %vm638, %v389, %v669
      %671 = vst [vmem:[%s635 + $0x30] sm:$0xf] %v670
      %672 = vst [vmem:[%s635 + $0x34] sm:$0xf] %v398
      %v673 = vld [vmem:[%s635 + $0x38] sm:$0x1]
      %v674 = vsel %vm644, %v399, %v673
      %675 = vst [vmem:[%s635 + $0x38] sm:$0x1] %v674
      %v676 = vld [vmem:[%s635 + $0x3c] sm:$0xf]
      %v677 = vsel %vm638, %v406, %v676
      %678 = vst [vmem:[%s635 + $0x3c] sm:$0xf] %v677
      %679 = vst [vmem:[%s635 + $0x40] sm:$0xf] %v415
      %v680 = vld [vmem:[%s635 + $0x44] sm:$0x1]
      %v681 = vsel %vm644, %v416, %v680
      %682 = vst [vmem:[%s635 + $0x44] sm:$0x1] %v681
      %v683 = vld [vmem:[%s635 + $0x48] sm:$0xf]
      %v684 = vsel %vm638, %v423, %v683
      %685 = vst [vmem:[%s635 + $0x48] sm:$0xf] %v684
      %686 = vst [vmem:[%s635 + $0x4c] sm:$0xf] %v432
      %v687 = vld [vmem:[%s635 + $0x50] sm:$0x1]
      %v688 = vsel %vm644, %v433, %v687
      %689 = vst [vmem:[%s635 + $0x50] sm:$0x1] %v688
      %v690 = vld [vmem:[%s635 + $0x54] sm:$0xf]
      %v691 = vsel %vm638, %v440, %v690
      %692 = vst [vmem:[%s635 + $0x54] sm:$0xf] %v691
      %693 = vst [vmem:[%s635 + $0x58] sm:$0xf] %v449
      %v694 = vld [vmem:[%s635 + $0x5c] sm:$0x1]
      %v695 = vsel %vm644, %v450, %v694
      %696 = vst [vmem:[%s635 + $0x5c] sm:$0x1] %v695
      %v697 = vld [vmem:[%s635 + $0x60] sm:$0xf]
      %v698 = vsel %vm638, %v457, %v697
      %699 = vst [vmem:[%s635 + $0x60] sm:$0xf] %v698
      %700 = vst [vmem:[%s635 + $0x64] sm:$0xf] %v466
      %v701 = vld [vmem:[%s635 + $0x68] sm:$0x1]
      %v702 = vsel %vm644, %v467, %v701
      %703 = vst [vmem:[%s635 + $0x68] sm:$0x1] %v702
      %v704 = vld [vmem:[%s635 + $0x6c] sm:$0xf]
      %v705 = vsel %vm638, %v474, %v704
      %706 = vst [vmem:[%s635 + $0x6c] sm:$0xf] %v705
      %707 = vst [vmem:[%s635 + $0x70] sm:$0xf] %v483
      %v708 = vld [vmem:[%s635 + $0x74] sm:$0x1]
      %v709 = vsel %vm644, %v484, %v708
      %710 = vst [vmem:[%s635 + $0x74] sm:$0x1] %v709
      %v711 = vld [vmem:[%s635 + $0x78] sm:$0xf]
      %v712 = vsel %vm638, %v491, %v711
      %713 = vst [vmem:[%s635 + $0x78] sm:$0xf] %v712
      %714 = vst [vmem:[%s635 + $0x7c] sm:$0xf] %v500
      %v715 = vld [vmem:[%s635 + $0x80] sm:$0x1]
      %v716 = vsel %vm644, %v501, %v715
      %717 = vst [vmem:[%s635 + $0x80] sm:$0x1] %v716
      %v718 = vld [vmem:[%s635 + $0x84] sm:$0xf]
      %v719 = vsel %vm638, %v508, %v718
      %720 = vst [vmem:[%s635 + $0x84] sm:$0xf] %v719
      %721 = vst [vmem:[%s635 + $0x88] sm:$0xf] %v517
      %v722 = vld [vmem:[%s635 + $0x8c] sm:$0x1]
      %v723 = vsel %vm644, %v518, %v722
      %724 = vst [vmem:[%s635 + $0x8c] sm:$0x1] %v723
      %v725 = vld [vmem:[%s635 + $0x90] sm:$0xf]
      %v726 = vsel %vm638, %v525, %v725
      %727 = vst [vmem:[%s635 + $0x90] sm:$0xf] %v726
      %728 = vst [vmem:[%s635 + $0x94] sm:$0xf] %v534
      %v729 = vld [vmem:[%s635 + $0x98] sm:$0x1]
      %v730 = vsel %vm644, %v535, %v729
      %731 = vst [vmem:[%s635 + $0x98] sm:$0x1] %v730
      %v732 = vld [vmem:[%s635 + $0x9c] sm:$0xf]
      %v733 = vsel %vm638, %v542, %v732
      %734 = vst [vmem:[%s635 + $0x9c] sm:$0xf] %v733
      %735 = vst [vmem:[%s635 + $0xa0] sm:$0xf] %v551
      %v736 = vld [vmem:[%s635 + $0xa4] sm:$0x1]
      %v737 = vsel %vm644, %v552, %v736
      %738 = vst [vmem:[%s635 + $0xa4] sm:$0x1] %v737
      %v739 = vld [vmem:[%s635 + $0xa8] sm:$0xf]
      %v740 = vsel %vm638, %v559, %v739
      %741 = vst [vmem:[%s635 + $0xa8] sm:$0xf] %v740
      %742 = vst [vmem:[%s635 + $0xac] sm:$0xf] %v568
      %v743 = vld [vmem:[%s635 + $0xb0] sm:$0x1]
      %v744 = vsel %vm644, %v569, %v743
      %745 = vst [vmem:[%s635 + $0xb0] sm:$0x1] %v744
      %v746 = vld [vmem:[%s635 + $0xb4] sm:$0xf]
      %v747 = vsel %vm638, %v576, %v746
      %748 = vst [vmem:[%s635 + $0xb4] sm:$0xf] %v747
      %749 = vst [vmem:[%s635 + $0xb8] sm:$0xf] %v585
      %v750 = vld [vmem:[%s635 + $0xbc] sm:$0x1]
      %v751 = vsel %vm644, %v586, %v750
      %752 = vst [vmem:[%s635 + $0xbc] sm:$0x1] %v751
      %v753 = vld [vmem:[#allocation2] sm:$0xf]
      %v754 = vld [vmem:[#allocation2 + $0x4] sm:$0xf]
      %v755 = vld [vmem:[#allocation2 + $0x8] sm:$0x1]
      %v756 = vld [vmem:[#allocation2 + $0xc] sm:$0xf]
      %v757 = vld [vmem:[#allocation2 + $0x10] sm:$0xf]
      %v758 = vld [vmem:[#allocation2 + $0x14] sm:$0x1]
      %v759 = vld [vmem:[#allocation2 + $0x18] sm:$0xf]
      %v760 = vld [vmem:[#allocation2 + $0x1c] sm:$0xf]
      %v761 = vld [vmem:[#allocation2 + $0x20] sm:$0x1]
      %v762 = vld [vmem:[#allocation2 + $0x24] sm:$0xf]
      %v763 = vld [vmem:[#allocation2 + $0x28] sm:$0xf]
      %v764 = vld [vmem:[#allocation2 + $0x2c] sm:$0x1]
      %v765 = vld [vmem:[#allocation2 + $0x30] sm:$0xf]
      %v766 = vld [vmem:[#allocation2 + $0x34] sm:$0xf]
      %v767 = vld [vmem:[#allocation2 + $0x38] sm:$0x1]
      %v768 = vld [vmem:[#allocation2 + $0x3c] sm:$0xf]
      %v769 = vld [vmem:[#allocation2 + $0x40] sm:$0xf]
      %v770 = vld [vmem:[#allocation2 + $0x44] sm:$0x1]
      %v771 = vld [vmem:[#allocation2 + $0x48] sm:$0xf]
      %v772 = vld [vmem:[#allocation2 + $0x4c] sm:$0xf]
      %v773 = vld [vmem:[#allocation2 + $0x50] sm:$0x1]
      %v774 = vld [vmem:[#allocation2 + $0x54] sm:$0xf]
      %v775 = vld [vmem:[#allocation2 + $0x58] sm:$0xf]
      %v776 = vld [vmem:[#allocation2 + $0x5c] sm:$0x1]
      %v777 = vld [vmem:[#allocation2 + $0x60] sm:$0xf]
      %v778 = vld [vmem:[#allocation2 + $0x64] sm:$0xf]
      %v779 = vld [vmem:[#allocation2 + $0x68] sm:$0x1]
      %v780 = vld [vmem:[#allocation2 + $0x6c] sm:$0xf]
      %v781 = vld [vmem:[#allocation2 + $0x70] sm:$0xf]
      %v782 = vld [vmem:[#allocation2 + $0x74] sm:$0x1]
      %v783 = vld [vmem:[#allocation2 + $0x78] sm:$0xf]
      %v784 = vld [vmem:[#allocation2 + $0x7c] sm:$0xf]
      %v785 = vld [vmem:[#allocation2 + $0x80] sm:$0x1]
      %v786 = vld [vmem:[#allocation2 + $0x84] sm:$0xf]
      %v787 = vld [vmem:[#allocation2 + $0x88] sm:$0xf]
      %v788 = vld [vmem:[#allocation2 + $0x8c] sm:$0x1]
      %v789 = vld [vmem:[#allocation2 + $0x90] sm:$0xf]
      %v790 = vld [vmem:[#allocation2 + $0x94] sm:$0xf]
      %v791 = vld [vmem:[#allocation2 + $0x98] sm:$0x1]
      %v792 = vld [vmem:[#allocation2 + $0x9c] sm:$0xf]
      %v793 = vld [vmem:[#allocation2 + $0xa0] sm:$0xf]
      %v794 = vld [vmem:[#allocation2 + $0xa4] sm:$0x1]
      %v795 = vld [vmem:[#allocation2 + $0xa8] sm:$0xf]
      %v796 = vld [vmem:[#allocation2 + $0xac] sm:$0xf]
      %v797 = vld [vmem:[#allocation2 + $0xb0] sm:$0x1]
      %v798 = vld [vmem:[#allocation2 + $0xb4] sm:$0xf]
      %v799 = vld [vmem:[#allocation2 + $0xb8] sm:$0xf]
      %v800 = vld [vmem:[#allocation2 + $0xbc] sm:$0x1]
      %v801 = vld [vmem:[#allocation2 + $0xc0] sm:$0xf]
      %v802 = vld [vmem:[#allocation2 + $0xc4] sm:$0xf]
      %v803 = vld [vmem:[#allocation2 + $0xc8] sm:$0x1]
      %v804 = vld [vmem:[#allocation2 + $0xcc] sm:$0xf]
      %v805 = vld [vmem:[#allocation2 + $0xd0] sm:$0xf]
      %v806 = vld [vmem:[#allocation2 + $0xd4] sm:$0x1]
      %v807 = vld [vmem:[%s2] sm:$0x1]
      %v844 = vunpack.c.l.b16 %v753
      %v845 = vunpack.c.l.b16 %v754
      %v846 = vunpack.c.l.b16 %v756
      %v847 = vunpack.c.l.b16 %v757
      %v848 = vunpack.c.l.b16 %v759
      %v849 = vunpack.c.l.b16 %v760
      %v850 = vunpack.c.l.b16 %v762
      %v851 = vunpack.c.l.b16 %v763
      %v852 = vunpack.c.l.b16 %v765
      %v853 = vunpack.c.l.b16 %v766
      %v854 = vunpack.c.l.b16 %v768
      %v855 = vunpack.c.l.b16 %v769
      %v856 = vunpack.c.l.b16 %v771
      %v857 = vunpack.c.l.b16 %v772
      %v858 = vunpack.c.l.b16 %v774
      %v859 = vunpack.c.l.b16 %v775
      %v860 = vunpack.c.l.b16 %v777
      %v861 = vunpack.c.l.b16 %v778
      %v862 = vunpack.c.l.b16 %v780
      %v863 = vunpack.c.l.b16 %v781
      %v864 = vunpack.c.l.b16 %v783
      %v865 = vunpack.c.l.b16 %v784
      %v866 = vunpack.c.l.b16 %v786
      %v867 = vunpack.c.l.b16 %v787
      %v868 = vunpack.c.l.b16 %v789
      %v869 = vunpack.c.l.b16 %v790
      %v870 = vunpack.c.l.b16 %v792
      %v871 = vunpack.c.l.b16 %v793
      %v872 = vunpack.c.l.b16 %v795
      %v873 = vunpack.c.l.b16 %v796
      %v874 = vunpack.c.l.b16 %v798
      %v875 = vunpack.c.l.b16 %v799
      %v876 = vunpack.c.l.b16 %v801
      %v877 = vunpack.c.l.b16 %v802
      %v878 = vunpack.c.l.b16 %v804
      %v879 = vunpack.c.l.b16 %v805
      %v880 = vpack.c.b16 %v845, %v844
      %v881 = vpack.c.b16 %v847, %v846
      %v882 = vpack.c.b16 %v849, %v848
      %v883 = vpack.c.b16 %v851, %v850
      %v884 = vpack.c.b16 %v853, %v852
      %v885 = vpack.c.b16 %v855, %v854
      %v886 = vpack.c.b16 %v857, %v856
      %v887 = vpack.c.b16 %v859, %v858
      %v888 = vpack.c.b16 %v861, %v860
      %v889 = vpack.c.b16 %v863, %v862
      %v890 = vpack.c.b16 %v865, %v864
      %v891 = vpack.c.b16 %v867, %v866
      %v892 = vpack.c.b16 %v869, %v868
      %v893 = vpack.c.b16 %v871, %v870
      %v894 = vpack.c.b16 %v873, %v872
      %v895 = vpack.c.b16 %v875, %v874
      %v896 = vpack.c.b16 %v877, %v876
      %v897 = vpack.c.b16 %v879, %v878
      %v934 = vunpack.c.l.b16 %v755
      %v935 = vunpack.c.l.b16 %v758
      %v936 = vunpack.c.l.b16 %v761
      %v937 = vunpack.c.l.b16 %v764
      %v938 = vunpack.c.l.b16 %v767
      %v939 = vunpack.c.l.b16 %v770
      %v940 = vunpack.c.l.b16 %v773
      %v941 = vunpack.c.l.b16 %v776
      %v942 = vunpack.c.l.b16 %v779
      %v943 = vunpack.c.l.b16 %v782
      %v944 = vunpack.c.l.b16 %v785
      %v945 = vunpack.c.l.b16 %v788
      %v946 = vunpack.c.l.b16 %v791
      %v947 = vunpack.c.l.b16 %v794
      %v948 = vunpack.c.l.b16 %v797
      %v949 = vunpack.c.l.b16 %v800
      %v950 = vunpack.c.l.b16 %v803
      %v951 = vunpack.c.l.b16 %v806
      %v952 = vpack.c.b16 %v934, %v934
      %v953 = vpack.c.b16 %v935, %v935
      %v954 = vpack.c.b16 %v936, %v936
      %v955 = vpack.c.b16 %v937, %v937
      %v956 = vpack.c.b16 %v938, %v938
      %v957 = vpack.c.b16 %v939, %v939
      %v958 = vpack.c.b16 %v940, %v940
      %v959 = vpack.c.b16 %v941, %v941
      %v960 = vpack.c.b16 %v942, %v942
      %v961 = vpack.c.b16 %v943, %v943
      %v962 = vpack.c.b16 %v944, %v944
      %v963 = vpack.c.b16 %v945, %v945
      %v964 = vpack.c.b16 %v946, %v946
      %v965 = vpack.c.b16 %v947, %v947
      %v966 = vpack.c.b16 %v948, %v948
      %v967 = vpack.c.b16 %v949, %v949
      %v968 = vpack.c.b16 %v950, %v950
      %v969 = vpack.c.b16 %v951, %v951
      %vm970 = vsmask.f32 7424
      %v972 = vshrl.u32 %v880, 16
      %v974 = vshll.u32 %v880, 16
      %v976 = vrot.slane %v974, 1
      %v977 = vor.u32 %v972, %v976
      %v979 = vshll.u32 %v952, 16
      %v981 = vrot.slane %v979, 1
      %v982 = vsel %vm970, %v977, %v981
      %v984 = vshrl.u32 %v881, 16
      %v986 = vshll.u32 %v881, 16
      %v988 = vrot.slane %v986, 1
      %v989 = vor.u32 %v984, %v988
      %v991 = vshll.u32 %v953, 16
      %v993 = vrot.slane %v991, 1
      %v994 = vsel %vm970, %v989, %v993
      %v996 = vshrl.u32 %v882, 16
      %v998 = vshll.u32 %v882, 16
      %v1000 = vrot.slane %v998, 1
      %v1001 = vor.u32 %v996, %v1000
      %v1003 = vshll.u32 %v954, 16
      %v1005 = vrot.slane %v1003, 1
      %v1006 = vsel %vm970, %v1001, %v1005
      %v1008 = vshrl.u32 %v883, 16
      %v1010 = vshll.u32 %v883, 16
      %v1012 = vrot.slane %v1010, 1
      %v1013 = vor.u32 %v1008, %v1012
      %v1015 = vshll.u32 %v955, 16
      %v1017 = vrot.slane %v1015, 1
      %v1018 = vsel %vm970, %v1013, %v1017
      %v1020 = vshrl.u32 %v884, 16
      %v1022 = vshll.u32 %v884, 16
      %v1024 = vrot.slane %v1022, 1
      %v1025 = vor.u32 %v1020, %v1024
      %v1027 = vshll.u32 %v956, 16
      %v1029 = vrot.slane %v1027, 1
      %v1030 = vsel %vm970, %v1025, %v1029
      %v1032 = vshrl.u32 %v885, 16
      %v1034 = vshll.u32 %v885, 16
      %v1036 = vrot.slane %v1034, 1
      %v1037 = vor.u32 %v1032, %v1036
      %v1039 = vshll.u32 %v957, 16
      %v1041 = vrot.slane %v1039, 1
      %v1042 = vsel %vm970, %v1037, %v1041
      %v1044 = vshrl.u32 %v886, 16
      %v1046 = vshll.u32 %v886, 16
      %v1048 = vrot.slane %v1046, 1
      %v1049 = vor.u32 %v1044, %v1048
      %v1051 = vshll.u32 %v958, 16
      %v1053 = vrot.slane %v1051, 1
      %v1054 = vsel %vm970, %v1049, %v1053
      %v1056 = vshrl.u32 %v887, 16
      %v1058 = vshll.u32 %v887, 16
      %v1060 = vrot.slane %v1058, 1
      %v1061 = vor.u32 %v1056, %v1060
      %v1063 = vshll.u32 %v959, 16
      %v1065 = vrot.slane %v1063, 1
      %v1066 = vsel %vm970, %v1061, %v1065
      %v1068 = vshrl.u32 %v888, 16
      %v1070 = vshll.u32 %v888, 16
      %v1072 = vrot.slane %v1070, 1
      %v1073 = vor.u32 %v1068, %v1072
      %v1075 = vshll.u32 %v960, 16
      %v1077 = vrot.slane %v1075, 1
      %v1078 = vsel %vm970, %v1073, %v1077
      %v1080 = vshrl.u32 %v889, 16
      %v1082 = vshll.u32 %v889, 16
      %v1084 = vrot.slane %v1082, 1
      %v1085 = vor.u32 %v1080, %v1084
      %v1087 = vshll.u32 %v961, 16
      %v1089 = vrot.slane %v1087, 1
      %v1090 = vsel %vm970, %v1085, %v1089
      %v1092 = vshrl.u32 %v890, 16
      %v1094 = vshll.u32 %v890, 16
      %v1096 = vrot.slane %v1094, 1
      %v1097 = vor.u32 %v1092, %v1096
      %v1099 = vshll.u32 %v962, 16
      %v1101 = vrot.slane %v1099, 1
      %v1102 = vsel %vm970, %v1097, %v1101
      %v1104 = vshrl.u32 %v891, 16
      %v1106 = vshll.u32 %v891, 16
      %v1108 = vrot.slane %v1106, 1
      %v1109 = vor.u32 %v1104, %v1108
      %v1111 = vshll.u32 %v963, 16
      %v1113 = vrot.slane %v1111, 1
      %v1114 = vsel %vm970, %v1109, %v1113
      %v1116 = vshrl.u32 %v892, 16
      %v1118 = vshll.u32 %v892, 16
      %v1120 = vrot.slane %v1118, 1
      %v1121 = vor.u32 %v1116, %v1120
      %v1123 = vshll.u32 %v964, 16
      %v1125 = vrot.slane %v1123, 1
      %v1126 = vsel %vm970, %v1121, %v1125
      %v1128 = vshrl.u32 %v893, 16
      %v1130 = vshll.u32 %v893, 16
      %v1132 = vrot.slane %v1130, 1
      %v1133 = vor.u32 %v1128, %v1132
      %v1135 = vshll.u32 %v965, 16
      %v1137 = vrot.slane %v1135, 1
      %v1138 = vsel %vm970, %v1133, %v1137
      %v1140 = vshrl.u32 %v894, 16
      %v1142 = vshll.u32 %v894, 16
      %v1144 = vrot.slane %v1142, 1
      %v1145 = vor.u32 %v1140, %v1144
      %v1147 = vshll.u32 %v966, 16
      %v1149 = vrot.slane %v1147, 1
      %v1150 = vsel %vm970, %v1145, %v1149
      %v1152 = vshrl.u32 %v895, 16
      %v1154 = vshll.u32 %v895, 16
      %v1156 = vrot.slane %v1154, 1
      %v1157 = vor.u32 %v1152, %v1156
      %v1159 = vshll.u32 %v967, 16
      %v1161 = vrot.slane %v1159, 1
      %v1162 = vsel %vm970, %v1157, %v1161
      %v1164 = vshrl.u32 %v896, 16
      %v1166 = vshll.u32 %v896, 16
      %v1168 = vrot.slane %v1166, 1
      %v1169 = vor.u32 %v1164, %v1168
      %v1171 = vshll.u32 %v968, 16
      %v1173 = vrot.slane %v1171, 1
      %v1174 = vsel %vm970, %v1169, %v1173
      %v1176 = vshrl.u32 %v897, 16
      %v1178 = vshll.u32 %v897, 16
      %v1180 = vrot.slane %v1178, 1
      %v1181 = vor.u32 %v1176, %v1180
      %v1183 = vshll.u32 %v969, 16
      %v1185 = vrot.slane %v1183, 1
      %v1186 = vsel %vm970, %v1181, %v1185
      %vm1205 = vcmask 1046528
      %v1206 = vrot.slane %v880, 1
      %v1207 = vrot.slane %v952, 1
      %v1208 = vsel %vm1205, %v1206, %v1207
      %v1209 = vrot.slane %v881, 1
      %v1210 = vrot.slane %v953, 1
      %v1211 = vsel %vm1205, %v1209, %v1210
      %v1212 = vrot.slane %v882, 1
      %v1213 = vrot.slane %v954, 1
      %v1214 = vsel %vm1205, %v1212, %v1213
      %v1215 = vrot.slane %v883, 1
      %v1216 = vrot.slane %v955, 1
      %v1217 = vsel %vm1205, %v1215, %v1216
      %v1218 = vrot.slane %v884, 1
      %v1219 = vrot.slane %v956, 1
      %v1220 = vsel %vm1205, %v1218, %v1219
      %v1221 = vrot.slane %v885, 1
      %v1222 = vrot.slane %v957, 1
      %v1223 = vsel %vm1205, %v1221, %v1222
      %v1224 = vrot.slane %v886, 1
      %v1225 = vrot.slane %v958, 1
      %v1226 = vsel %vm1205, %v1224, %v1225
      %v1227 = vrot.slane %v887, 1
      %v1228 = vrot.slane %v959, 1
      %v1229 = vsel %vm1205, %v1227, %v1228
      %v1230 = vrot.slane %v888, 1
      %v1231 = vrot.slane %v960, 1
      %v1232 = vsel %vm1205, %v1230, %v1231
      %v1233 = vrot.slane %v889, 1
      %v1234 = vrot.slane %v961, 1
      %v1235 = vsel %vm1205, %v1233, %v1234
      %v1236 = vrot.slane %v890, 1
      %v1237 = vrot.slane %v962, 1
      %v1238 = vsel %vm1205, %v1236, %v1237
      %v1239 = vrot.slane %v891, 1
      %v1240 = vrot.slane %v963, 1
      %v1241 = vsel %vm1205, %v1239, %v1240
      %v1242 = vrot.slane %v892, 1
      %v1243 = vrot.slane %v964, 1
      %v1244 = vsel %vm1205, %v1242, %v1243
      %v1245 = vrot.slane %v893, 1
      %v1246 = vrot.slane %v965, 1
      %v1247 = vsel %vm1205, %v1245, %v1246
      %v1248 = vrot.slane %v894, 1
      %v1249 = vrot.slane %v966, 1
      %v1250 = vsel %vm1205, %v1248, %v1249
      %v1251 = vrot.slane %v895, 1
      %v1252 = vrot.slane %v967, 1
      %v1253 = vsel %vm1205, %v1251, %v1252
      %v1254 = vrot.slane %v896, 1
      %v1255 = vrot.slane %v968, 1
      %v1256 = vsel %vm1205, %v1254, %v1255
      %v1257 = vrot.slane %v897, 1
      %v1258 = vrot.slane %v969, 1
      %v1259 = vsel %vm1205, %v1257, %v1258
      %v1278 = vld [vmem:[%s1] sm:$0xf]
      %v1279 = vld [vmem:[%s1 + $0x4] sm:$0xf]
      %v1280 = vld [vmem:[%s1 + $0x8] sm:$0xf]
      %v1281 = vld [vmem:[%s1 + $0xc] sm:$0xf]
      %v1282 = vld [vmem:[%s1 + $0x10] sm:$0xf]
      %v1283 = vld [vmem:[%s1 + $0x14] sm:$0xf]
      %v1284 = vld [vmem:[%s1 + $0x18] sm:$0xf]
      %v1285 = vld [vmem:[%s1 + $0x1c] sm:$0xf]
      %v1286 = vld [vmem:[%s1 + $0x20] sm:$0xf]
      %v1287 = vld [vmem:[%s1 + $0x24] sm:$0xf]
      %v1288 = vld [vmem:[%s1 + $0x28] sm:$0xf]
      %v1289 = vld [vmem:[%s1 + $0x2c] sm:$0xf]
      %v1290 = vld [vmem:[%s1 + $0x30] sm:$0xf]
      %v1291 = vld [vmem:[%s1 + $0x34] sm:$0xf]
      %v1292 = vld [vmem:[%s1 + $0x38] sm:$0xf]
      %v1293 = vld [vmem:[%s1 + $0x3c] sm:$0xf]
      %v1294 = vld [vmem:[%s1 + $0x40] sm:$0xf]
      %v1295 = vld [vmem:[%s1 + $0x44] sm:$0xf]
      %v1296 = vld [vmem:[%s1 + $0x48] sm:$0xf]
      %v1297 = vld [vmem:[%s1 + $0x4c] sm:$0xf]
      %v1298 = vld [vmem:[%s1 + $0x50] sm:$0xf]
      %v1299 = vld [vmem:[%s1 + $0x54] sm:$0xf]
      %v1300 = vld [vmem:[%s1 + $0x58] sm:$0xf]
      %v1301 = vld [vmem:[%s1 + $0x5c] sm:$0xf]
      %v1302 = vld [vmem:[%s1 + $0x60] sm:$0xf]
      %v1303 = vld [vmem:[%s1 + $0x64] sm:$0xf]
      %v1304 = vld [vmem:[%s1 + $0x68] sm:$0xf]
      %v1305 = vld [vmem:[%s1 + $0x6c] sm:$0xf]
      %v1306 = vld [vmem:[%s1 + $0x70] sm:$0xf]
      %v1307 = vld [vmem:[%s1 + $0x74] sm:$0xf]
      %v1308 = vld [vmem:[%s1 + $0x78] sm:$0xf]
      %v1309 = vld [vmem:[%s1 + $0x7c] sm:$0xf]
      %v1310 = vld [vmem:[%s1 + $0x80] sm:$0xf]
      %v1311 = vld [vmem:[%s1 + $0x84] sm:$0xf]
      %v1312 = vld [vmem:[%s1 + $0x88] sm:$0xf]
      %v1313 = vld [vmem:[%s1 + $0x8c] sm:$0xf]
      %v1314 = vld [vmem:[%s1 + $0x90] sm:$0xf]
      %v1315 = vld [vmem:[%s1 + $0x94] sm:$0xf]
      %v1316 = vld [vmem:[%s1 + $0x98] sm:$0xf]
      %v1317 = vld [vmem:[%s1 + $0x9c] sm:$0xf]
      %v1318 = vld [vmem:[%s1 + $0xa0] sm:$0xf]
      %v1319 = vld [vmem:[%s1 + $0xa4] sm:$0xf]
      %v1320 = vld [vmem:[%s1 + $0xa8] sm:$0xf]
      %v1321 = vld [vmem:[%s1 + $0xac] sm:$0xf]
      %v1322 = vld [vmem:[%s1 + $0xb0] sm:$0xf]
      %v1323 = vld [vmem:[%s1 + $0xb4] sm:$0xf]
      %v1324 = vld [vmem:[%s1 + $0xb8] sm:$0xf]
      %v1325 = vld [vmem:[%s1 + $0xbc] sm:$0xf]
      %s1326 = scalar_lea.vmem %s1, 192
      %v1327 = vld [vmem:[%s1326] sm:$0xf]
      %v1328 = vld [vmem:[%s1326 + $0x4] sm:$0xf]
      %v1329 = vld [vmem:[%s1326 + $0x8] sm:$0xf]
      %v1330 = vld [vmem:[%s1326 + $0xc] sm:$0xf]
      %v1331 = vld [vmem:[%s1326 + $0x10] sm:$0xf]
      %v1332 = vld [vmem:[%s1326 + $0x14] sm:$0xf]
      %v1333 = vld [vmem:[%s1326 + $0x18] sm:$0xf]
      %v1334 = vld [vmem:[%s1326 + $0x1c] sm:$0xf]
      %v1335 = vld [vmem:[%s1326 + $0x20] sm:$0xf]
      %v1336 = vld [vmem:[%s1326 + $0x24] sm:$0xf]
      %v1337 = vld [vmem:[%s1326 + $0x28] sm:$0xf]
      %v1338 = vld [vmem:[%s1326 + $0x2c] sm:$0xf]
      %v1339 = vld [vmem:[%s1326 + $0x30] sm:$0xf]
      %v1340 = vld [vmem:[%s1326 + $0x34] sm:$0xf]
      %v1341 = vld [vmem:[%s1326 + $0x38] sm:$0xf]
      %v1342 = vld [vmem:[%s1326 + $0x3c] sm:$0xf]
      %v1343 = vld [vmem:[%s1326 + $0x40] sm:$0xf]
      %v1344 = vld [vmem:[%s1326 + $0x44] sm:$0xf]
      %v1345 = vld [vmem:[%s1326 + $0x48] sm:$0xf]
      %v1346 = vld [vmem:[%s1326 + $0x4c] sm:$0xf]
      %v1347 = vld [vmem:[%s1326 + $0x50] sm:$0xf]
      %v1348 = vld [vmem:[%s1326 + $0x54] sm:$0xf]
      %v1349 = vld [vmem:[%s1326 + $0x58] sm:$0xf]
      %v1350 = vld [vmem:[%s1326 + $0x5c] sm:$0xf]
      %v1351 = vld [vmem:[%s1326 + $0x60] sm:$0xf]
      %v1352 = vld [vmem:[%s1326 + $0x64] sm:$0xf]
      %v1353 = vld [vmem:[%s1326 + $0x68] sm:$0xf]
      %v1354 = vld [vmem:[%s1326 + $0x6c] sm:$0xf]
      %v1355 = vld [vmem:[%s1326 + $0x70] sm:$0xf]
      %v1356 = vld [vmem:[%s1326 + $0x74] sm:$0xf]
      %v1357 = vld [vmem:[%s1326 + $0x78] sm:$0xf]
      %v1358 = vld [vmem:[%s1326 + $0x7c] sm:$0xf]
      %v1359 = vld [vmem:[%s1326 + $0x80] sm:$0xf]
      %v1360 = vld [vmem:[%s1326 + $0x84] sm:$0xf]
      %v1361 = vld [vmem:[%s1326 + $0x88] sm:$0xf]
      %v1362 = vld [vmem:[%s1326 + $0x8c] sm:$0xf]
      %v1363 = vld [vmem:[%s1326 + $0x90] sm:$0xf]
      %v1364 = vld [vmem:[%s1326 + $0x94] sm:$0xf]
      %v1365 = vld [vmem:[%s1326 + $0x98] sm:$0xf]
      %v1366 = vld [vmem:[%s1326 + $0x9c] sm:$0xf]
      %v1367 = vld [vmem:[%s1326 + $0xa0] sm:$0xf]
      %v1368 = vld [vmem:[%s1326 + $0xa4] sm:$0xf]
      %v1369 = vld [vmem:[%s1326 + $0xa8] sm:$0xf]
      %v1370 = vld [vmem:[%s1326 + $0xac] sm:$0xf]
      %v1371 = vld [vmem:[%s1326 + $0xb0] sm:$0xf]
      %v1372 = vld [vmem:[%s1326 + $0xb4] sm:$0xf]
      %v1373 = vld [vmem:[%s1326 + $0xb8] sm:$0xf]
      %v1374 = vld [vmem:[%s1326 + $0xbc] sm:$0xf]
      %v1423 = vunpack.c.l.b16 %v1327
      %v1424 = vunpack.c.l.b16 %v1328
      %v1425 = vunpack.c.l.b16 %v1329
      %v1426 = vunpack.c.l.b16 %v1330
      %v1427 = vunpack.c.l.b16 %v1331
      %v1428 = vunpack.c.l.b16 %v1332
      %v1429 = vunpack.c.l.b16 %v1333
      %v1430 = vunpack.c.l.b16 %v1334
      %v1431 = vunpack.c.l.b16 %v1335
      %v1432 = vunpack.c.l.b16 %v1336
      %v1433 = vunpack.c.l.b16 %v1337
      %v1434 = vunpack.c.l.b16 %v1338
      %v1435 = vunpack.c.l.b16 %v1339
      %v1436 = vunpack.c.l.b16 %v1340
      %v1437 = vunpack.c.l.b16 %v1341
      %v1438 = vunpack.c.l.b16 %v1342
      %v1439 = vunpack.c.l.b16 %v1343
      %v1440 = vunpack.c.l.b16 %v1344
      %v1441 = vunpack.c.l.b16 %v1345
      %v1442 = vunpack.c.l.b16 %v1346
      %v1443 = vunpack.c.l.b16 %v1347
      %v1444 = vunpack.c.l.b16 %v1348
      %v1445 = vunpack.c.l.b16 %v1349
      %v1446 = vunpack.c.l.b16 %v1350
      %v1447 = vunpack.c.l.b16 %v1351
      %v1448 = vunpack.c.l.b16 %v1352
      %v1449 = vunpack.c.l.b16 %v1353
      %v1450 = vunpack.c.l.b16 %v1354
      %v1451 = vunpack.c.l.b16 %v1355
      %v1452 = vunpack.c.l.b16 %v1356
      %v1453 = vunpack.c.l.b16 %v1357
      %v1454 = vunpack.c.l.b16 %v1358
      %v1455 = vunpack.c.l.b16 %v1359
      %v1456 = vunpack.c.l.b16 %v1360
      %v1457 = vunpack.c.l.b16 %v1361
      %v1458 = vunpack.c.l.b16 %v1362
      %v1459 = vunpack.c.l.b16 %v1363
      %v1460 = vunpack.c.l.b16 %v1364
      %v1461 = vunpack.c.l.b16 %v1365
      %v1462 = vunpack.c.l.b16 %v1366
      %v1463 = vunpack.c.l.b16 %v1367
      %v1464 = vunpack.c.l.b16 %v1368
      %v1465 = vunpack.c.l.b16 %v1369
      %v1466 = vunpack.c.l.b16 %v1370
      %v1467 = vunpack.c.l.b16 %v1371
      %v1468 = vunpack.c.l.b16 %v1372
      %v1469 = vunpack.c.l.b16 %v1373
      %v1470 = vunpack.c.l.b16 %v1374
      %v1471 = vpack.c.b16 %v1424, %v1423
      %v1472 = vpack.c.b16 %v1426, %v1425
      %v1473 = vpack.c.b16 %v1428, %v1427
      %v1474 = vpack.c.b16 %v1430, %v1429
      %v1475 = vpack.c.b16 %v1432, %v1431
      %v1476 = vpack.c.b16 %v1434, %v1433
      %v1477 = vpack.c.b16 %v1436, %v1435
      %v1478 = vpack.c.b16 %v1438, %v1437
      %v1479 = vpack.c.b16 %v1440, %v1439
      %v1480 = vpack.c.b16 %v1442, %v1441
      %v1481 = vpack.c.b16 %v1444, %v1443
      %v1482 = vpack.c.b16 %v1446, %v1445
      %v1483 = vpack.c.b16 %v1448, %v1447
      %v1484 = vpack.c.b16 %v1450, %v1449
      %v1485 = vpack.c.b16 %v1452, %v1451
      %v1486 = vpack.c.b16 %v1454, %v1453
      %v1487 = vpack.c.b16 %v1456, %v1455
      %v1488 = vpack.c.b16 %v1458, %v1457
      %v1489 = vpack.c.b16 %v1460, %v1459
      %v1490 = vpack.c.b16 %v1462, %v1461
      %v1491 = vpack.c.b16 %v1464, %v1463
      %v1492 = vpack.c.b16 %v1466, %v1465
      %v1493 = vpack.c.b16 %v1468, %v1467
      %v1494 = vpack.c.b16 %v1470, %v1469
      %1519 = vmatprep.subr.bf16.mxu0 0
      %1520 = vmatpush1.bf16.msra.mxu0 %v1471
      %1521 = vmatprep.subr.bf16.mxu0 0
      %1522 = vmatpush1.bf16.msra.mxu0 %v1472
      %1523 = vmatprep.subr.bf16.mxu0 0
      %1524 = vmatpush1.bf16.msra.mxu0 %v1473
      %1525 = vmatprep.subr.bf16.mxu0 0
      %1526 = vmatpush1.bf16.msra.mxu0 %v1474
      %1527 = vmatprep.subr.bf16.mxu0 0
      %1528 = vmatpush1.bf16.msra.mxu0 %v1475
      %1529 = vmatprep.subr.bf16.mxu0 0
      %1530 = vmatpush1.bf16.msra.mxu0 %v1476
      %1531 = vmatprep.subr.bf16.mxu0 0
      %1532 = vmatpush1.bf16.msra.mxu0 %v1477
      %1533 = vmatprep.subr.bf16.mxu0 0
      %1534 = vmatpush1.bf16.msra.mxu0 %v1478
      %1535 = vmatprep.subr.bf16.mxu0 0
      %1536 = vmatpush1.bf16.msra.mxu0 %v1479
      %1537 = vmatprep.subr.bf16.mxu0 0
      %1538 = vmatpush1.bf16.msra.mxu0 %v1480
      %1539 = vmatprep.subr.bf16.mxu0 0
      %1540 = vmatpush1.bf16.msra.mxu0 %v1481
      %1541 = vmatprep.subr.bf16.mxu0 0
      %1542 = vmatpush1.bf16.msra.mxu0 %v1482
      %1543 = vmatprep.subr.bf16.mxu0 0
      %1544 = vmatpush1.bf16.msra.mxu0 %v1483
      %1545 = vmatprep.subr.bf16.mxu0 0
      %1546 = vmatpush1.bf16.msra.mxu0 %v1484
      %1547 = vmatprep.subr.bf16.mxu0 0
      %1548 = vmatpush1.bf16.msra.mxu0 %v1485
      %1549 = vmatprep.subr.bf16.mxu0 0
      %1550 = vmatpush1.bf16.msra.mxu0 %v1486
      %1551 = vmatprep.mubr.bf16.mxu0 %v994
      %1552 = vmatmul.mubr.bf16.gmra.mrb[0].mxu0 %v881
      %v1553 = vpop.f32.mrb[0].mxu0
      %v1554 = vadd.f32 0.0, %v1553
      %v1555 = vpop.f32.mrb[0].mxu0
      %v1556 = vpop.f32.mrb[0].mxu0
      %v1557 = vadd.f32 0.0, %v1556
      %v1558 = vpop.f32.mrb[0].mxu0
      %1559 = vmatprep.mubr.bf16.mxu0 %v1006
      %1560 = vmatmul.mubr.bf16.gmra.mrb[0].mxu0 %v882
      %v1561 = vpop.f32.mrb[0].mxu0
      %v1562 = vadd.f32 0.0, %v1561
      %v1563 = vpop.f32.mrb[0].mxu0
      %v1564 = vpop.f32.mrb[0].mxu0
      %v1565 = vadd.f32 0.0, %v1564
      %v1566 = vpop.f32.mrb[0].mxu0
      %1567 = vmatprep.mubr.bf16.mxu0 %v1018
      %1568 = vmatmul.mubr.bf16.gmra.mrb[0].mxu0 %v883
      %v1569 = vpop.f32.mrb[0].mxu0
      %v1570 = vadd.f32 0.0, %v1569
      %v1571 = vpop.f32.mrb[0].mxu0
      %v1572 = vpop.f32.mrb[0].mxu0
      %v1573 = vadd.f32 0.0, %v1572
      %v1574 = vpop.f32.mrb[0].mxu0
      %1575 = vmatprep.mubr.bf16.mxu0 %v1030
      %1576 = vmatmul.mubr.bf16.gmra.mrb[0].mxu0 %v884
      %v1577 = vpop.f32.mrb[0].mxu0
      %v1578 = vadd.f32 0.0, %v1577
      %v1579 = vpop.f32.mrb[0].mxu0
      %v1580 = vpop.f32.mrb[0].mxu0
      %v1581 = vadd.f32 0.0, %v1580
      %v1582 = vpop.f32.mrb[0].mxu0
      %1583 = vmatprep.mubr.bf16.mxu0 %v1042
      %1584 = vmatmul.mubr.bf16.gmra.mrb[0].mxu0 %v885
      %v1585 = vpop.f32.mrb[0].mxu0
      %v1586 = vadd.f32 0.0, %v1585
      %v1587 = vpop.f32.mrb[0].mxu0
      %v1588 = vpop.f32.mrb[0].mxu0
      %v1589 = vadd.f32 0.0, %v1588
      %v1590 = vpop.f32.mrb[0].mxu0
      %1591 = vmatprep.mubr.bf16.mxu0 %v1054
      %1592 = vmatmul.mubr.bf16.gmra.mrb[0].mxu0 %v886
      %v1593 = vpop.f32.mrb[0].mxu0
      %v1594 = vadd.f32 0.0, %v1593
      %v1595 = vpop.f32.mrb[0].mxu0
      %v1596 = vpop.f32.mrb[0].mxu0
      %v1597 = vadd.f32 0.0, %v1596
      %v1598 = vpop.f32.mrb[0].mxu0
      %1599 = vmatprep.mubr.bf16.mxu0 %v1066
      %1600 = vmatmul.mubr.bf16.gmra.mrb[0].mxu0 %v887
      %v1601 = vpop.f32.mrb[0].mxu0
      %v1602 = vadd.f32 0.0, %v1601
      %v1603 = vpop.f32.mrb[0].mxu0
      %v1604 = vpop.f32.mrb[0].mxu0
      %v1605 = vadd.f32 0.0, %v1604
      %v1606 = vpop.f32.mrb[0].mxu0
      %1607 = vmatprep.mubr.bf16.mxu0 %v1078
      %1608 = vmatmul.mubr.bf16.gmra.mrb[0].mxu0 %v888
      %v1609 = vpop.f32.mrb[0].mxu0
      %v1610 = vadd.f32 0.0, %v1609
      %v1611 = vpop.f32.mrb[0].mxu0
      %v1612 = vpop.f32.mrb[0].mxu0
      %v1613 = vadd.f32 0.0, %v1612
      %v1614 = vpop.f32.mrb[0].mxu0
      %1615 = vmatprep.mubr.bf16.mxu0 %v1090
      %1616 = vmatmul.mubr.bf16.gmra.mrb[0].mxu0 %v889
      %v1617 = vpop.f32.mrb[0].mxu0
      %v1618 = vadd.f32 0.0, %v1617
      %v1619 = vpop.f32.mrb[0].mxu0
      %v1620 = vpop.f32.mrb[0].mxu0
      %v1621 = vadd.f32 0.0, %v1620
      %v1622 = vpop.f32.mrb[0].mxu0
      %1623 = vmatprep.mubr.bf16.mxu0 %v1102
      %1624 = vmatmul.mubr.bf16.gmra.mrb[0].mxu0 %v890
      %v1625 = vpop.f32.mrb[0].mxu0
      %v1626 = vadd.f32 0.0, %v1625
      %v1627 = vpop.f32.mrb[0].mxu0
      %v1628 = vpop.f32.mrb[0].mxu0
      %v1629 = vadd.f32 0.0, %v1628
      %v1630 = vpop.f32.mrb[0].mxu0
      %1631 = vmatprep.mubr.bf16.mxu0 %v1114
      %1632 = vmatmul.mubr.bf16.gmra.mrb[0].mxu0 %v891
      %v1633 = vpop.f32.mrb[0].mxu0
      %v1634 = vadd.f32 0.0, %v1633
      %v1635 = vpop.f32.mrb[0].mxu0
      %v1636 = vpop.f32.mrb[0].mxu0
      %v1637 = vadd.f32 0.0, %v1636
      %v1638 = vpop.f32.mrb[0].mxu0
      %1639 = vmatprep.mubr.bf16.mxu0 %v1126
      %1640 = vmatmul.mubr.bf16.gmra.mrb[0].mxu0 %v892
      %v1641 = vpop.f32.mrb[0].mxu0
      %v1642 = vadd.f32 0.0, %v1641
      %v1643 = vpop.f32.mrb[0].mxu0
      %v1644 = vpop.f32.mrb[0].mxu0
      %v1645 = vadd.f32 0.0, %v1644
      %v1646 = vpop.f32.mrb[0].mxu0
      %1647 = vmatprep.mubr.bf16.mxu0 %v1138
      %1648 = vmatmul.mubr.bf16.gmra.mrb[0].mxu0 %v893
      %v1649 = vpop.f32.mrb[0].mxu0
      %v1650 = vadd.f32 0.0, %v1649
      %v1651 = vpop.f32.mrb[0].mxu0
      %v1652 = vpop.f32.mrb[0].mxu0
      %v1653 = vadd.f32 0.0, %v1652
      %v1654 = vpop.f32.mrb[0].mxu0
      %1655 = vmatprep.mubr.bf16.mxu0 %v1150
      %1656 = vmatmul.mubr.bf16.gmra.mrb[0].mxu0 %v894
      %v1657 = vpop.f32.mrb[0].mxu0
      %v1658 = vadd.f32 0.0, %v1657
      %v1659 = vpop.f32.mrb[0].mxu0
      %v1660 = vpop.f32.mrb[0].mxu0
      %v1661 = vadd.f32 0.0, %v1660
      %v1662 = vpop.f32.mrb[0].mxu0
      %1663 = vmatprep.mubr.bf16.mxu0 %v1162
      %1664 = vmatmul.mubr.bf16.gmra.mrb[0].mxu0 %v895
      %v1665 = vpop.f32.mrb[0].mxu0
      %v1666 = vadd.f32 0.0, %v1665
      %v1667 = vpop.f32.mrb[0].mxu0
      %v1668 = vpop.f32.mrb[0].mxu0
      %v1669 = vadd.f32 0.0, %v1668
      %v1670 = vpop.f32.mrb[0].mxu0
      %1671 = vmatprep.mubr.bf16.mxu0 %v1174
      %1672 = vmatmul.mubr.bf16.gmra.mrb[0].mxu0 %v896
      %v1673 = vpop.f32.mrb[0].mxu0
      %v1674 = vadd.f32 0.0, %v1673
      %v1675 = vpop.f32.mrb[0].mxu0
      %v1676 = vpop.f32.mrb[0].mxu0
      %v1677 = vadd.f32 0.0, %v1676
      %v1678 = vpop.f32.mrb[0].mxu0
      %1679 = vdwg.mxu0
      %1680 = vmatprep.subr.bf16.mxu0 0
      %1681 = vmatpush1.bf16.msra.mxu0 %v1487
      %1682 = vmatprep.subr.bf16.mxu0 0
      %1683 = vmatpush1.bf16.msra.mxu0 %v1488
      %1684 = vmatprep.subr.bf16.mxu0 0
      %1685 = vmatpush1.bf16.msra.mxu0 %v1489
      %1686 = vmatprep.subr.bf16.mxu0 0
      %1687 = vmatpush1.bf16.msra.mxu0 %v1490
      %1688 = vmatprep.subr.bf16.mxu0 0
      %1689 = vmatpush1.bf16.msra.mxu0 %v1491
      %1690 = vmatprep.subr.bf16.mxu0 0
      %1691 = vmatpush1.bf16.msra.mxu0 %v1492
      %1692 = vmatprep.subr.bf16.mxu0 0
      %1693 = vmatpush1.bf16.msra.mxu0 %v1493
      %1694 = vmatprep.subr.bf16.mxu0 0
      %1695 = vmatpush1.bf16.msra.mxu0 %v1494
      %1696 = vmatprep.subr.bf16.mxu0 0
      %1697 = vmatpush1.bf16.msra.mxu0 0
      %1698 = vmatprep.subr.bf16.mxu0 0
      %1699 = vmatpush1.bf16.msra.mxu0 0
      %1700 = vmatprep.subr.bf16.mxu0 0
      %1701 = vmatpush1.bf16.msra.mxu0 0
      %1702 = vmatprep.subr.bf16.mxu0 0
      %1703 = vmatpush1.bf16.msra.mxu0 0
      %1704 = vmatprep.subr.bf16.mxu0 0
      %1705 = vmatpush1.bf16.msra.mxu0 0
      %1706 = vmatprep.subr.bf16.mxu0 0
      %1707 = vmatpush1.bf16.msra.mxu0 0
      %1708 = vmatprep.subr.bf16.mxu0 0
      %1709 = vmatpush1.bf16.msra.mxu0 0
      %1710 = vmatprep.subr.bf16.mxu0 0
      %1711 = vmatpush1.bf16.msra.mxu0 0
      %1712 = vmatprep.mubr.bf16.mxu0 0
      %1713 = vmatmul.mubr.bf16.gmra.mrb[0].mxu0 %v1211
      %v1714 = vpop.f32.mrb[0].mxu0
      %v1715 = vadd.f32 %v1554, %v1714
      %v1716 = vpop.f32.mrb[0].mxu0
      %v1717 = vpop.f32.mrb[0].mxu0
      %v1718 = vadd.f32 %v1557, %v1717
      %v1719 = vpop.f32.mrb[0].mxu0
      %1720 = vmatprep.mubr.bf16.mxu0 0
      %1721 = vmatmul.mubr.bf16.gmra.mrb[0].mxu0 %v1214
      %v1722 = vpop.f32.mrb[0].mxu0
      %v1723 = vadd.f32 %v1562, %v1722
      %v1724 = vpop.f32.mrb[0].mxu0
      %v1725 = vpop.f32.mrb[0].mxu0
      %v1726 = vadd.f32 %v1565, %v1725
      %v1727 = vpop.f32.mrb[0].mxu0
      %1728 = vmatprep.mubr.bf16.mxu0 0
      %1729 = vmatmul.mubr.bf16.gmra.mrb[0].mxu0 %v1217
      %v1730 = vpop.f32.mrb[0].mxu0
      %v1731 = vadd.f32 %v1570, %v1730
      %v1732 = vpop.f32.mrb[0].mxu0
      %v1733 = vpop.f32.mrb[0].mxu0
      %v1734 = vadd.f32 %v1573, %v1733
      %v1735 = vpop.f32.mrb[0].mxu0
      %1736 = vmatprep.mubr.bf16.mxu0 0
      %1737 = vmatmul.mubr.bf16.gmra.mrb[0].mxu0 %v1220
      %v1738 = vpop.f32.mrb[0].mxu0
      %v1739 = vadd.f32 %v1578, %v1738
      %v1740 = vpop.f32.mrb[0].mxu0
      %v1741 = vpop.f32.mrb[0].mxu0
      %v1742 = vadd.f32 %v1581, %v1741
      %v1743 = vpop.f32.mrb[0].mxu0
      %1744 = vmatprep.mubr.bf16.mxu0 0
      %1745 = vmatmul.mubr.bf16.gmra.mrb[0].mxu0 %v1223
      %v1746 = vpop.f32.mrb[0].mxu0
      %v1747 = vadd.f32 %v1586, %v1746
      %v1748 = vpop.f32.mrb[0].mxu0
      %v1749 = vpop.f32.mrb[0].mxu0
      %v1750 = vadd.f32 %v1589, %v1749
      %v1751 = vpop.f32.mrb[0].mxu0
      %1752 = vmatprep.mubr.bf16.mxu0 0
      %1753 = vmatmul.mubr.bf16.gmra.mrb[0].mxu0 %v1226
      %v1754 = vpop.f32.mrb[0].mxu0
      %v1755 = vadd.f32 %v1594, %v1754
      %v1756 = vpop.f32.mrb[0].mxu0
      %v1757 = vpop.f32.mrb[0].mxu0
      %v1758 = vadd.f32 %v1597, %v1757
      %v1759 = vpop.f32.mrb[0].mxu0
      %1760 = vmatprep.mubr.bf16.mxu0 0
      %1761 = vmatmul.mubr.bf16.gmra.mrb[0].mxu0 %v1229
      %v1762 = vpop.f32.mrb[0].mxu0
      %v1763 = vadd.f32 %v1602, %v1762
      %v1764 = vpop.f32.mrb[0].mxu0
      %v1765 = vpop.f32.mrb[0].mxu0
      %v1766 = vadd.f32 %v1605, %v1765
      %v1767 = vpop.f32.mrb[0].mxu0
      %1768 = vmatprep.mubr.bf16.mxu0 0
      %1769 = vmatmul.mubr.bf16.gmra.mrb[0].mxu0 %v1232
      %v1770 = vpop.f32.mrb[0].mxu0
      %v1771 = vadd.f32 %v1610, %v1770
      %v1772 = vpop.f32.mrb[0].mxu0
      %v1773 = vpop.f32.mrb[0].mxu0
      %v1774 = vadd.f32 %v1613, %v1773
      %v1775 = vpop.f32.mrb[0].mxu0
      %1776 = vmatprep.mubr.bf16.mxu0 0
      %1777 = vmatmul.mubr.bf16.gmra.mrb[0].mxu0 %v1235
      %v1778 = vpop.f32.mrb[0].mxu0
      %v1779 = vadd.f32 %v1618, %v1778
      %v1780 = vpop.f32.mrb[0].mxu0
      %v1781 = vpop.f32.mrb[0].mxu0
      %v1782 = vadd.f32 %v1621, %v1781
      %v1783 = vpop.f32.mrb[0].mxu0
      %1784 = vmatprep.mubr.bf16.mxu0 0
      %1785 = vmatmul.mubr.bf16.gmra.mrb[0].mxu0 %v1238
      %v1786 = vpop.f32.mrb[0].mxu0
      %v1787 = vadd.f32 %v1626, %v1786
      %v1788 = vpop.f32.mrb[0].mxu0
      %v1789 = vpop.f32.mrb[0].mxu0
      %v1790 = vadd.f32 %v1629, %v1789
      %v1791 = vpop.f32.mrb[0].mxu0
      %1792 = vmatprep.mubr.bf16.mxu0 0
      %1793 = vmatmul.mubr.bf16.gmra.mrb[0].mxu0 %v1241
      %v1794 = vpop.f32.mrb[0].mxu0
      %v1795 = vadd.f32 %v1634, %v1794
      %v1796 = vpop.f32.mrb[0].mxu0
      %v1797 = vpop.f32.mrb[0].mxu0
      %v1798 = vadd.f32 %v1637, %v1797
      %v1799 = vpop.f32.mrb[0].mxu0
      %1800 = vmatprep.mubr.bf16.mxu0 0
      %1801 = vmatmul.mubr.bf16.gmra.mrb[0].mxu0 %v1244
      %v1802 = vpop.f32.mrb[0].mxu0
      %v1803 = vadd.f32 %v1642, %v1802
      %v1804 = vpop.f32.mrb[0].mxu0
      %v1805 = vpop.f32.mrb[0].mxu0
      %v1806 = vadd.f32 %v1645, %v1805
      %v1807 = vpop.f32.mrb[0].mxu0
      %1808 = vmatprep.mubr.bf16.mxu0 0
      %1809 = vmatmul.mubr.bf16.gmra.mrb[0].mxu0 %v1247
      %v1810 = vpop.f32.mrb[0].mxu0
      %v1811 = vadd.f32 %v1650, %v1810
      %v1812 = vpop.f32.mrb[0].mxu0
      %v1813 = vpop.f32.mrb[0].mxu0
      %v1814 = vadd.f32 %v1653, %v1813
      %v1815 = vpop.f32.mrb[0].mxu0
      %1816 = vmatprep.mubr.bf16.mxu0 0
      %1817 = vmatmul.mubr.bf16.gmra.mrb[0].mxu0 %v1250
      %v1818 = vpop.f32.mrb[0].mxu0
      %v1819 = vadd.f32 %v1658, %v1818
      %v1820 = vpop.f32.mrb[0].mxu0
      %v1821 = vpop.f32.mrb[0].mxu0
      %v1822 = vadd.f32 %v1661, %v1821
      %v1823 = vpop.f32.mrb[0].mxu0
      %1824 = vmatprep.mubr.bf16.mxu0 0
      %1825 = vmatmul.mubr.bf16.gmra.mrb[0].mxu0 %v1253
      %v1826 = vpop.f32.mrb[0].mxu0
      %v1827 = vadd.f32 %v1666, %v1826
      %v1828 = vpop.f32.mrb[0].mxu0
      %v1829 = vpop.f32.mrb[0].mxu0
      %v1830 = vadd.f32 %v1669, %v1829
      %v1831 = vpop.f32.mrb[0].mxu0
      %1832 = vmatprep.mubr.bf16.mxu0 0
      %1833 = vmatmul.mubr.bf16.gmra.mrb[0].mxu0 %v1256
      %v1834 = vpop.f32.mrb[0].mxu0
      %v1835 = vadd.f32 %v1674, %v1834
      %v1836 = vpop.f32.mrb[0].mxu0
      %v1837 = vpop.f32.mrb[0].mxu0
      %v1838 = vadd.f32 %v1677, %v1837
      %v1839 = vpop.f32.mrb[0].mxu0
      %1840 = vdwg.mxu0
      %v1889 = vunpack.c.l.b16 %v1278
      %v1890 = vunpack.c.l.b16 %v1279
      %v1891 = vunpack.c.l.b16 %v1280
      %v1892 = vunpack.c.l.b16 %v1281
      %v1893 = vunpack.c.l.b16 %v1282
      %v1894 = vunpack.c.l.b16 %v1283
      %v1895 = vunpack.c.l.b16 %v1284
      %v1896 = vunpack.c.l.b16 %v1285
      %v1897 = vunpack.c.l.b16 %v1286
      %v1898 = vunpack.c.l.b16 %v1287
      %v1899 = vunpack.c.l.b16 %v1288
      %v1900 = vunpack.c.l.b16 %v1289
      %v1901 = vunpack.c.l.b16 %v1290
      %v1902 = vunpack.c.l.b16 %v1291
      %v1903 = vunpack.c.l.b16 %v1292
      %v1904 = vunpack.c.l.b16 %v1293
      %v1905 = vunpack.c.l.b16 %v1294
      %v1906 = vunpack.c.l.b16 %v1295
      %v1907 = vunpack.c.l.b16 %v1296
      %v1908 = vunpack.c.l.b16 %v1297
      %v1909 = vunpack.c.l.b16 %v1298
      %v1910 = vunpack.c.l.b16 %v1299
      %v1911 = vunpack.c.l.b16 %v1300
      %v1912 = vunpack.c.l.b16 %v1301
      %v1913 = vunpack.c.l.b16 %v1302
      %v1914 = vunpack.c.l.b16 %v1303
      %v1915 = vunpack.c.l.b16 %v1304
      %v1916 = vunpack.c.l.b16 %v1305
      %v1917 = vunpack.c.l.b16 %v1306
      %v1918 = vunpack.c.l.b16 %v1307
      %v1919 = vunpack.c.l.b16 %v1308
      %v1920 = vunpack.c.l.b16 %v1309
      %v1921 = vunpack.c.l.b16 %v1310
      %v1922 = vunpack.c.l.b16 %v1311
      %v1923 = vunpack.c.l.b16 %v1312
      %v1924 = vunpack.c.l.b16 %v1313
      %v1925 = vunpack.c.l.b16 %v1314
      %v1926 = vunpack.c.l.b16 %v1315
      %v1927 = vunpack.c.l.b16 %v1316
      %v1928 = vunpack.c.l.b16 %v1317
      %v1929 = vunpack.c.l.b16 %v1318
      %v1930 = vunpack.c.l.b16 %v1319
      %v1931 = vunpack.c.l.b16 %v1320
      %v1932 = vunpack.c.l.b16 %v1321
      %v1933 = vunpack.c.l.b16 %v1322
      %v1934 = vunpack.c.l.b16 %v1323
      %v1935 = vunpack.c.l.b16 %v1324
      %v1936 = vunpack.c.l.b16 %v1325
      %v1937 = vpack.c.b16 %v1890, %v1889
      %v1938 = vpack.c.b16 %v1892, %v1891
      %v1939 = vpack.c.b16 %v1894, %v1893
      %v1940 = vpack.c.b16 %v1896, %v1895
      %v1941 = vpack.c.b16 %v1898, %v1897
      %v1942 = vpack.c.b16 %v1900, %v1899
      %v1943 = vpack.c.b16 %v1902, %v1901
      %v1944 = vpack.c.b16 %v1904, %v1903
      %v1945 = vpack.c.b16 %v1906, %v1905
      %v1946 = vpack.c.b16 %v1908, %v1907
      %v1947 = vpack.c.b16 %v1910, %v1909
      %v1948 = vpack.c.b16 %v1912, %v1911
      %v1949 = vpack.c.b16 %v1914, %v1913
      %v1950 = vpack.c.b16 %v1916, %v1915
      %v1951 = vpack.c.b16 %v1918, %v1917
      %v1952 = vpack.c.b16 %v1920, %v1919
      %v1953 = vpack.c.b16 %v1922, %v1921
      %v1954 = vpack.c.b16 %v1924, %v1923
      %v1955 = vpack.c.b16 %v1926, %v1925
      %v1956 = vpack.c.b16 %v1928, %v1927
      %v1957 = vpack.c.b16 %v1930, %v1929
      %v1958 = vpack.c.b16 %v1932, %v1931
      %v1959 = vpack.c.b16 %v1934, %v1933
      %v1960 = vpack.c.b16 %v1936, %v1935
      %1985 = vmatprep.subr.bf16.mxu0 0
      %1986 = vmatpush1.bf16.msra.mxu0 %v1937
      %1987 = vmatprep.subr.bf16.mxu0 0
      %1988 = vmatpush1.bf16.msra.mxu0 %v1938
      %1989 = vmatprep.subr.bf16.mxu0 0
      %1990 = vmatpush1.bf16.msra.mxu0 %v1939
      %1991 = vmatprep.subr.bf16.mxu0 0
      %1992 = vmatpush1.bf16.msra.mxu0 %v1940
      %1993 = vmatprep.subr.bf16.mxu0 0
      %1994 = vmatpush1.bf16.msra.mxu0 %v1941
      %1995 = vmatprep.subr.bf16.mxu0 0
      %1996 = vmatpush1.bf16.msra.mxu0 %v1942
      %1997 = vmatprep.subr.bf16.mxu0 0
      %1998 = vmatpush1.bf16.msra.mxu0 %v1943
      %1999 = vmatprep.subr.bf16.mxu0 0
      %2000 = vmatpush1.bf16.msra.mxu0 %v1944
      %2001 = vmatprep.subr.bf16.mxu0 0
      %2002 = vmatpush1.bf16.msra.mxu0 %v1945
      %2003 = vmatprep.subr.bf16.mxu0 0
      %2004 = vmatpush1.bf16.msra.mxu0 %v1946
      %2005 = vmatprep.subr.bf16.mxu0 0
      %2006 = vmatpush1.bf16.msra.mxu0 %v1947
      %2007 = vmatprep.subr.bf16.mxu0 0
      %2008 = vmatpush1.bf16.msra.mxu0 %v1948
      %2009 = vmatprep.subr.bf16.mxu0 0
      %2010 = vmatpush1.bf16.msra.mxu0 %v1949
      %2011 = vmatprep.subr.bf16.mxu0 0
      %2012 = vmatpush1.bf16.msra.mxu0 %v1950
      %2013 = vmatprep.subr.bf16.mxu0 0
      %2014 = vmatpush1.bf16.msra.mxu0 %v1951
      %2015 = vmatprep.subr.bf16.mxu0 0
      %2016 = vmatpush1.bf16.msra.mxu0 %v1952
      %2017 = vmatprep.mubr.bf16.mxu0 %v982
      %2018 = vmatmul.mubr.bf16.gmra.mrb[0].mxu0 %v880
      %v2019 = vpop.f32.mrb[0].mxu0
      %v2020 = vadd.f32 %v1715, %v2019
      %v2021 = vpop.f32.mrb[0].mxu0
      %v2022 = vpop.f32.mrb[0].mxu0
      %v2023 = vadd.f32 %v1718, %v2022
      %v2024 = vpop.f32.mrb[0].mxu0
      %2025 = vmatprep.mubr.bf16.mxu0 %v994
      %2026 = vmatmul.mubr.bf16.gmra.mrb[0].mxu0 %v881
      %v2027 = vpop.f32.mrb[0].mxu0
      %v2028 = vadd.f32 %v1723, %v2027
      %v2029 = vpop.f32.mrb[0].mxu0
      %v2030 = vpop.f32.mrb[0].mxu0
      %v2031 = vadd.f32 %v1726, %v2030
      %v2032 = vpop.f32.mrb[0].mxu0
      %2033 = vmatprep.mubr.bf16.mxu0 %v1006
      %2034 = vmatmul.mubr.bf16.gmra.mrb[0].mxu0 %v882
      %v2035 = vpop.f32.mrb[0].mxu0
      %v2036 = vadd.f32 %v1731, %v2035
      %v2037 = vpop.f32.mrb[0].mxu0
      %v2038 = vpop.f32.mrb[0].mxu0
      %v2039 = vadd.f32 %v1734, %v2038
      %v2040 = vpop.f32.mrb[0].mxu0
      %2041 = vmatprep.mubr.bf16.mxu0 %v1018
      %2042 = vmatmul.mubr.bf16.gmra.mrb[0].mxu0 %v883
      %v2043 = vpop.f32.mrb[0].mxu0
      %v2044 = vadd.f32 %v1739, %v2043
      %v2045 = vpop.f32.mrb[0].mxu0
      %v2046 = vpop.f32.mrb[0].mxu0
      %v2047 = vadd.f32 %v1742, %v2046
      %v2048 = vpop.f32.mrb[0].mxu0
      %2049 = vmatprep.mubr.bf16.mxu0 %v1030
      %2050 = vmatmul.mubr.bf16.gmra.mrb[0].mxu0 %v884
      %v2051 = vpop.f32.mrb[0].mxu0
      %v2052 = vadd.f32 %v1747, %v2051
      %v2053 = vpop.f32.mrb[0].mxu0
      %v2054 = vpop.f32.mrb[0].mxu0
      %v2055 = vadd.f32 %v1750, %v2054
      %v2056 = vpop.f32.mrb[0].mxu0
      %2057 = vmatprep.mubr.bf16.mxu0 %v1042
      %2058 = vmatmul.mubr.bf16.gmra.mrb[0].mxu0 %v885
      %v2059 = vpop.f32.mrb[0].mxu0
      %v2060 = vadd.f32 %v1755, %v2059
      %v2061 = vpop.f32.mrb[0].mxu0
      %v2062 = vpop.f32.mrb[0].mxu0
      %v2063 = vadd.f32 %v1758, %v2062
      %v2064 = vpop.f32.mrb[0].mxu0
      %2065 = vmatprep.mubr.bf16.mxu0 %v1054
      %2066 = vmatmul.mubr.bf16.gmra.mrb[0].mxu0 %v886
      %v2067 = vpop.f32.mrb[0].mxu0
      %v2068 = vadd.f32 %v1763, %v2067
      %v2069 = vpop.f32.mrb[0].mxu0
      %v2070 = vpop.f32.mrb[0].mxu0
      %v2071 = vadd.f32 %v1766, %v2070
      %v2072 = vpop.f32.mrb[0].mxu0
      %2073 = vmatprep.mubr.bf16.mxu0 %v1066
      %2074 = vmatmul.mubr.bf16.gmra.mrb[0].mxu0 %v887
      %v2075 = vpop.f32.mrb[0].mxu0
      %v2076 = vadd.f32 %v1771, %v2075
      %v2077 = vpop.f32.mrb[0].mxu0
      %v2078 = vpop.f32.mrb[0].mxu0
      %v2079 = vadd.f32 %v1774, %v2078
      %v2080 = vpop.f32.mrb[0].mxu0
      %2081 = vmatprep.mubr.bf16.mxu0 %v1078
      %2082 = vmatmul.mubr.bf16.gmra.mrb[0].mxu0 %v888
      %v2083 = vpop.f32.mrb[0].mxu0
      %v2084 = vadd.f32 %v1779, %v2083
      %v2085 = vpop.f32.mrb[0].mxu0
      %v2086 = vpop.f32.mrb[0].mxu0
      %v2087 = vadd.f32 %v1782, %v2086
      %v2088 = vpop.f32.mrb[0].mxu0
      %2089 = vmatprep.mubr.bf16.mxu0 %v1090
      %2090 = vmatmul.mubr.bf16.gmra.mrb[0].mxu0 %v889
      %v2091 = vpop.f32.mrb[0].mxu0
      %v2092 = vadd.f32 %v1787, %v2091
      %v2093 = vpop.f32.mrb[0].mxu0
      %v2094 = vpop.f32.mrb[0].mxu0
      %v2095 = vadd.f32 %v1790, %v2094
      %v2096 = vpop.f32.mrb[0].mxu0
      %2097 = vmatprep.mubr.bf16.mxu0 %v1102
      %2098 = vmatmul.mubr.bf16.gmra.mrb[0].mxu0 %v890
      %v2099 = vpop.f32.mrb[0].mxu0
      %v2100 = vadd.f32 %v1795, %v2099
      %v2101 = vpop.f32.mrb[0].mxu0
      %v2102 = vpop.f32.mrb[0].mxu0
      %v2103 = vadd.f32 %v1798, %v2102
      %v2104 = vpop.f32.mrb[0].mxu0
      %2105 = vmatprep.mubr.bf16.mxu0 %v1114
      %2106 = vmatmul.mubr.bf16.gmra.mrb[0].mxu0 %v891
      %v2107 = vpop.f32.mrb[0].mxu0
      %v2108 = vadd.f32 %v1803, %v2107
      %v2109 = vpop.f32.mrb[0].mxu0
      %v2110 = vpop.f32.mrb[0].mxu0
      %v2111 = vadd.f32 %v1806, %v2110
      %v2112 = vpop.f32.mrb[0].mxu0
      %2113 = vmatprep.mubr.bf16.mxu0 %v1126
      %2114 = vmatmul.mubr.bf16.gmra.mrb[0].mxu0 %v892
      %v2115 = vpop.f32.mrb[0].mxu0
      %v2116 = vadd.f32 %v1811, %v2115
      %v2117 = vpop.f32.mrb[0].mxu0
      %v2118 = vpop.f32.mrb[0].mxu0
      %v2119 = vadd.f32 %v1814, %v2118
      %v2120 = vpop.f32.mrb[0].mxu0
      %2121 = vmatprep.mubr.bf16.mxu0 %v1138
      %2122 = vmatmul.mubr.bf16.gmra.mrb[0].mxu0 %v893
      %v2123 = vpop.f32.mrb[0].mxu0
      %v2124 = vadd.f32 %v1819, %v2123
      %v2125 = vpop.f32.mrb[0].mxu0
      %v2126 = vpop.f32.mrb[0].mxu0
      %v2127 = vadd.f32 %v1822, %v2126
      %v2128 = vpop.f32.mrb[0].mxu0
      %2129 = vmatprep.mubr.bf16.mxu0 %v1150
      %2130 = vmatmul.mubr.bf16.gmra.mrb[0].mxu0 %v894
      %v2131 = vpop.f32.mrb[0].mxu0
      %v2132 = vadd.f32 %v1827, %v2131
      %v2133 = vpop.f32.mrb[0].mxu0
      %v2134 = vpop.f32.mrb[0].mxu0
      %v2135 = vadd.f32 %v1830, %v2134
      %v2136 = vpop.f32.mrb[0].mxu0
      %2137 = vmatprep.mubr.bf16.mxu0 %v1162
      %2138 = vmatmul.mubr.bf16.gmra.mrb[0].mxu0 %v895
      %v2139 = vpop.f32.mrb[0].mxu0
      %v2140 = vadd.f32 %v1835, %v2139
      %v2141 = vpop.f32.mrb[0].mxu0
      %v2142 = vpop.f32.mrb[0].mxu0
      %v2143 = vadd.f32 %v1838, %v2142
      %v2144 = vpop.f32.mrb[0].mxu0
      %2145 = vdwg.mxu0
      %2146 = vmatprep.subr.bf16.mxu0 0
      %2147 = vmatpush1.bf16.msra.mxu0 %v1953
      %2148 = vmatprep.subr.bf16.mxu0 0
      %2149 = vmatpush1.bf16.msra.mxu0 %v1954
      %2150 = vmatprep.subr.bf16.mxu0 0
      %2151 = vmatpush1.bf16.msra.mxu0 %v1955
      %2152 = vmatprep.subr.bf16.mxu0 0
      %2153 = vmatpush1.bf16.msra.mxu0 %v1956
      %2154 = vmatprep.subr.bf16.mxu0 0
      %2155 = vmatpush1.bf16.msra.mxu0 %v1957
      %2156 = vmatprep.subr.bf16.mxu0 0
      %2157 = vmatpush1.bf16.msra.mxu0 %v1958
      %2158 = vmatprep.subr.bf16.mxu0 0
      %2159 = vmatpush1.bf16.msra.mxu0 %v1959
      %2160 = vmatprep.subr.bf16.mxu0 0
      %2161 = vmatpush1.bf16.msra.mxu0 %v1960
      %2162 = vmatprep.subr.bf16.mxu0 0
      %2163 = vmatpush1.bf16.msra.mxu0 0
      %2164 = vmatprep.subr.bf16.mxu0 0
      %2165 = vmatpush1.bf16.msra.mxu0 0
      %2166 = vmatprep.subr.bf16.mxu0 0
      %2167 = vmatpush1.bf16.msra.mxu0 0
      %2168 = vmatprep.subr.bf16.mxu0 0
      %2169 = vmatpush1.bf16.msra.mxu0 0
      %2170 = vmatprep.subr.bf16.mxu0 0
      %2171 = vmatpush1.bf16.msra.mxu0 0
      %2172 = vmatprep.subr.bf16.mxu0 0
      %2173 = vmatpush1.bf16.msra.mxu0 0
      %2174 = vmatprep.subr.bf16.mxu0 0
      %2175 = vmatpush1.bf16.msra.mxu0 0
      %2176 = vmatprep.subr.bf16.mxu0 0
      %2177 = vmatpush1.bf16.msra.mxu0 0
      %2178 = vmatprep.mubr.bf16.mxu0 0
      %2179 = vmatmul.mubr.bf16.gmra.mrb[0].mxu0 %v1208
      %v2180 = vpop.f32.mrb[0].mxu0
      %v2181 = vadd.f32 %v2020, %v2180
      %v2182 = vpop.f32.mrb[0].mxu0
      %v2183 = vpop.f32.mrb[0].mxu0
      %v2184 = vadd.f32 %v2023, %v2183
      %v2185 = vpop.f32.mrb[0].mxu0
      %2186 = vmatprep.mubr.bf16.mxu0 0
      %2187 = vmatmul.mubr.bf16.gmra.mrb[0].mxu0 %v1211
      %v2188 = vpop.f32.mrb[0].mxu0
      %v2189 = vadd.f32 %v2028, %v2188
      %v2190 = vpop.f32.mrb[0].mxu0
      %v2191 = vpop.f32.mrb[0].mxu0
      %v2192 = vadd.f32 %v2031, %v2191
      %v2193 = vpop.f32.mrb[0].mxu0
      %2194 = vmatprep.mubr.bf16.mxu0 0
      %2195 = vmatmul.mubr.bf16.gmra.mrb[0].mxu0 %v1214
      %v2196 = vpop.f32.mrb[0].mxu0
      %v2197 = vadd.f32 %v2036, %v2196
      %v2198 = vpop.f32.mrb[0].mxu0
      %v2199 = vpop.f32.mrb[0].mxu0
      %v2200 = vadd.f32 %v2039, %v2199
      %v2201 = vpop.f32.mrb[0].mxu0
      %2202 = vmatprep.mubr.bf16.mxu0 0
      %2203 = vmatmul.mubr.bf16.gmra.mrb[0].mxu0 %v1217
      %v2204 = vpop.f32.mrb[0].mxu0
      %v2205 = vadd.f32 %v2044, %v2204
      %v2206 = vpop.f32.mrb[0].mxu0
      %v2207 = vpop.f32.mrb[0].mxu0
      %v2208 = vadd.f32 %v2047, %v2207
      %v2209 = vpop.f32.mrb[0].mxu0
      %2210 = vmatprep.mubr.bf16.mxu0 0
      %2211 = vmatmul.mubr.bf16.gmra.mrb[0].mxu0 %v1220
      %v2212 = vpop.f32.mrb[0].mxu0
      %v2213 = vadd.f32 %v2052, %v2212
      %v2214 = vpop.f32.mrb[0].mxu0
      %v2215 = vpop.f32.mrb[0].mxu0
      %v2216 = vadd.f32 %v2055, %v2215
      %v2217 = vpop.f32.mrb[0].mxu0
      %2218 = vmatprep.mubr.bf16.mxu0 0
      %2219 = vmatmul.mubr.bf16.gmra.mrb[0].mxu0 %v1223
      %v2220 = vpop.f32.mrb[0].mxu0
      %v2221 = vadd.f32 %v2060, %v2220
      %v2222 = vpop.f32.mrb[0].mxu0
      %v2223 = vpop.f32.mrb[0].mxu0
      %v2224 = vadd.f32 %v2063, %v2223
      %v2225 = vpop.f32.mrb[0].mxu0
      %2226 = vmatprep.mubr.bf16.mxu0 0
      %2227 = vmatmul.mubr.bf16.gmra.mrb[0].mxu0 %v1226
      %v2228 = vpop.f32.mrb[0].mxu0
      %v2229 = vadd.f32 %v2068, %v2228
      %v2230 = vpop.f32.mrb[0].mxu0
      %v2231 = vpop.f32.mrb[0].mxu0
      %v2232 = vadd.f32 %v2071, %v2231
      %v2233 = vpop.f32.mrb[0].mxu0
      %2234 = vmatprep.mubr.bf16.mxu0 0
      %2235 = vmatmul.mubr.bf16.gmra.mrb[0].mxu0 %v1229
      %v2236 = vpop.f32.mrb[0].mxu0
      %v2237 = vadd.f32 %v2076, %v2236
      %v2238 = vpop.f32.mrb[0].mxu0
      %v2239 = vpop.f32.mrb[0].mxu0
      %v2240 = vadd.f32 %v2079, %v2239
      %v2241 = vpop.f32.mrb[0].mxu0
      %2242 = vmatprep.mubr.bf16.mxu0 0
      %2243 = vmatmul.mubr.bf16.gmra.mrb[0].mxu0 %v1232
      %v2244 = vpop.f32.mrb[0].mxu0
      %v2245 = vadd.f32 %v2084, %v2244
      %v2246 = vpop.f32.mrb[0].mxu0
      %v2247 = vpop.f32.mrb[0].mxu0
      %v2248 = vadd.f32 %v2087, %v2247
      %v2249 = vpop.f32.mrb[0].mxu0
      %2250 = vmatprep.mubr.bf16.mxu0 0
      %2251 = vmatmul.mubr.bf16.gmra.mrb[0].mxu0 %v1235
      %v2252 = vpop.f32.mrb[0].mxu0
      %v2253 = vadd.f32 %v2092, %v2252
      %v2254 = vpop.f32.mrb[0].mxu0
      %v2255 = vpop.f32.mrb[0].mxu0
      %v2256 = vadd.f32 %v2095, %v2255
      %v2257 = vpop.f32.mrb[0].mxu0
      %2258 = vmatprep.mubr.bf16.mxu0 0
      %2259 = vmatmul.mubr.bf16.gmra.mrb[0].mxu0 %v1238
      %v2260 = vpop.f32.mrb[0].mxu0
      %v2261 = vadd.f32 %v2100, %v2260
      %v2262 = vpop.f32.mrb[0].mxu0
      %v2263 = vpop.f32.mrb[0].mxu0
      %v2264 = vadd.f32 %v2103, %v2263
      %v2265 = vpop.f32.mrb[0].mxu0
      %2266 = vmatprep.mubr.bf16.mxu0 0
      %2267 = vmatmul.mubr.bf16.gmra.mrb[0].mxu0 %v1241
      %v2268 = vpop.f32.mrb[0].mxu0
      %v2269 = vadd.f32 %v2108, %v2268
      %v2270 = vpop.f32.mrb[0].mxu0
      %v2271 = vpop.f32.mrb[0].mxu0
      %v2272 = vadd.f32 %v2111, %v2271
      %v2273 = vpop.f32.mrb[0].mxu0
      %2274 = vmatprep.mubr.bf16.mxu0 0
      %2275 = vmatmul.mubr.bf16.gmra.mrb[0].mxu0 %v1244
      %v2276 = vpop.f32.mrb[0].mxu0
      %v2277 = vadd.f32 %v2116, %v2276
      %v2278 = vpop.f32.mrb[0].mxu0
      %v2279 = vpop.f32.mrb[0].mxu0
      %v2280 = vadd.f32 %v2119, %v2279
      %v2281 = vpop.f32.mrb[0].mxu0
      %2282 = vmatprep.mubr.bf16.mxu0 0
      %2283 = vmatmul.mubr.bf16.gmra.mrb[0].mxu0 %v1247
      %v2284 = vpop.f32.mrb[0].mxu0
      %v2285 = vadd.f32 %v2124, %v2284
      %v2286 = vpop.f32.mrb[0].mxu0
      %v2287 = vpop.f32.mrb[0].mxu0
      %v2288 = vadd.f32 %v2127, %v2287
      %v2289 = vpop.f32.mrb[0].mxu0
      %2290 = vmatprep.mubr.bf16.mxu0 0
      %2291 = vmatmul.mubr.bf16.gmra.mrb[0].mxu0 %v1250
      %v2292 = vpop.f32.mrb[0].mxu0
      %v2293 = vadd.f32 %v2132, %v2292
      %v2294 = vpop.f32.mrb[0].mxu0
      %v2295 = vpop.f32.mrb[0].mxu0
      %v2296 = vadd.f32 %v2135, %v2295
      %v2297 = vpop.f32.mrb[0].mxu0
      %2298 = vmatprep.mubr.bf16.mxu0 0
      %2299 = vmatmul.mubr.bf16.gmra.mrb[0].mxu0 %v1253
      %v2300 = vpop.f32.mrb[0].mxu0
      %v2301 = vadd.f32 %v2140, %v2300
      %v2302 = vpop.f32.mrb[0].mxu0
      %v2303 = vpop.f32.mrb[0].mxu0
      %v2304 = vadd.f32 %v2143, %v2303
      %v2305 = vpop.f32.mrb[0].mxu0
      %2306 = vdwg.mxu0
      %s2307 = scalar_lea.vmem %s1, 384
      %v2308 = vld [vmem:[%s2307] sm:$0xf]
      %v2309 = vld [vmem:[%s2307 + $0x4] sm:$0xf]
      %v2310 = vld [vmem:[%s2307 + $0x8] sm:$0xf]
      %v2311 = vld [vmem:[%s2307 + $0xc] sm:$0xf]
      %v2312 = vld [vmem:[%s2307 + $0x10] sm:$0xf]
      %v2313 = vld [vmem:[%s2307 + $0x14] sm:$0xf]
      %v2314 = vld [vmem:[%s2307 + $0x18] sm:$0xf]
      %v2315 = vld [vmem:[%s2307 + $0x1c] sm:$0xf]
      %v2316 = vld [vmem:[%s2307 + $0x20] sm:$0xf]
      %v2317 = vld [vmem:[%s2307 + $0x24] sm:$0xf]
      %v2318 = vld [vmem:[%s2307 + $0x28] sm:$0xf]
      %v2319 = vld [vmem:[%s2307 + $0x2c] sm:$0xf]
      %v2320 = vld [vmem:[%s2307 + $0x30] sm:$0xf]
      %v2321 = vld [vmem:[%s2307 + $0x34] sm:$0xf]
      %v2322 = vld [vmem:[%s2307 + $0x38] sm:$0xf]
      %v2323 = vld [vmem:[%s2307 + $0x3c] sm:$0xf]
      %v2324 = vld [vmem:[%s2307 + $0x40] sm:$0xf]
      %v2325 = vld [vmem:[%s2307 + $0x44] sm:$0xf]
      %v2326 = vld [vmem:[%s2307 + $0x48] sm:$0xf]
      %v2327 = vld [vmem:[%s2307 + $0x4c] sm:$0xf]
      %v2328 = vld [vmem:[%s2307 + $0x50] sm:$0xf]
      %v2329 = vld [vmem:[%s2307 + $0x54] sm:$0xf]
      %v2330 = vld [vmem:[%s2307 + $0x58] sm:$0xf]
      %v2331 = vld [vmem:[%s2307 + $0x5c] sm:$0xf]
      %v2332 = vld [vmem:[%s2307 + $0x60] sm:$0xf]
      %v2333 = vld [vmem:[%s2307 + $0x64] sm:$0xf]
      %v2334 = vld [vmem:[%s2307 + $0x68] sm:$0xf]
      %v2335 = vld [vmem:[%s2307 + $0x6c] sm:$0xf]
      %v2336 = vld [vmem:[%s2307 + $0x70] sm:$0xf]
      %v2337 = vld [vmem:[%s2307 + $0x74] sm:$0xf]
      %v2338 = vld [vmem:[%s2307 + $0x78] sm:$0xf]
      %v2339 = vld [vmem:[%s2307 + $0x7c] sm:$0xf]
      %v2340 = vld [vmem:[%s2307 + $0x80] sm:$0xf]
      %v2341 = vld [vmem:[%s2307 + $0x84] sm:$0xf]
      %v2342 = vld [vmem:[%s2307 + $0x88] sm:$0xf]
      %v2343 = vld [vmem:[%s2307 + $0x8c] sm:$0xf]
      %v2344 = vld [vmem:[%s2307 + $0x90] sm:$0xf]
      %v2345 = vld [vmem:[%s2307 + $0x94] sm:$0xf]
      %v2346 = vld [vmem:[%s2307 + $0x98] sm:$0xf]
      %v2347 = vld [vmem:[%s2307 + $0x9c] sm:$0xf]
      %v2348 = vld [vmem:[%s2307 + $0xa0] sm:$0xf]
      %v2349 = vld [vmem:[%s2307 + $0xa4] sm:$0xf]
      %v2350 = vld [vmem:[%s2307 + $0xa8] sm:$0xf]
      %v2351 = vld [vmem:[%s2307 + $0xac] sm:$0xf]
      %v2352 = vld [vmem:[%s2307 + $0xb0] sm:$0xf]
      %v2353 = vld [vmem:[%s2307 + $0xb4] sm:$0xf]
      %v2354 = vld [vmem:[%s2307 + $0xb8] sm:$0xf]
      %v2355 = vld [vmem:[%s2307 + $0xbc] sm:$0xf]
      %v2404 = vunpack.c.l.b16 %v2308
      %v2405 = vunpack.c.l.b16 %v2309
      %v2406 = vunpack.c.l.b16 %v2310
      %v2407 = vunpack.c.l.b16 %v2311
      %v2408 = vunpack.c.l.b16 %v2312
      %v2409 = vunpack.c.l.b16 %v2313
      %v2410 = vunpack.c.l.b16 %v2314
      %v2411 = vunpack.c.l.b16 %v2315
      %v2412 = vunpack.c.l.b16 %v2316
      %v2413 = vunpack.c.l.b16 %v2317
      %v2414 = vunpack.c.l.b16 %v2318
      %v2415 = vunpack.c.l.b16 %v2319
      %v2416 = vunpack.c.l.b16 %v2320
      %v2417 = vunpack.c.l.b16 %v2321
      %v2418 = vunpack.c.l.b16 %v2322
      %v2419 = vunpack.c.l.b16 %v2323
      %v2420 = vunpack.c.l.b16 %v2324
      %v2421 = vunpack.c.l.b16 %v2325
      %v2422 = vunpack.c.l.b16 %v2326
      %v2423 = vunpack.c.l.b16 %v2327
      %v2424 = vunpack.c.l.b16 %v2328
      %v2425 = vunpack.c.l.b16 %v2329
      %v2426 = vunpack.c.l.b16 %v2330
      %v2427 = vunpack.c.l.b16 %v2331
      %v2428 = vunpack.c.l.b16 %v2332
      %v2429 = vunpack.c.l.b16 %v2333
      %v2430 = vunpack.c.l.b16 %v2334
      %v2431 = vunpack.c.l.b16 %v2335
      %v2432 = vunpack.c.l.b16 %v2336
      %v2433 = vunpack.c.l.b16 %v2337
      %v2434 = vunpack.c.l.b16 %v2338
      %v2435 = vunpack.c.l.b16 %v2339
      %v2436 = vunpack.c.l.b16 %v2340
      %v2437 = vunpack.c.l.b16 %v2341
      %v2438 = vunpack.c.l.b16 %v2342
      %v2439 = vunpack.c.l.b16 %v2343
      %v2440 = vunpack.c.l.b16 %v2344
      %v2441 = vunpack.c.l.b16 %v2345
      %v2442 = vunpack.c.l.b16 %v2346
      %v2443 = vunpack.c.l.b16 %v2347
      %v2444 = vunpack.c.l.b16 %v2348
      %v2445 = vunpack.c.l.b16 %v2349
      %v2446 = vunpack.c.l.b16 %v2350
      %v2447 = vunpack.c.l.b16 %v2351
      %v2448 = vunpack.c.l.b16 %v2352
      %v2449 = vunpack.c.l.b16 %v2353
      %v2450 = vunpack.c.l.b16 %v2354
      %v2451 = vunpack.c.l.b16 %v2355
      %v2452 = vpack.c.b16 %v2405, %v2404
      %v2453 = vpack.c.b16 %v2407, %v2406
      %v2454 = vpack.c.b16 %v2409, %v2408
      %v2455 = vpack.c.b16 %v2411, %v2410
      %v2456 = vpack.c.b16 %v2413, %v2412
      %v2457 = vpack.c.b16 %v2415, %v2414
      %v2458 = vpack.c.b16 %v2417, %v2416
      %v2459 = vpack.c.b16 %v2419, %v2418
      %v2460 = vpack.c.b16 %v2421, %v2420
      %v2461 = vpack.c.b16 %v2423, %v2422
      %v2462 = vpack.c.b16 %v2425, %v2424
      %v2463 = vpack.c.b16 %v2427, %v2426
      %v2464 = vpack.c.b16 %v2429, %v2428
      %v2465 = vpack.c.b16 %v2431, %v2430
      %v2466 = vpack.c.b16 %v2433, %v2432
      %v2467 = vpack.c.b16 %v2435, %v2434
      %v2468 = vpack.c.b16 %v2437, %v2436
      %v2469 = vpack.c.b16 %v2439, %v2438
      %v2470 = vpack.c.b16 %v2441, %v2440
      %v2471 = vpack.c.b16 %v2443, %v2442
      %v2472 = vpack.c.b16 %v2445, %v2444
      %v2473 = vpack.c.b16 %v2447, %v2446
      %v2474 = vpack.c.b16 %v2449, %v2448
      %v2475 = vpack.c.b16 %v2451, %v2450
      %2500 = vmatprep.subr.bf16.mxu0 0
      %2501 = vmatpush1.bf16.msra.mxu0 %v2452
      %2502 = vmatprep.subr.bf16.mxu0 0
      %2503 = vmatpush1.bf16.msra.mxu0 %v2453
      %2504 = vmatprep.subr.bf16.mxu0 0
      %2505 = vmatpush1.bf16.msra.mxu0 %v2454
      %2506 = vmatprep.subr.bf16.mxu0 0
      %2507 = vmatpush1.bf16.msra.mxu0 %v2455
      %2508 = vmatprep.subr.bf16.mxu0 0
      %2509 = vmatpush1.bf16.msra.mxu0 %v2456
      %2510 = vmatprep.subr.bf16.mxu0 0
      %2511 = vmatpush1.bf16.msra.mxu0 %v2457
      %2512 = vmatprep.subr.bf16.mxu0 0
      %2513 = vmatpush1.bf16.msra.mxu0 %v2458
      %2514 = vmatprep.subr.bf16.mxu0 0
      %2515 = vmatpush1.bf16.msra.mxu0 %v2459
      %2516 = vmatprep.subr.bf16.mxu0 0
      %2517 = vmatpush1.bf16.msra.mxu0 %v2460
      %2518 = vmatprep.subr.bf16.mxu0 0
      %2519 = vmatpush1.bf16.msra.mxu0 %v2461
      %2520 = vmatprep.subr.bf16.mxu0 0
      %2521 = vmatpush1.bf16.msra.mxu0 %v2462
      %2522 = vmatprep.subr.bf16.mxu0 0
      %2523 = vmatpush1.bf16.msra.mxu0 %v2463
      %2524 = vmatprep.subr.bf16.mxu0 0
      %2525 = vmatpush1.bf16.msra.mxu0 %v2464
      %2526 = vmatprep.subr.bf16.mxu0 0
      %2527 = vmatpush1.bf16.msra.mxu0 %v2465
      %2528 = vmatprep.subr.bf16.mxu0 0
      %2529 = vmatpush1.bf16.msra.mxu0 %v2466
      %2530 = vmatprep.subr.bf16.mxu0 0
      %2531 = vmatpush1.bf16.msra.mxu0 %v2467
      %2532 = vmatprep.mubr.bf16.mxu0 %v1006
      %2533 = vmatmul.mubr.bf16.gmra.mrb[0].mxu0 %v882
      %v2534 = vpop.f32.mrb[0].mxu0
      %v2535 = vadd.f32 0.0, %v2534
      %v2536 = vpop.f32.mrb[0].mxu0
      %v2537 = vpop.f32.mrb[0].mxu0
      %v2538 = vadd.f32 0.0, %v2537
      %v2539 = vpop.f32.mrb[0].mxu0
      %2540 = vmatprep.mubr.bf16.mxu0 %v1018
      %2541 = vmatmul.mubr.bf16.gmra.mrb[0].mxu0 %v883
      %v2542 = vpop.f32.mrb[0].mxu0
      %v2543 = vadd.f32 0.0, %v2542
      %v2544 = vpop.f32.mrb[0].mxu0
      %v2545 = vpop.f32.mrb[0].mxu0
      %v2546 = vadd.f32 0.0, %v2545
      %v2547 = vpop.f32.mrb[0].mxu0
      %2548 = vmatprep.mubr.bf16.mxu0 %v1030
      %2549 = vmatmul.mubr.bf16.gmra.mrb[0].mxu0 %v884
      %v2550 = vpop.f32.mrb[0].mxu0
      %v2551 = vadd.f32 0.0, %v2550
      %v2552 = vpop.f32.mrb[0].mxu0
      %v2553 = vpop.f32.mrb[0].mxu0
      %v2554 = vadd.f32 0.0, %v2553
      %v2555 = vpop.f32.mrb[0].mxu0
      %2556 = vmatprep.mubr.bf16.mxu0 %v1042
      %2557 = vmatmul.mubr.bf16.gmra.mrb[0].mxu0 %v885
      %v2558 = vpop.f32.mrb[0].mxu0
      %v2559 = vadd.f32 0.0, %v2558
      %v2560 = vpop.f32.mrb[0].mxu0
      %v2561 = vpop.f32.mrb[0].mxu0
      %v2562 = vadd.f32 0.0, %v2561
      %v2563 = vpop.f32.mrb[0].mxu0
      %2564 = vmatprep.mubr.bf16.mxu0 %v1054
      %2565 = vmatmul.mubr.bf16.gmra.mrb[0].mxu0 %v886
      %v2566 = vpop.f32.mrb[0].mxu0
      %v2567 = vadd.f32 0.0, %v2566
      %v2568 = vpop.f32.mrb[0].mxu0
      %v2569 = vpop.f32.mrb[0].mxu0
      %v2570 = vadd.f32 0.0, %v2569
      %v2571 = vpop.f32.mrb[0].mxu0
      %2572 = vmatprep.mubr.bf16.mxu0 %v1066
      %2573 = vmatmul.mubr.bf16.gmra.mrb[0].mxu0 %v887
      %v2574 = vpop.f32.mrb[0].mxu0
      %v2575 = vadd.f32 0.0, %v2574
      %v2576 = vpop.f32.mrb[0].mxu0
      %v2577 = vpop.f32.mrb[0].mxu0
      %v2578 = vadd.f32 0.0, %v2577
      %v2579 = vpop.f32.mrb[0].mxu0
      %2580 = vmatprep.mubr.bf16.mxu0 %v1078
      %2581 = vmatmul.mubr.bf16.gmra.mrb[0].mxu0 %v888
      %v2582 = vpop.f32.mrb[0].mxu0
      %v2583 = vadd.f32 0.0, %v2582
      %v2584 = vpop.f32.mrb[0].mxu0
      %v2585 = vpop.f32.mrb[0].mxu0
      %v2586 = vadd.f32 0.0, %v2585
      %v2587 = vpop.f32.mrb[0].mxu0
      %2588 = vmatprep.mubr.bf16.mxu0 %v1090
      %2589 = vmatmul.mubr.bf16.gmra.mrb[0].mxu0 %v889
      %v2590 = vpop.f32.mrb[0].mxu0
      %v2591 = vadd.f32 0.0, %v2590
      %v2592 = vpop.f32.mrb[0].mxu0
      %v2593 = vpop.f32.mrb[0].mxu0
      %v2594 = vadd.f32 0.0, %v2593
      %v2595 = vpop.f32.mrb[0].mxu0
      %2596 = vmatprep.mubr.bf16.mxu0 %v1102
      %2597 = vmatmul.mubr.bf16.gmra.mrb[0].mxu0 %v890
      %v2598 = vpop.f32.mrb[0].mxu0
      %v2599 = vadd.f32 0.0, %v2598
      %v2600 = vpop.f32.mrb[0].mxu0
      %v2601 = vpop.f32.mrb[0].mxu0
      %v2602 = vadd.f32 0.0, %v2601
      %v2603 = vpop.f32.mrb[0].mxu0
      %2604 = vmatprep.mubr.bf16.mxu0 %v1114
      %2605 = vmatmul.mubr.bf16.gmra.mrb[0].mxu0 %v891
      %v2606 = vpop.f32.mrb[0].mxu0
      %v2607 = vadd.f32 0.0, %v2606
      %v2608 = vpop.f32.mrb[0].mxu0
      %v2609 = vpop.f32.mrb[0].mxu0
      %v2610 = vadd.f32 0.0, %v2609
      %v2611 = vpop.f32.mrb[0].mxu0
      %2612 = vmatprep.mubr.bf16.mxu0 %v1126
      %2613 = vmatmul.mubr.bf16.gmra.mrb[0].mxu0 %v892
      %v2614 = vpop.f32.mrb[0].mxu0
      %v2615 = vadd.f32 0.0, %v2614
      %v2616 = vpop.f32.mrb[0].mxu0
      %v2617 = vpop.f32.mrb[0].mxu0
      %v2618 = vadd.f32 0.0, %v2617
      %v2619 = vpop.f32.mrb[0].mxu0
      %2620 = vmatprep.mubr.bf16.mxu0 %v1138
      %2621 = vmatmul.mubr.bf16.gmra.mrb[0].mxu0 %v893
      %v2622 = vpop.f32.mrb[0].mxu0
      %v2623 = vadd.f32 0.0, %v2622
      %v2624 = vpop.f32.mrb[0].mxu0
      %v2625 = vpop.f32.mrb[0].mxu0
      %v2626 = vadd.f32 0.0, %v2625
      %v2627 = vpop.f32.mrb[0].mxu0
      %2628 = vmatprep.mubr.bf16.mxu0 %v1150
      %2629 = vmatmul.mubr.bf16.gmra.mrb[0].mxu0 %v894
      %v2630 = vpop.f32.mrb[0].mxu0
      %v2631 = vadd.f32 0.0, %v2630
      %v2632 = vpop.f32.mrb[0].mxu0
      %v2633 = vpop.f32.mrb[0].mxu0
      %v2634 = vadd.f32 0.0, %v2633
      %v2635 = vpop.f32.mrb[0].mxu0
      %2636 = vmatprep.mubr.bf16.mxu0 %v1162
      %2637 = vmatmul.mubr.bf16.gmra.mrb[0].mxu0 %v895
      %v2638 = vpop.f32.mrb[0].mxu0
      %v2639 = vadd.f32 0.0, %v2638
      %v2640 = vpop.f32.mrb[0].mxu0
      %v2641 = vpop.f32.mrb[0].mxu0
      %v2642 = vadd.f32 0.0, %v2641
      %v2643 = vpop.f32.mrb[0].mxu0
      %2644 = vmatprep.mubr.bf16.mxu0 %v1174
      %2645 = vmatmul.mubr.bf16.gmra.mrb[0].mxu0 %v896
      %v2646 = vpop.f32.mrb[0].mxu0
      %v2647 = vadd.f32 0.0, %v2646
      %v2648 = vpop.f32.mrb[0].mxu0
      %v2649 = vpop.f32.mrb[0].mxu0
      %v2650 = vadd.f32 0.0, %v2649
      %v2651 = vpop.f32.mrb[0].mxu0
      %2652 = vmatprep.mubr.bf16.mxu0 %v1186
      %2653 = vmatmul.mubr.bf16.gmra.mrb[0].mxu0 %v897
      %v2654 = vpop.f32.mrb[0].mxu0
      %v2655 = vadd.f32 0.0, %v2654
      %v2656 = vpop.f32.mrb[0].mxu0
      %v2657 = vpop.f32.mrb[0].mxu0
      %v2658 = vadd.f32 0.0, %v2657
      %v2659 = vpop.f32.mrb[0].mxu0
      %2660 = vdwg.mxu0
      %2661 = vmatprep.subr.bf16.mxu0 0
      %2662 = vmatpush1.bf16.msra.mxu0 %v2468
      %2663 = vmatprep.subr.bf16.mxu0 0
      %2664 = vmatpush1.bf16.msra.mxu0 %v2469
      %2665 = vmatprep.subr.bf16.mxu0 0
      %2666 = vmatpush1.bf16.msra.mxu0 %v2470
      %2667 = vmatprep.subr.bf16.mxu0 0
      %2668 = vmatpush1.bf16.msra.mxu0 %v2471
      %2669 = vmatprep.subr.bf16.mxu0 0
      %2670 = vmatpush1.bf16.msra.mxu0 %v2472
      %2671 = vmatprep.subr.bf16.mxu0 0
      %2672 = vmatpush1.bf16.msra.mxu0 %v2473
      %2673 = vmatprep.subr.bf16.mxu0 0
      %2674 = vmatpush1.bf16.msra.mxu0 %v2474
      %2675 = vmatprep.subr.bf16.mxu0 0
      %2676 = vmatpush1.bf16.msra.mxu0 %v2475
      %2677 = vmatprep.subr.bf16.mxu0 0
      %2678 = vmatpush1.bf16.msra.mxu0 0
      %2679 = vmatprep.subr.bf16.mxu0 0
      %2680 = vmatpush1.bf16.msra.mxu0 0
      %2681 = vmatprep.subr.bf16.mxu0 0
      %2682 = vmatpush1.bf16.msra.mxu0 0
      %2683 = vmatprep.subr.bf16.mxu0 0
      %2684 = vmatpush1.bf16.msra.mxu0 0
      %2685 = vmatprep.subr.bf16.mxu0 0
      %2686 = vmatpush1.bf16.msra.mxu0 0
      %2687 = vmatprep.subr.bf16.mxu0 0
      %2688 = vmatpush1.bf16.msra.mxu0 0
      %2689 = vmatprep.subr.bf16.mxu0 0
      %2690 = vmatpush1.bf16.msra.mxu0 0
      %2691 = vmatprep.subr.bf16.mxu0 0
      %2692 = vmatpush1.bf16.msra.mxu0 0
      %2693 = vmatprep.mubr.bf16.mxu0 0
      %2694 = vmatmul.mubr.bf16.gmra.mrb[0].mxu0 %v1214
      %v2695 = vpop.f32.mrb[0].mxu0
      %v2696 = vadd.f32 %v2535, %v2695
      %v2697 = vpop.f32.mrb[0].mxu0
      %v2698 = vpop.f32.mrb[0].mxu0
      %v2699 = vadd.f32 %v2538, %v2698
      %v2700 = vpop.f32.mrb[0].mxu0
      %2701 = vmatprep.mubr.bf16.mxu0 0
      %2702 = vmatmul.mubr.bf16.gmra.mrb[0].mxu0 %v1217
      %v2703 = vpop.f32.mrb[0].mxu0
      %v2704 = vadd.f32 %v2543, %v2703
      %v2705 = vpop.f32.mrb[0].mxu0
      %v2706 = vpop.f32.mrb[0].mxu0
      %v2707 = vadd.f32 %v2546, %v2706
      %v2708 = vpop.f32.mrb[0].mxu0
      %2709 = vmatprep.mubr.bf16.mxu0 0
      %2710 = vmatmul.mubr.bf16.gmra.mrb[0].mxu0 %v1220
      %v2711 = vpop.f32.mrb[0].mxu0
      %v2712 = vadd.f32 %v2551, %v2711
      %v2713 = vpop.f32.mrb[0].mxu0
      %v2714 = vpop.f32.mrb[0].mxu0
      %v2715 = vadd.f32 %v2554, %v2714
      %v2716 = vpop.f32.mrb[0].mxu0
      %2717 = vmatprep.mubr.bf16.mxu0 0
      %2718 = vmatmul.mubr.bf16.gmra.mrb[0].mxu0 %v1223
      %v2719 = vpop.f32.mrb[0].mxu0
      %v2720 = vadd.f32 %v2559, %v2719
      %v2721 = vpop.f32.mrb[0].mxu0
      %v2722 = vpop.f32.mrb[0].mxu0
      %v2723 = vadd.f32 %v2562, %v2722
      %v2724 = vpop.f32.mrb[0].mxu0
      %2725 = vmatprep.mubr.bf16.mxu0 0
      %2726 = vmatmul.mubr.bf16.gmra.mrb[0].mxu0 %v1226
      %v2727 = vpop.f32.mrb[0].mxu0
      %v2728 = vadd.f32 %v2567, %v2727
      %v2729 = vpop.f32.mrb[0].mxu0
      %v2730 = vpop.f32.mrb[0].mxu0
      %v2731 = vadd.f32 %v2570, %v2730
      %v2732 = vpop.f32.mrb[0].mxu0
      %2733 = vmatprep.mubr.bf16.mxu0 0
      %2734 = vmatmul.mubr.bf16.gmra.mrb[0].mxu0 %v1229
      %v2735 = vpop.f32.mrb[0].mxu0
      %v2736 = vadd.f32 %v2575, %v2735
      %v2737 = vpop.f32.mrb[0].mxu0
      %v2738 = vpop.f32.mrb[0].mxu0
      %v2739 = vadd.f32 %v2578, %v2738
      %v2740 = vpop.f32.mrb[0].mxu0
      %2741 = vmatprep.mubr.bf16.mxu0 0
      %2742 = vmatmul.mubr.bf16.gmra.mrb[0].mxu0 %v1232
      %v2743 = vpop.f32.mrb[0].mxu0
      %v2744 = vadd.f32 %v2583, %v2743
      %v2745 = vpop.f32.mrb[0].mxu0
      %v2746 = vpop.f32.mrb[0].mxu0
      %v2747 = vadd.f32 %v2586, %v2746
      %v2748 = vpop.f32.mrb[0].mxu0
      %2749 = vmatprep.mubr.bf16.mxu0 0
      %2750 = vmatmul.mubr.bf16.gmra.mrb[0].mxu0 %v1235
      %v2751 = vpop.f32.mrb[0].mxu0
      %v2752 = vadd.f32 %v2591, %v2751
      %v2753 = vpop.f32.mrb[0].mxu0
      %v2754 = vpop.f32.mrb[0].mxu0
      %v2755 = vadd.f32 %v2594, %v2754
      %v2756 = vpop.f32.mrb[0].mxu0
      %2757 = vmatprep.mubr.bf16.mxu0 0
      %2758 = vmatmul.mubr.bf16.gmra.mrb[0].mxu0 %v1238
      %v2759 = vpop.f32.mrb[0].mxu0
      %v2760 = vadd.f32 %v2599, %v2759
      %v2761 = vpop.f32.mrb[0].mxu0
      %v2762 = vpop.f32.mrb[0].mxu0
      %v2763 = vadd.f32 %v2602, %v2762
      %v2764 = vpop.f32.mrb[0].mxu0
      %2765 = vmatprep.mubr.bf16.mxu0 0
      %2766 = vmatmul.mubr.bf16.gmra.mrb[0].mxu0 %v1241
      %v2767 = vpop.f32.mrb[0].mxu0
      %v2768 = vadd.f32 %v2607, %v2767
      %v2769 = vpop.f32.mrb[0].mxu0
      %v2770 = vpop.f32.mrb[0].mxu0
      %v2771 = vadd.f32 %v2610, %v2770
      %v2772 = vpop.f32.mrb[0].mxu0
      %2773 = vmatprep.mubr.bf16.mxu0 0
      %2774 = vmatmul.mubr.bf16.gmra.mrb[0].mxu0 %v1244
      %v2775 = vpop.f32.mrb[0].mxu0
      %v2776 = vadd.f32 %v2615, %v2775
      %v2777 = vpop.f32.mrb[0].mxu0
      %v2778 = vpop.f32.mrb[0].mxu0
      %v2779 = vadd.f32 %v2618, %v2778
      %v2780 = vpop.f32.mrb[0].mxu0
      %2781 = vmatprep.mubr.bf16.mxu0 0
      %2782 = vmatmul.mubr.bf16.gmra.mrb[0].mxu0 %v1247
      %v2783 = vpop.f32.mrb[0].mxu0
      %v2784 = vadd.f32 %v2623, %v2783
      %v2785 = vpop.f32.mrb[0].mxu0
      %v2786 = vpop.f32.mrb[0].mxu0
      %v2787 = vadd.f32 %v2626, %v2786
      %v2788 = vpop.f32.mrb[0].mxu0
      %2789 = vmatprep.mubr.bf16.mxu0 0
      %2790 = vmatmul.mubr.bf16.gmra.mrb[0].mxu0 %v1250
      %v2791 = vpop.f32.mrb[0].mxu0
      %v2792 = vadd.f32 %v2631, %v2791
      %v2793 = vpop.f32.mrb[0].mxu0
      %v2794 = vpop.f32.mrb[0].mxu0
      %v2795 = vadd.f32 %v2634, %v2794
      %v2796 = vpop.f32.mrb[0].mxu0
      %2797 = vmatprep.mubr.bf16.mxu0 0
      %2798 = vmatmul.mubr.bf16.gmra.mrb[0].mxu0 %v1253
      %v2799 = vpop.f32.mrb[0].mxu0
      %v2800 = vadd.f32 %v2639, %v2799
      %v2801 = vpop.f32.mrb[0].mxu0
      %v2802 = vpop.f32.mrb[0].mxu0
      %v2803 = vadd.f32 %v2642, %v2802
      %v2804 = vpop.f32.mrb[0].mxu0
      %2805 = vmatprep.mubr.bf16.mxu0 0
      %2806 = vmatmul.mubr.bf16.gmra.mrb[0].mxu0 %v1256
      %v2807 = vpop.f32.mrb[0].mxu0
      %v2808 = vadd.f32 %v2647, %v2807
      %v2809 = vpop.f32.mrb[0].mxu0
      %v2810 = vpop.f32.mrb[0].mxu0
      %v2811 = vadd.f32 %v2650, %v2810
      %v2812 = vpop.f32.mrb[0].mxu0
      %2813 = vmatprep.mubr.bf16.mxu0 0
      %2814 = vmatmul.mubr.bf16.gmra.mrb[0].mxu0 %v1259
      %v2815 = vpop.f32.mrb[0].mxu0
      %v2816 = vadd.f32 %v2655, %v2815
      %v2817 = vpop.f32.mrb[0].mxu0
      %v2818 = vpop.f32.mrb[0].mxu0
      %v2819 = vadd.f32 %v2658, %v2818
      %v2820 = vpop.f32.mrb[0].mxu0
      %2821 = vdwg.mxu0
      %v2822 = vadd.f32 %v2181, %v2696
      %v2823 = vadd.f32 %v2184, %v2699
      %v2824 = vadd.f32 %v2189, %v2704
      %v2825 = vadd.f32 %v2192, %v2707
      %v2826 = vadd.f32 %v2197, %v2712
      %v2827 = vadd.f32 %v2200, %v2715
      %v2828 = vadd.f32 %v2205, %v2720
      %v2829 = vadd.f32 %v2208, %v2723
      %v2830 = vadd.f32 %v2213, %v2728
      %v2831 = vadd.f32 %v2216, %v2731
      %v2832 = vadd.f32 %v2221, %v2736
      %v2833 = vadd.f32 %v2224, %v2739
      %v2834 = vadd.f32 %v2229, %v2744
      %v2835 = vadd.f32 %v2232, %v2747
      %v2836 = vadd.f32 %v2237, %v2752
      %v2837 = vadd.f32 %v2240, %v2755
      %v2838 = vadd.f32 %v2245, %v2760
      %v2839 = vadd.f32 %v2248, %v2763
      %v2840 = vadd.f32 %v2253, %v2768
      %v2841 = vadd.f32 %v2256, %v2771
      %v2842 = vadd.f32 %v2261, %v2776
      %v2843 = vadd.f32 %v2264, %v2779
      %v2844 = vadd.f32 %v2269, %v2784
      %v2845 = vadd.f32 %v2272, %v2787
      %v2846 = vadd.f32 %v2277, %v2792
      %v2847 = vadd.f32 %v2280, %v2795
      %v2848 = vadd.f32 %v2285, %v2800
      %v2849 = vadd.f32 %v2288, %v2803
      %v2850 = vadd.f32 %v2293, %v2808
      %v2851 = vadd.f32 %v2296, %v2811
      %v2852 = vadd.f32 %v2301, %v2816
      %v2853 = vadd.f32 %v2304, %v2819
      %v2855 = vlaneseq
      %v2856 = vshrl.u32 %v2855, 7
      %v2857 = vsub.s32 0, %v2856
      %v2858 = vrot.slane %v807, %v2857
      %v2860 = vadd.f32 %v2822, %v2858
      %v2861 = vadd.f32 %v2823, %v2858
      %v2862 = vadd.f32 %v2824, %v2858
      %v2863 = vadd.f32 %v2825, %v2858
      %v2864 = vadd.f32 %v2826, %v2858
      %v2865 = vadd.f32 %v2827, %v2858
      %v2866 = vadd.f32 %v2828, %v2858
      %v2867 = vadd.f32 %v2829, %v2858
      %v2868 = vadd.f32 %v2830, %v2858
      %v2869 = vadd.f32 %v2831, %v2858
      %v2870 = vadd.f32 %v2832, %v2858
      %v2871 = vadd.f32 %v2833, %v2858
      %v2872 = vadd.f32 %v2834, %v2858
      %v2873 = vadd.f32 %v2835, %v2858
      %v2874 = vadd.f32 %v2836, %v2858
      %v2875 = vadd.f32 %v2837, %v2858
      %v2876 = vadd.f32 %v2838, %v2858
      %v2877 = vadd.f32 %v2839, %v2858
      %v2878 = vadd.f32 %v2840, %v2858
      %v2879 = vadd.f32 %v2841, %v2858
      %v2880 = vadd.f32 %v2842, %v2858
      %v2881 = vadd.f32 %v2843, %v2858
      %v2882 = vadd.f32 %v2844, %v2858
      %v2883 = vadd.f32 %v2845, %v2858
      %v2884 = vadd.f32 %v2846, %v2858
      %v2885 = vadd.f32 %v2847, %v2858
      %v2886 = vadd.f32 %v2848, %v2858
      %v2887 = vadd.f32 %v2849, %v2858
      %v2888 = vadd.f32 %v2850, %v2858
      %v2889 = vadd.f32 %v2851, %v2858
      %v2890 = vadd.f32 %v2852, %v2858
      %v2891 = vadd.f32 %v2853, %v2858
      %v2892 = vmax.f32 %v2860, 0.0
      %v2893 = vmax.f32 %v2861, 0.0
      %v2894 = vmax.f32 %v2862, 0.0
      %v2895 = vmax.f32 %v2863, 0.0
      %v2896 = vmax.f32 %v2864, 0.0
      %v2897 = vmax.f32 %v2865, 0.0
      %v2898 = vmax.f32 %v2866, 0.0
      %v2899 = vmax.f32 %v2867, 0.0
      %v2900 = vmax.f32 %v2868, 0.0
      %v2901 = vmax.f32 %v2869, 0.0
      %v2902 = vmax.f32 %v2870, 0.0
      %v2903 = vmax.f32 %v2871, 0.0
      %v2904 = vmax.f32 %v2872, 0.0
      %v2905 = vmax.f32 %v2873, 0.0
      %v2906 = vmax.f32 %v2874, 0.0
      %v2907 = vmax.f32 %v2875, 0.0
      %v2908 = vmax.f32 %v2876, 0.0
      %v2909 = vmax.f32 %v2877, 0.0
      %v2910 = vmax.f32 %v2878, 0.0
      %v2911 = vmax.f32 %v2879, 0.0
      %v2912 = vmax.f32 %v2880, 0.0
      %v2913 = vmax.f32 %v2881, 0.0
      %v2914 = vmax.f32 %v2882, 0.0
      %v2915 = vmax.f32 %v2883, 0.0
      %v2916 = vmax.f32 %v2884, 0.0
      %v2917 = vmax.f32 %v2885, 0.0
      %v2918 = vmax.f32 %v2886, 0.0
      %v2919 = vmax.f32 %v2887, 0.0
      %v2920 = vmax.f32 %v2888, 0.0
      %v2921 = vmax.f32 %v2889, 0.0
      %v2922 = vmax.f32 %v2890, 0.0
      %v2923 = vmax.f32 %v2891, 0.0
      %2924 = vst [vmem:[#allocation3] sm:$0xf] 0
      %2925 = vst [vmem:[#allocation3 + $0x4] sm:$0xf] 0
      %2926 = vst [vmem:[#allocation3 + $0x8] sm:$0x1] 0
      %2927 = vst [vmem:[#allocation3 + $0xc] sm:$0xf] 0
      %2928 = vst [vmem:[#allocation3 + $0x10] sm:$0xf] 0
      %2929 = vst [vmem:[#allocation3 + $0x14] sm:$0x1] 0
      %2930 = vst [vmem:[#allocation3 + $0x18] sm:$0xf] 0
      %2931 = vst [vmem:[#allocation3 + $0x1c] sm:$0xf] 0
      %2932 = vst [vmem:[#allocation3 + $0x20] sm:$0x1] 0
      %2933 = vst [vmem:[#allocation3 + $0x24] sm:$0xf] 0
      %2934 = vst [vmem:[#allocation3 + $0x28] sm:$0xf] 0
      %2935 = vst [vmem:[#allocation3 + $0x2c] sm:$0x1] 0
      %2936 = vst [vmem:[#allocation3 + $0x30] sm:$0xf] 0
      %2937 = vst [vmem:[#allocation3 + $0x34] sm:$0xf] 0
      %2938 = vst [vmem:[#allocation3 + $0x38] sm:$0x1] 0
      %2939 = vst [vmem:[#allocation3 + $0x3c] sm:$0xf] 0
      %2940 = vst [vmem:[#allocation3 + $0x40] sm:$0xf] 0
      %2941 = vst [vmem:[#allocation3 + $0x44] sm:$0x1] 0
      %2942 = vst [vmem:[#allocation3 + $0x48] sm:$0xf] 0
      %2943 = vst [vmem:[#allocation3 + $0x4c] sm:$0xf] 0
      %2944 = vst [vmem:[#allocation3 + $0x50] sm:$0x1] 0
      %2945 = vst [vmem:[#allocation3 + $0x54] sm:$0xf] 0
      %2946 = vst [vmem:[#allocation3 + $0x58] sm:$0xf] 0
      %2947 = vst [vmem:[#allocation3 + $0x5c] sm:$0x1] 0
      %2948 = vst [vmem:[#allocation3 + $0x60] sm:$0xf] 0
      %2949 = vst [vmem:[#allocation3 + $0x64] sm:$0xf] 0
      %2950 = vst [vmem:[#allocation3 + $0x68] sm:$0x1] 0
      %2951 = vst [vmem:[#allocation3 + $0x6c] sm:$0xf] 0
      %2952 = vst [vmem:[#allocation3 + $0x70] sm:$0xf] 0
      %2953 = vst [vmem:[#allocation3 + $0x74] sm:$0x1] 0
      %2954 = vst [vmem:[#allocation3 + $0x78] sm:$0xf] 0
      %2955 = vst [vmem:[#allocation3 + $0x7c] sm:$0xf] 0
      %2956 = vst [vmem:[#allocation3 + $0x80] sm:$0x1] 0
      %2957 = vst [vmem:[#allocation3 + $0x84] sm:$0xf] 0
      %2958 = vst [vmem:[#allocation3 + $0x88] sm:$0xf] 0
      %2959 = vst [vmem:[#allocation3 + $0x8c] sm:$0x1] 0
      %2960 = vst [vmem:[#allocation3 + $0x90] sm:$0xf] 0
      %2961 = vst [vmem:[#allocation3 + $0x94] sm:$0xf] 0
      %2962 = vst [vmem:[#allocation3 + $0x98] sm:$0x1] 0
      %2963 = vst [vmem:[#allocation3 + $0x9c] sm:$0xf] 0
      %2964 = vst [vmem:[#allocation3 + $0xa0] sm:$0xf] 0
      %2965 = vst [vmem:[#allocation3 + $0xa4] sm:$0x1] 0
      %2966 = vst [vmem:[#allocation3 + $0xa8] sm:$0xf] 0
      %2967 = vst [vmem:[#allocation3 + $0xac] sm:$0xf] 0
      %2968 = vst [vmem:[#allocation3 + $0xb0] sm:$0x1] 0
      %2969 = vst [vmem:[#allocation3 + $0xb4] sm:$0xf] 0
      %2970 = vst [vmem:[#allocation3 + $0xb8] sm:$0xf] 0
      %2971 = vst [vmem:[#allocation3 + $0xbc] sm:$0x1] 0
      %2972 = vst [vmem:[#allocation3 + $0xc0] sm:$0xf] 0
      %2973 = vst [vmem:[#allocation3 + $0xc4] sm:$0xf] 0
      %2974 = vst [vmem:[#allocation3 + $0xc8] sm:$0x1] 0
      %2975 = vst [vmem:[#allocation3 + $0xcc] sm:$0xf] 0
      %2976 = vst [vmem:[#allocation3 + $0xd0] sm:$0xf] 0
      %2977 = vst [vmem:[#allocation3 + $0xd4] sm:$0x1] 0
      %v2978 = vpack.c.bf16 %v2893, %v2892
      %v2979 = vpack.c.bf16 %v2895, %v2894
      %v2980 = vpack.c.bf16 %v2897, %v2896
      %v2981 = vpack.c.bf16 %v2899, %v2898
      %v2982 = vpack.c.bf16 %v2901, %v2900
      %v2983 = vpack.c.bf16 %v2903, %v2902
      %v2984 = vpack.c.bf16 %v2905, %v2904
      %v2985 = vpack.c.bf16 %v2907, %v2906
      %v2986 = vpack.c.bf16 %v2909, %v2908
      %v2987 = vpack.c.bf16 %v2911, %v2910
      %v2988 = vpack.c.bf16 %v2913, %v2912
      %v2989 = vpack.c.bf16 %v2915, %v2914
      %v2990 = vpack.c.bf16 %v2917, %v2916
      %v2991 = vpack.c.bf16 %v2919, %v2918
      %v2992 = vpack.c.bf16 %v2921, %v2920
      %v2993 = vpack.c.bf16 %v2923, %v2922
      %v3010 = vunpack.c.l.b16 %v2978
      %v3011 = vunpack.c.h.b16 %v2978
      %v3012 = vunpack.c.l.b16 %v2979
      %v3013 = vunpack.c.h.b16 %v2979
      %v3014 = vunpack.c.l.b16 %v2980
      %v3015 = vunpack.c.h.b16 %v2980
      %v3016 = vunpack.c.l.b16 %v2981
      %v3017 = vunpack.c.h.b16 %v2981
      %v3018 = vunpack.c.l.b16 %v2982
      %v3019 = vunpack.c.h.b16 %v2982
      %v3020 = vunpack.c.l.b16 %v2983
      %v3021 = vunpack.c.h.b16 %v2983
      %v3022 = vunpack.c.l.b16 %v2984
      %v3023 = vunpack.c.h.b16 %v2984
      %v3024 = vunpack.c.l.b16 %v2985
      %v3025 = vunpack.c.h.b16 %v2985
      %v3026 = vunpack.c.l.b16 %v2986
      %v3027 = vunpack.c.h.b16 %v2986
      %v3028 = vunpack.c.l.b16 %v2987
      %v3029 = vunpack.c.h.b16 %v2987
      %v3030 = vunpack.c.l.b16 %v2988
      %v3031 = vunpack.c.h.b16 %v2988
      %v3032 = vunpack.c.l.b16 %v2989
      %v3033 = vunpack.c.h.b16 %v2989
      %v3034 = vunpack.c.l.b16 %v2990
      %v3035 = vunpack.c.h.b16 %v2990
      %v3036 = vunpack.c.l.b16 %v2991
      %v3037 = vunpack.c.h.b16 %v2991
      %v3038 = vunpack.c.l.b16 %v2992
      %v3039 = vunpack.c.h.b16 %v2992
      %v3040 = vunpack.c.l.b16 %v2993
      %v3041 = vunpack.c.h.b16 %v2993
      %v3042 = vpack.c.b16 %v3010, %v3010
      %v3043 = vpack.c.b16 %v3011, %v3011
      %v3044 = vpack.c.b16 %v3012, %v3012
      %v3045 = vpack.c.b16 %v3013, %v3013
      %v3046 = vpack.c.b16 %v3014, %v3014
      %v3047 = vpack.c.b16 %v3015, %v3015
      %v3048 = vpack.c.b16 %v3016, %v3016
      %v3049 = vpack.c.b16 %v3017, %v3017
      %v3050 = vpack.c.b16 %v3018, %v3018
      %v3051 = vpack.c.b16 %v3019, %v3019
      %v3052 = vpack.c.b16 %v3020, %v3020
      %v3053 = vpack.c.b16 %v3021, %v3021
      %v3054 = vpack.c.b16 %v3022, %v3022
      %v3055 = vpack.c.b16 %v3023, %v3023
      %v3056 = vpack.c.b16 %v3024, %v3024
      %v3057 = vpack.c.b16 %v3025, %v3025
      %v3058 = vpack.c.b16 %v3026, %v3026
      %v3059 = vpack.c.b16 %v3027, %v3027
      %v3060 = vpack.c.b16 %v3028, %v3028
      %v3061 = vpack.c.b16 %v3029, %v3029
      %v3062 = vpack.c.b16 %v3030, %v3030
      %v3063 = vpack.c.b16 %v3031, %v3031
      %v3064 = vpack.c.b16 %v3032, %v3032
      %v3065 = vpack.c.b16 %v3033, %v3033
      %v3066 = vpack.c.b16 %v3034, %v3034
      %v3067 = vpack.c.b16 %v3035, %v3035
      %v3068 = vpack.c.b16 %v3036, %v3036
      %v3069 = vpack.c.b16 %v3037, %v3037
      %v3070 = vpack.c.b16 %v3038, %v3038
      %v3071 = vpack.c.b16 %v3039, %v3039
      %v3072 = vpack.c.b16 %v3040, %v3040
      %v3073 = vpack.c.b16 %v3041, %v3041
      %v3075 = vshrl.u32 %v3042, 16
      %v3077 = vrot.slane %v3075, 7
      %v3078 = vshll.u32 %v3042, 16
      %v3080 = vor.u32 %v3077, %v3078
      %v3081 = vrot.slane %v3077, 4
      %v3083 = vshrl.u32 %v3043, 16
      %v3085 = vrot.slane %v3083, 7
      %v3086 = vshll.u32 %v3043, 16
      %v3088 = vor.u32 %v3085, %v3086
      %v3089 = vsel %vm314, %v3081, %v3088
      %v3090 = vrot.slane %v3085, 4
      %v3092 = vshrl.u32 %v3044, 16
      %v3094 = vrot.slane %v3092, 7
      %v3095 = vshll.u32 %v3044, 16
      %v3097 = vor.u32 %v3094, %v3095
      %v3098 = vrot.slane %v3094, 4
      %v3100 = vshrl.u32 %v3045, 16
      %v3102 = vrot.slane %v3100, 7
      %v3103 = vshll.u32 %v3045, 16
      %v3105 = vor.u32 %v3102, %v3103
      %v3106 = vsel %vm314, %v3098, %v3105
      %v3107 = vrot.slane %v3102, 4
      %v3109 = vshrl.u32 %v3046, 16
      %v3111 = vrot.slane %v3109, 7
      %v3112 = vshll.u32 %v3046, 16
      %v3114 = vor.u32 %v3111, %v3112
      %v3115 = vrot.slane %v3111, 4
      %v3117 = vshrl.u32 %v3047, 16
      %v3119 = vrot.slane %v3117, 7
      %v3120 = vshll.u32 %v3047, 16
      %v3122 = vor.u32 %v3119, %v3120
      %v3123 = vsel %vm314, %v3115, %v3122
      %v3124 = vrot.slane %v3119, 4
      %v3126 = vshrl.u32 %v3048, 16
      %v3128 = vrot.slane %v3126, 7
      %v3129 = vshll.u32 %v3048, 16
      %v3131 = vor.u32 %v3128, %v3129
      %v3132 = vrot.slane %v3128, 4
      %v3134 = vshrl.u32 %v3049, 16
      %v3136 = vrot.slane %v3134, 7
      %v3137 = vshll.u32 %v3049, 16
      %v3139 = vor.u32 %v3136, %v3137
      %v3140 = vsel %vm314, %v3132, %v3139
      %v3141 = vrot.slane %v3136, 4
      %v3143 = vshrl.u32 %v3050, 16
      %v3145 = vrot.slane %v3143, 7
      %v3146 = vshll.u32 %v3050, 16
      %v3148 = vor.u32 %v3145, %v3146
      %v3149 = vrot.slane %v3145, 4
      %v3151 = vshrl.u32 %v3051, 16
      %v3153 = vrot.slane %v3151, 7
      %v3154 = vshll.u32 %v3051, 16
      %v3156 = vor.u32 %v3153, %v3154
      %v3157 = vsel %vm314, %v3149, %v3156
      %v3158 = vrot.slane %v3153, 4
      %v3160 = vshrl.u32 %v3052, 16
      %v3162 = vrot.slane %v3160, 7
      %v3163 = vshll.u32 %v3052, 16
      %v3165 = vor.u32 %v3162, %v3163
      %v3166 = vrot.slane %v3162, 4
      %v3168 = vshrl.u32 %v3053, 16
      %v3170 = vrot.slane %v3168, 7
      %v3171 = vshll.u32 %v3053, 16
      %v3173 = vor.u32 %v3170, %v3171
      %v3174 = vsel %vm314, %v3166, %v3173
      %v3175 = vrot.slane %v3170, 4
      %v3177 = vshrl.u32 %v3054, 16
      %v3179 = vrot.slane %v3177, 7
      %v3180 = vshll.u32 %v3054, 16
      %v3182 = vor.u32 %v3179, %v3180
      %v3183 = vrot.slane %v3179, 4
      %v3185 = vshrl.u32 %v3055, 16
      %v3187 = vrot.slane %v3185, 7
      %v3188 = vshll.u32 %v3055, 16
      %v3190 = vor.u32 %v3187, %v3188
      %v3191 = vsel %vm314, %v3183, %v3190
      %v3192 = vrot.slane %v3187, 4
      %v3194 = vshrl.u32 %v3056, 16
      %v3196 = vrot.slane %v3194, 7
      %v3197 = vshll.u32 %v3056, 16
      %v3199 = vor.u32 %v3196, %v3197
      %v3200 = vrot.slane %v3196, 4
      %v3202 = vshrl.u32 %v3057, 16
      %v3204 = vrot.slane %v3202, 7
      %v3205 = vshll.u32 %v3057, 16
      %v3207 = vor.u32 %v3204, %v3205
      %v3208 = vsel %vm314, %v3200, %v3207
      %v3209 = vrot.slane %v3204, 4
      %v3211 = vshrl.u32 %v3058, 16
      %v3213 = vrot.slane %v3211, 7
      %v3214 = vshll.u32 %v3058, 16
      %v3216 = vor.u32 %v3213, %v3214
      %v3217 = vrot.slane %v3213, 4
      %v3219 = vshrl.u32 %v3059, 16
      %v3221 = vrot.slane %v3219, 7
      %v3222 = vshll.u32 %v3059, 16
      %v3224 = vor.u32 %v3221, %v3222
      %v3225 = vsel %vm314, %v3217, %v3224
      %v3226 = vrot.slane %v3221, 4
      %v3228 = vshrl.u32 %v3060, 16
      %v3230 = vrot.slane %v3228, 7
      %v3231 = vshll.u32 %v3060, 16
      %v3233 = vor.u32 %v3230, %v3231
      %v3234 = vrot.slane %v3230, 4
      %v3236 = vshrl.u32 %v3061, 16
      %v3238 = vrot.slane %v3236, 7
      %v3239 = vshll.u32 %v3061, 16
      %v3241 = vor.u32 %v3238, %v3239
      %v3242 = vsel %vm314, %v3234, %v3241
      %v3243 = vrot.slane %v3238, 4
      %v3245 = vshrl.u32 %v3062, 16
      %v3247 = vrot.slane %v3245, 7
      %v3248 = vshll.u32 %v3062, 16
      %v3250 = vor.u32 %v3247, %v3248
      %v3251 = vrot.slane %v3247, 4
      %v3253 = vshrl.u32 %v3063, 16
      %v3255 = vrot.slane %v3253, 7
      %v3256 = vshll.u32 %v3063, 16
      %v3258 = vor.u32 %v3255, %v3256
      %v3259 = vsel %vm314, %v3251, %v3258
      %v3260 = vrot.slane %v3255, 4
      %v3262 = vshrl.u32 %v3064, 16
      %v3264 = vrot.slane %v3262, 7
      %v3265 = vshll.u32 %v3064, 16
      %v3267 = vor.u32 %v3264, %v3265
      %v3268 = vrot.slane %v3264, 4
      %v3270 = vshrl.u32 %v3065, 16
      %v3272 = vrot.slane %v3270, 7
      %v3273 = vshll.u32 %v3065, 16
      %v3275 = vor.u32 %v3272, %v3273
      %v3276 = vsel %vm314, %v3268, %v3275
      %v3277 = vrot.slane %v3272, 4
      %v3279 = vshrl.u32 %v3066, 16
      %v3281 = vrot.slane %v3279, 7
      %v3282 = vshll.u32 %v3066, 16
      %v3284 = vor.u32 %v3281, %v3282
      %v3285 = vrot.slane %v3281, 4
      %v3287 = vshrl.u32 %v3067, 16
      %v3289 = vrot.slane %v3287, 7
      %v3290 = vshll.u32 %v3067, 16
      %v3292 = vor.u32 %v3289, %v3290
      %v3293 = vsel %vm314, %v3285, %v3292
      %v3294 = vrot.slane %v3289, 4
      %v3296 = vshrl.u32 %v3068, 16
      %v3298 = vrot.slane %v3296, 7
      %v3299 = vshll.u32 %v3068, 16
      %v3301 = vor.u32 %v3298, %v3299
      %v3302 = vrot.slane %v3298, 4
      %v3304 = vshrl.u32 %v3069, 16
      %v3306 = vrot.slane %v3304, 7
      %v3307 = vshll.u32 %v3069, 16
      %v3309 = vor.u32 %v3306, %v3307
      %v3310 = vsel %vm314, %v3302, %v3309
      %v3311 = vrot.slane %v3306, 4
      %v3313 = vshrl.u32 %v3070, 16
      %v3315 = vrot.slane %v3313, 7
      %v3316 = vshll.u32 %v3070, 16
      %v3318 = vor.u32 %v3315, %v3316
      %v3319 = vrot.slane %v3315, 4
      %v3321 = vshrl.u32 %v3071, 16
      %v3323 = vrot.slane %v3321, 7
      %v3324 = vshll.u32 %v3071, 16
      %v3326 = vor.u32 %v3323, %v3324
      %v3327 = vsel %vm314, %v3319, %v3326
      %v3328 = vrot.slane %v3323, 4
      %v3330 = vshrl.u32 %v3072, 16
      %v3332 = vrot.slane %v3330, 7
      %v3333 = vshll.u32 %v3072, 16
      %v3335 = vor.u32 %v3332, %v3333
      %v3336 = vrot.slane %v3332, 4
      %v3338 = vshrl.u32 %v3073, 16
      %v3340 = vrot.slane %v3338, 7
      %v3341 = vshll.u32 %v3073, 16
      %v3343 = vor.u32 %v3340, %v3341
      %v3344 = vsel %vm314, %v3336, %v3343
      %v3345 = vrot.slane %v3340, 4
      %s3394 = scalar_lea.vmem [#allocation3], 12
      %v3395 = vld [vmem:[%s3394] sm:$0xf]
      %v3396 = vsel %vm638, %v3080, %v3395
      %3397 = vst [vmem:[%s3394] sm:$0xf] %v3396
      %3398 = vst [vmem:[%s3394 + $0x4] sm:$0xf] %v3089
      %v3399 = vld [vmem:[%s3394 + $0x8] sm:$0x1]
      %v3400 = vsel %vm644, %v3090, %v3399
      %3401 = vst [vmem:[%s3394 + $0x8] sm:$0x1] %v3400
      %v3402 = vld [vmem:[%s3394 + $0xc] sm:$0xf]
      %v3403 = vsel %vm638, %v3097, %v3402
      %3404 = vst [vmem:[%s3394 + $0xc] sm:$0xf] %v3403
      %3405 = vst [vmem:[%s3394 + $0x10] sm:$0xf] %v3106
      %v3406 = vld [vmem:[%s3394 + $0x14] sm:$0x1]
      %v3407 = vsel %vm644, %v3107, %v3406
      %3408 = vst [vmem:[%s3394 + $0x14] sm:$0x1] %v3407
      %v3409 = vld [vmem:[%s3394 + $0x18] sm:$0xf]
      %v3410 = vsel %vm638, %v3114, %v3409
      %3411 = vst [vmem:[%s3394 + $0x18] sm:$0xf] %v3410
      %3412 = vst [vmem:[%s3394 + $0x1c] sm:$0xf] %v3123
      %v3413 = vld [vmem:[%s3394 + $0x20] sm:$0x1]
      %v3414 = vsel %vm644, %v3124, %v3413
      %3415 = vst [vmem:[%s3394 + $0x20] sm:$0x1] %v3414
      %v3416 = vld [vmem:[%s3394 + $0x24] sm:$0xf]
      %v3417 = vsel %vm638, %v3131, %v3416
      %3418 = vst [vmem:[%s3394 + $0x24] sm:$0xf] %v3417
      %3419 = vst [vmem:[%s3394 + $0x28] sm:$0xf] %v3140
      %v3420 = vld [vmem:[%s3394 + $0x2c] sm:$0x1]
      %v3421 = vsel %vm644, %v3141, %v3420
      %3422 = vst [vmem:[%s3394 + $0x2c] sm:$0x1] %v3421
      %v3423 = vld [vmem:[%s3394 + $0x30] sm:$0xf]
      %v3424 = vsel %vm638, %v3148, %v3423
      %3425 = vst [vmem:[%s3394 + $0x30] sm:$0xf] %v3424
      %3426 = vst [vmem:[%s3394 + $0x34] sm:$0xf] %v3157
      %v3427 = vld [vmem:[%s3394 + $0x38] sm:$0x1]
      %v3428 = vsel %vm644, %v3158, %v3427
      %3429 = vst [vmem:[%s3394 + $0x38] sm:$0x1] %v3428
      %v3430 = vld [vmem:[%s3394 + $0x3c] sm:$0xf]
      %v3431 = vsel %vm638, %v3165, %v3430
      %3432 = vst [vmem:[%s3394 + $0x3c] sm:$0xf] %v3431
      %3433 = vst [vmem:[%s3394 + $0x40] sm:$0xf] %v3174
      %v3434 = vld [vmem:[%s3394 + $0x44] sm:$0x1]
      %v3435 = vsel %vm644, %v3175, %v3434
      %3436 = vst [vmem:[%s3394 + $0x44] sm:$0x1] %v3435
      %v3437 = vld [vmem:[%s3394 + $0x48] sm:$0xf]
      %v3438 = vsel %vm638, %v3182, %v3437
      %3439 = vst [vmem:[%s3394 + $0x48] sm:$0xf] %v3438
      %3440 = vst [vmem:[%s3394 + $0x4c] sm:$0xf] %v3191
      %v3441 = vld [vmem:[%s3394 + $0x50] sm:$0x1]
      %v3442 = vsel %vm644, %v3192, %v3441
      %3443 = vst [vmem:[%s3394 + $0x50] sm:$0x1] %v3442
      %v3444 = vld [vmem:[%s3394 + $0x54] sm:$0xf]
      %v3445 = vsel %vm638, %v3199, %v3444
      %3446 = vst [vmem:[%s3394 + $0x54] sm:$0xf] %v3445
      %3447 = vst [vmem:[%s3394 + $0x58] sm:$0xf] %v3208
      %v3448 = vld [vmem:[%s3394 + $0x5c] sm:$0x1]
      %v3449 = vsel %vm644, %v3209, %v3448
      %3450 = vst [vmem:[%s3394 + $0x5c] sm:$0x1] %v3449
      %v3451 = vld [vmem:[%s3394 + $0x60] sm:$0xf]
      %v3452 = vsel %vm638, %v3216, %v3451
      %3453 = vst [vmem:[%s3394 + $0x60] sm:$0xf] %v3452
      %3454 = vst [vmem:[%s3394 + $0x64] sm:$0xf] %v3225
      %v3455 = vld [vmem:[%s3394 + $0x68] sm:$0x1]
      %v3456 = vsel %vm644, %v3226, %v3455
      %3457 = vst [vmem:[%s3394 + $0x68] sm:$0x1] %v3456
      %v3458 = vld [vmem:[%s3394 + $0x6c] sm:$0xf]
      %v3459 = vsel %vm638, %v3233, %v3458
      %3460 = vst [vmem:[%s3394 + $0x6c] sm:$0xf] %v3459
      %3461 = vst [vmem:[%s3394 + $0x70] sm:$0xf] %v3242
      %v3462 = vld [vmem:[%s3394 + $0x74] sm:$0x1]
      %v3463 = vsel %vm644, %v3243, %v3462
      %3464 = vst [vmem:[%s3394 + $0x74] sm:$0x1] %v3463
      %v3465 = vld [vmem:[%s3394 + $0x78] sm:$0xf]
      %v3466 = vsel %vm638, %v3250, %v3465
      %3467 = vst [vmem:[%s3394 + $0x78] sm:$0xf] %v3466
      %3468 = vst [vmem:[%s3394 + $0x7c] sm:$0xf] %v3259
      %v3469 = vld [vmem:[%s3394 + $0x80] sm:$0x1]
      %v3470 = vsel %vm644, %v3260, %v3469
      %3471 = vst [vmem:[%s3394 + $0x80] sm:$0x1] %v3470
      %v3472 = vld [vmem:[%s3394 + $0x84] sm:$0xf]
      %v3473 = vsel %vm638, %v3267, %v3472
      %3474 = vst [vmem:[%s3394 + $0x84] sm:$0xf] %v3473
      %3475 = vst [vmem:[%s3394 + $0x88] sm:$0xf] %v3276
      %v3476 = vld [vmem:[%s3394 + $0x8c] sm:$0x1]
      %v3477 = vsel %vm644, %v3277, %v3476
      %3478 = vst [vmem:[%s3394 + $0x8c] sm:$0x1] %v3477
      %v3479 = vld [vmem:[%s3394 + $0x90] sm:$0xf]
      %v3480 = vsel %vm638, %v3284, %v3479
      %3481 = vst [vmem:[%s3394 + $0x90] sm:$0xf] %v3480
      %3482 = vst [vmem:[%s3394 + $0x94] sm:$0xf] %v3293
      %v3483 = vld [vmem:[%s3394 + $0x98] sm:$0x1]
      %v3484 = vsel %vm644, %v3294, %v3483
      %3485 = vst [vmem:[%s3394 + $0x98] sm:$0x1] %v3484
      %v3486 = vld [vmem:[%s3394 + $0x9c] sm:$0xf]
      %v3487 = vsel %vm638, %v3301, %v3486
      %3488 = vst [vmem:[%s3394 + $0x9c] sm:$0xf] %v3487
      %3489 = vst [vmem:[%s3394 + $0xa0] sm:$0xf] %v3310
      %v3490 = vld [vmem:[%s3394 + $0xa4] sm:$0x1]
      %v3491 = vsel %vm644, %v3311, %v3490
      %3492 = vst [vmem:[%s3394 + $0xa4] sm:$0x1] %v3491
      %v3493 = vld [vmem:[%s3394 + $0xa8] sm:$0xf]
      %v3494 = vsel %vm638, %v3318, %v3493
      %3495 = vst [vmem:[%s3394 + $0xa8] sm:$0xf] %v3494
      %3496 = vst [vmem:[%s3394 + $0xac] sm:$0xf] %v3327
      %v3497 = vld [vmem:[%s3394 + $0xb0] sm:$0x1]
      %v3498 = vsel %vm644, %v3328, %v3497
      %3499 = vst [vmem:[%s3394 + $0xb0] sm:$0x1] %v3498
      %v3500 = vld [vmem:[%s3394 + $0xb4] sm:$0xf]
      %v3501 = vsel %vm638, %v3335, %v3500
      %3502 = vst [vmem:[%s3394 + $0xb4] sm:$0xf] %v3501
      %3503 = vst [vmem:[%s3394 + $0xb8] sm:$0xf] %v3344
      %v3504 = vld [vmem:[%s3394 + $0xbc] sm:$0x1]
      %v3505 = vsel %vm644, %v3345, %v3504
      %3506 = vst [vmem:[%s3394 + $0xbc] sm:$0x1] %v3505
      %v3507 = vunpack.c.l.bf16 %v226
      %v3508 = vunpack.c.l.bf16 %v227
      %v3509 = vunpack.c.l.bf16 %v228
      %v3510 = vunpack.c.l.bf16 %v229
      %v3511 = vunpack.c.l.bf16 %v230
      %v3512 = vunpack.c.l.bf16 %v231
      %v3513 = vunpack.c.l.bf16 %v232
      %v3514 = vunpack.c.l.bf16 %v233
      %v3515 = vunpack.c.l.bf16 %v234
      %v3516 = vunpack.c.l.bf16 %v235
      %v3517 = vunpack.c.l.bf16 %v236
      %v3518 = vunpack.c.l.bf16 %v237
      %v3519 = vunpack.c.l.bf16 %v238
      %v3520 = vunpack.c.l.bf16 %v239
      %v3521 = vunpack.c.l.bf16 %v240
      %v3522 = vunpack.c.l.bf16 %v241
      %v3523 = vunpack.c.l.bf16 %v242
      %v3524 = vunpack.c.l.bf16 %v243
      %v3525 = vunpack.c.l.bf16 %v244
      %v3526 = vunpack.c.l.bf16 %v245
      %v3527 = vunpack.c.l.bf16 %v246
      %v3528 = vunpack.c.l.bf16 %v247
      %v3529 = vunpack.c.l.bf16 %v248
      %v3530 = vunpack.c.l.bf16 %v249
      %v3531 = vunpack.c.l.bf16 %v250
      %v3532 = vunpack.c.l.bf16 %v251
      %v3533 = vunpack.c.l.bf16 %v252
      %v3534 = vunpack.c.l.bf16 %v253
      %v3535 = vunpack.c.l.bf16 %v254
      %v3536 = vunpack.c.l.bf16 %v255
      %v3537 = vunpack.c.l.bf16 %v256
      %v3538 = vunpack.c.l.bf16 %v257
      %v3539 = vld [vmem:[#allocation3] sm:$0xf]
      %v3540 = vld [vmem:[#allocation3 + $0x4] sm:$0xf]
      %v3541 = vld [vmem:[#allocation3 + $0x8] sm:$0x1]
      %v3542 = vld [vmem:[#allocation3 + $0xc] sm:$0xf]
      %v3543 = vld [vmem:[#allocation3 + $0x10] sm:$0xf]
      %v3544 = vld [vmem:[#allocation3 + $0x14] sm:$0x1]
      %v3545 = vld [vmem:[#allocation3 + $0x18] sm:$0xf]
      %v3546 = vld [vmem:[#allocation3 + $0x1c] sm:$0xf]
      %v3547 = vld [vmem:[#allocation3 + $0x20] sm:$0x1]
      %v3548 = vld [vmem:[#allocation3 + $0x24] sm:$0xf]
      %v3549 = vld [vmem:[#allocation3 + $0x28] sm:$0xf]
      %v3550 = vld [vmem:[#allocation3 + $0x2c] sm:$0x1]
      %v3551 = vld [vmem:[#allocation3 + $0x30] sm:$0xf]
      %v3552 = vld [vmem:[#allocation3 + $0x34] sm:$0xf]
      %v3553 = vld [vmem:[#allocation3 + $0x38] sm:$0x1]
      %v3554 = vld [vmem:[#allocation3 + $0x3c] sm:$0xf]
      %v3555 = vld [vmem:[#allocation3 + $0x40] sm:$0xf]
      %v3556 = vld [vmem:[#allocation3 + $0x44] sm:$0x1]
      %v3557 = vld [vmem:[#allocation3 + $0x48] sm:$0xf]
      %v3558 = vld [vmem:[#allocation3 + $0x4c] sm:$0xf]
      %v3559 = vld [vmem:[#allocation3 + $0x50] sm:$0x1]
      %v3560 = vld [vmem:[#allocation3 + $0x54] sm:$0xf]
      %v3561 = vld [vmem:[#allocation3 + $0x58] sm:$0xf]
      %v3562 = vld [vmem:[#allocation3 + $0x5c] sm:$0x1]
      %v3563 = vld [vmem:[#allocation3 + $0x60] sm:$0xf]
      %v3564 = vld [vmem:[#allocation3 + $0x64] sm:$0xf]
      %v3565 = vld [vmem:[#allocation3 + $0x68] sm:$0x1]
      %v3566 = vld [vmem:[#allocation3 + $0x6c] sm:$0xf]
      %v3567 = vld [vmem:[#allocation3 + $0x70] sm:$0xf]
      %v3568 = vld [vmem:[#allocation3 + $0x74] sm:$0x1]
      %v3569 = vld [vmem:[#allocation3 + $0x78] sm:$0xf]
      %v3570 = vld [vmem:[#allocation3 + $0x7c] sm:$0xf]
      %v3571 = vld [vmem:[#allocation3 + $0x80] sm:$0x1]
      %v3572 = vld [vmem:[#allocation3 + $0x84] sm:$0xf]
      %v3573 = vld [vmem:[#allocation3 + $0x88] sm:$0xf]
      %v3574 = vld [vmem:[#allocation3 + $0x8c] sm:$0x1]
      %v3575 = vld [vmem:[#allocation3 + $0x90] sm:$0xf]
      %v3576 = vld [vmem:[#allocation3 + $0x94] sm:$0xf]
      %v3577 = vld [vmem:[#allocation3 + $0x98] sm:$0x1]
      %v3578 = vld [vmem:[#allocation3 + $0x9c] sm:$0xf]
      %v3579 = vld [vmem:[#allocation3 + $0xa0] sm:$0xf]
      %v3580 = vld [vmem:[#allocation3 + $0xa4] sm:$0x1]
      %v3581 = vld [vmem:[#allocation3 + $0xa8] sm:$0xf]
      %v3582 = vld [vmem:[#allocation3 + $0xac] sm:$0xf]
      %v3583 = vld [vmem:[#allocation3 + $0xb0] sm:$0x1]
      %v3584 = vld [vmem:[#allocation3 + $0xb4] sm:$0xf]
      %v3585 = vld [vmem:[#allocation3 + $0xb8] sm:$0xf]
      %v3586 = vld [vmem:[#allocation3 + $0xbc] sm:$0x1]
      %v3587 = vld [vmem:[#allocation3 + $0xc0] sm:$0xf]
      %v3588 = vld [vmem:[#allocation3 + $0xc4] sm:$0xf]
      %v3589 = vld [vmem:[#allocation3 + $0xc8] sm:$0x1]
      %v3590 = vld [vmem:[#allocation3 + $0xcc] sm:$0xf]
      %v3591 = vld [vmem:[#allocation3 + $0xd0] sm:$0xf]
      %v3592 = vld [vmem:[#allocation3 + $0xd4] sm:$0x1]
      %v3593 = vld [vmem:[%s4] sm:$0x1]
      %v3630 = vunpack.c.l.b16 %v3539
      %v3631 = vunpack.c.l.b16 %v3540
      %v3632 = vunpack.c.l.b16 %v3542
      %v3633 = vunpack.c.l.b16 %v3543
      %v3634 = vunpack.c.l.b16 %v3545
      %v3635 = vunpack.c.l.b16 %v3546
      %v3636 = vunpack.c.l.b16 %v3548
      %v3637 = vunpack.c.l.b16 %v3549
      %v3638 = vunpack.c.l.b16 %v3551
      %v3639 = vunpack.c.l.b16 %v3552
      %v3640 = vunpack.c.l.b16 %v3554
      %v3641 = vunpack.c.l.b16 %v3555
      %v3642 = vunpack.c.l.b16 %v3557
      %v3643 = vunpack.c.l.b16 %v3558
      %v3644 = vunpack.c.l.b16 %v3560
      %v3645 = vunpack.c.l.b16 %v3561
      %v3646 = vunpack.c.l.b16 %v3563
      %v3647 = vunpack.c.l.b16 %v3564
      %v3648 = vunpack.c.l.b16 %v3566
      %v3649 = vunpack.c.l.b16 %v3567
      %v3650 = vunpack.c.l.b16 %v3569
      %v3651 = vunpack.c.l.b16 %v3570
      %v3652 = vunpack.c.l.b16 %v3572
      %v3653 = vunpack.c.l.b16 %v3573
      %v3654 = vunpack.c.l.b16 %v3575
      %v3655 = vunpack.c.l.b16 %v3576
      %v3656 = vunpack.c.l.b16 %v3578
      %v3657 = vunpack.c.l.b16 %v3579
      %v3658 = vunpack.c.l.b16 %v3581
      %v3659 = vunpack.c.l.b16 %v3582
      %v3660 = vunpack.c.l.b16 %v3584
      %v3661 = vunpack.c.l.b16 %v3585
      %v3662 = vunpack.c.l.b16 %v3587
      %v3663 = vunpack.c.l.b16 %v3588
      %v3664 = vunpack.c.l.b16 %v3590
      %v3665 = vunpack.c.l.b16 %v3591
      %v3666 = vpack.c.b16 %v3631, %v3630
      %v3667 = vpack.c.b16 %v3633, %v3632
      %v3668 = vpack.c.b16 %v3635, %v3634
      %v3669 = vpack.c.b16 %v3637, %v3636
      %v3670 = vpack.c.b16 %v3639, %v3638
      %v3671 = vpack.c.b16 %v3641, %v3640
      %v3672 = vpack.c.b16 %v3643, %v3642
      %v3673 = vpack.c.b16 %v3645, %v3644
      %v3674 = vpack.c.b16 %v3647, %v3646
      %v3675 = vpack.c.b16 %v3649, %v3648
      %v3676 = vpack.c.b16 %v3651, %v3650
      %v3677 = vpack.c.b16 %v3653, %v3652
      %v3678 = vpack.c.b16 %v3655, %v3654
      %v3679 = vpack.c.b16 %v3657, %v3656
      %v3680 = vpack.c.b16 %v3659, %v3658
      %v3681 = vpack.c.b16 %v3661, %v3660
      %v3682 = vpack.c.b16 %v3663, %v3662
      %v3683 = vpack.c.b16 %v3665, %v3664
      %v3720 = vunpack.c.l.b16 %v3541
      %v3721 = vunpack.c.l.b16 %v3544
      %v3722 = vunpack.c.l.b16 %v3547
      %v3723 = vunpack.c.l.b16 %v3550
      %v3724 = vunpack.c.l.b16 %v3553
      %v3725 = vunpack.c.l.b16 %v3556
      %v3726 = vunpack.c.l.b16 %v3559
      %v3727 = vunpack.c.l.b16 %v3562
      %v3728 = vunpack.c.l.b16 %v3565
      %v3729 = vunpack.c.l.b16 %v3568
      %v3730 = vunpack.c.l.b16 %v3571
      %v3731 = vunpack.c.l.b16 %v3574
      %v3732 = vunpack.c.l.b16 %v3577
      %v3733 = vunpack.c.l.b16 %v3580
      %v3734 = vunpack.c.l.b16 %v3583
      %v3735 = vunpack.c.l.b16 %v3586
      %v3736 = vunpack.c.l.b16 %v3589
      %v3737 = vunpack.c.l.b16 %v3592
      %v3738 = vpack.c.b16 %v3720, %v3720
      %v3739 = vpack.c.b16 %v3721, %v3721
      %v3740 = vpack.c.b16 %v3722, %v3722
      %v3741 = vpack.c.b16 %v3723, %v3723
      %v3742 = vpack.c.b16 %v3724, %v3724
      %v3743 = vpack.c.b16 %v3725, %v3725
      %v3744 = vpack.c.b16 %v3726, %v3726
      %v3745 = vpack.c.b16 %v3727, %v3727
      %v3746 = vpack.c.b16 %v3728, %v3728
      %v3747 = vpack.c.b16 %v3729, %v3729
      %v3748 = vpack.c.b16 %v3730, %v3730
      %v3749 = vpack.c.b16 %v3731, %v3731
      %v3750 = vpack.c.b16 %v3732, %v3732
      %v3751 = vpack.c.b16 %v3733, %v3733
      %v3752 = vpack.c.b16 %v3734, %v3734
      %v3753 = vpack.c.b16 %v3735, %v3735
      %v3754 = vpack.c.b16 %v3736, %v3736
      %v3755 = vpack.c.b16 %v3737, %v3737
      %v3757 = vshrl.u32 %v3666, 16
      %v3759 = vshll.u32 %v3666, 16
      %v3761 = vrot.slane %v3759, 1
      %v3762 = vor.u32 %v3757, %v3761
      %v3764 = vshll.u32 %v3738, 16
      %v3766 = vrot.slane %v3764, 1
      %v3767 = vsel %vm970, %v3762, %v3766
      %v3769 = vshrl.u32 %v3667, 16
      %v3771 = vshll.u32 %v3667, 16
      %v3773 = vrot.slane %v3771, 1
      %v3774 = vor.u32 %v3769, %v3773
      %v3776 = vshll.u32 %v3739, 16
      %v3778 = vrot.slane %v3776, 1
      %v3779 = vsel %vm970, %v3774, %v3778
      %v3781 = vshrl.u32 %v3668, 16
      %v3783 = vshll.u32 %v3668, 16
      %v3785 = vrot.slane %v3783, 1
      %v3786 = vor.u32 %v3781, %v3785
      %v3788 = vshll.u32 %v3740, 16
      %v3790 = vrot.slane %v3788, 1
      %v3791 = vsel %vm970, %v3786, %v3790
      %v3793 = vshrl.u32 %v3669, 16
      %v3795 = vshll.u32 %v3669, 16
      %v3797 = vrot.slane %v3795, 1
      %v3798 = vor.u32 %v3793, %v3797
      %v3800 = vshll.u32 %v3741, 16
      %v3802 = vrot.slane %v3800, 1
      %v3803 = vsel %vm970, %v3798, %v3802
      %v3805 = vshrl.u32 %v3670, 16
      %v3807 = vshll.u32 %v3670, 16
      %v3809 = vrot.slane %v3807, 1
      %v3810 = vor.u32 %v3805, %v3809
      %v3812 = vshll.u32 %v3742, 16
      %v3814 = vrot.slane %v3812, 1
      %v3815 = vsel %vm970, %v3810, %v3814
      %v3817 = vshrl.u32 %v3671, 16
      %v3819 = vshll.u32 %v3671, 16
      %v3821 = vrot.slane %v3819, 1
      %v3822 = vor.u32 %v3817, %v3821
      %v3824 = vshll.u32 %v3743, 16
      %v3826 = vrot.slane %v3824, 1
      %v3827 = vsel %vm970, %v3822, %v3826
      %v3829 = vshrl.u32 %v3672, 16
      %v3831 = vshll.u32 %v3672, 16
      %v3833 = vrot.slane %v3831, 1
      %v3834 = vor.u32 %v3829, %v3833
      %v3836 = vshll.u32 %v3744, 16
      %v3838 = vrot.slane %v3836, 1
      %v3839 = vsel %vm970, %v3834, %v3838
      %v3841 = vshrl.u32 %v3673, 16
      %v3843 = vshll.u32 %v3673, 16
      %v3845 = vrot.slane %v3843, 1
      %v3846 = vor.u32 %v3841, %v3845
      %v3848 = vshll.u32 %v3745, 16
      %v3850 = vrot.slane %v3848, 1
      %v3851 = vsel %vm970, %v3846, %v3850
      %v3853 = vshrl.u32 %v3674, 16
      %v3855 = vshll.u32 %v3674, 16
      %v3857 = vrot.slane %v3855, 1
      %v3858 = vor.u32 %v3853, %v3857
      %v3860 = vshll.u32 %v3746, 16
      %v3862 = vrot.slane %v3860, 1
      %v3863 = vsel %vm970, %v3858, %v3862
      %v3865 = vshrl.u32 %v3675, 16
      %v3867 = vshll.u32 %v3675, 16
      %v3869 = vrot.slane %v3867, 1
      %v3870 = vor.u32 %v3865, %v3869
      %v3872 = vshll.u32 %v3747, 16
      %v3874 = vrot.slane %v3872, 1
      %v3875 = vsel %vm970, %v3870, %v3874
      %v3877 = vshrl.u32 %v3676, 16
      %v3879 = vshll.u32 %v3676, 16
      %v3881 = vrot.slane %v3879, 1
      %v3882 = vor.u32 %v3877, %v3881
      %v3884 = vshll.u32 %v3748, 16
      %v3886 = vrot.slane %v3884, 1
      %v3887 = vsel %vm970, %v3882, %v3886
      %v3889 = vshrl.u32 %v3677, 16
      %v3891 = vshll.u32 %v3677, 16
      %v3893 = vrot.slane %v3891, 1
      %v3894 = vor.u32 %v3889, %v3893
      %v3896 = vshll.u32 %v3749, 16
      %v3898 = vrot.slane %v3896, 1
      %v3899 = vsel %vm970, %v3894, %v3898
      %v3901 = vshrl.u32 %v3678, 16
      %v3903 = vshll.u32 %v3678, 16
      %v3905 = vrot.slane %v3903, 1
      %v3906 = vor.u32 %v3901, %v3905
      %v3908 = vshll.u32 %v3750, 16
      %v3910 = vrot.slane %v3908, 1
      %v3911 = vsel %vm970, %v3906, %v3910
      %v3913 = vshrl.u32 %v3679, 16
      %v3915 = vshll.u32 %v3679, 16
      %v3917 = vrot.slane %v3915, 1
      %v3918 = vor.u32 %v3913, %v3917
      %v3920 = vshll.u32 %v3751, 16
      %v3922 = vrot.slane %v3920, 1
      %v3923 = vsel %vm970, %v3918, %v3922
      %v3925 = vshrl.u32 %v3680, 16
      %v3927 = vshll.u32 %v3680, 16
      %v3929 = vrot.slane %v3927, 1
      %v3930 = vor.u32 %v3925, %v3929
      %v3932 = vshll.u32 %v3752, 16
      %v3934 = vrot.slane %v3932, 1
      %v3935 = vsel %vm970, %v3930, %v3934
      %v3937 = vshrl.u32 %v3681, 16
      %v3939 = vshll.u32 %v3681, 16
      %v3941 = vrot.slane %v3939, 1
      %v3942 = vor.u32 %v3937, %v3941
      %v3944 = vshll.u32 %v3753, 16
      %v3946 = vrot.slane %v3944, 1
      %v3947 = vsel %vm970, %v3942, %v3946
      %v3949 = vshrl.u32 %v3682, 16
      %v3951 = vshll.u32 %v3682, 16
      %v3953 = vrot.slane %v3951, 1
      %v3954 = vor.u32 %v3949, %v3953
      %v3956 = vshll.u32 %v3754, 16
      %v3958 = vrot.slane %v3956, 1
      %v3959 = vsel %vm970, %v3954, %v3958
      %v3961 = vshrl.u32 %v3683, 16
      %v3963 = vshll.u32 %v3683, 16
      %v3965 = vrot.slane %v3963, 1
      %v3966 = vor.u32 %v3961, %v3965
      %v3968 = vshll.u32 %v3755, 16
      %v3970 = vrot.slane %v3968, 1
      %v3971 = vsel %vm970, %v3966, %v3970
      %v3990 = vrot.slane %v3666, 1
      %v3991 = vrot.slane %v3738, 1
      %v3992 = vsel %vm1205, %v3990, %v3991
      %v3993 = vrot.slane %v3667, 1
      %v3994 = vrot.slane %v3739, 1
      %v3995 = vsel %vm1205, %v3993, %v3994
      %v3996 = vrot.slane %v3668, 1
      %v3997 = vrot.slane %v3740, 1
      %v3998 = vsel %vm1205, %v3996, %v3997
      %v3999 = vrot.slane %v3669, 1
      %v4000 = vrot.slane %v3741, 1
      %v4001 = vsel %vm1205, %v3999, %v4000
      %v4002 = vrot.slane %v3670, 1
      %v4003 = vrot.slane %v3742, 1
      %v4004 = vsel %vm1205, %v4002, %v4003
      %v4005 = vrot.slane %v3671, 1
      %v4006 = vrot.slane %v3743, 1
      %v4007 = vsel %vm1205, %v4005, %v4006
      %v4008 = vrot.slane %v3672, 1
      %v4009 = vrot.slane %v3744, 1
      %v4010 = vsel %vm1205, %v4008, %v4009
      %v4011 = vrot.slane %v3673, 1
      %v4012 = vrot.slane %v3745, 1
      %v4013 = vsel %vm1205, %v4011, %v4012
      %v4014 = vrot.slane %v3674, 1
      %v4015 = vrot.slane %v3746, 1
      %v4016 = vsel %vm1205, %v4014, %v4015
      %v4017 = vrot.slane %v3675, 1
      %v4018 = vrot.slane %v3747, 1
      %v4019 = vsel %vm1205, %v4017, %v4018
      %v4020 = vrot.slane %v3676, 1
      %v4021 = vrot.slane %v3748, 1
      %v4022 = vsel %vm1205, %v4020, %v4021
      %v4023 = vrot.slane %v3677, 1
      %v4024 = vrot.slane %v3749, 1
      %v4025 = vsel %vm1205, %v4023, %v4024
      %v4026 = vrot.slane %v3678, 1
      %v4027 = vrot.slane %v3750, 1
      %v4028 = vsel %vm1205, %v4026, %v4027
      %v4029 = vrot.slane %v3679, 1
      %v4030 = vrot.slane %v3751, 1
      %v4031 = vsel %vm1205, %v4029, %v4030
      %v4032 = vrot.slane %v3680, 1
      %v4033 = vrot.slane %v3752, 1
      %v4034 = vsel %vm1205, %v4032, %v4033
      %v4035 = vrot.slane %v3681, 1
      %v4036 = vrot.slane %v3753, 1
      %v4037 = vsel %vm1205, %v4035, %v4036
      %v4038 = vrot.slane %v3682, 1
      %v4039 = vrot.slane %v3754, 1
      %v4040 = vsel %vm1205, %v4038, %v4039
      %v4041 = vrot.slane %v3683, 1
      %v4042 = vrot.slane %v3755, 1
      %v4043 = vsel %vm1205, %v4041, %v4042
      %v4062 = vld [vmem:[%s3] sm:$0xf]
      %v4063 = vld [vmem:[%s3 + $0x4] sm:$0xf]
      %v4064 = vld [vmem:[%s3 + $0x8] sm:$0xf]
      %v4065 = vld [vmem:[%s3 + $0xc] sm:$0xf]
      %v4066 = vld [vmem:[%s3 + $0x10] sm:$0xf]
      %v4067 = vld [vmem:[%s3 + $0x14] sm:$0xf]
      %v4068 = vld [vmem:[%s3 + $0x18] sm:$0xf]
      %v4069 = vld [vmem:[%s3 + $0x1c] sm:$0xf]
      %v4070 = vld [vmem:[%s3 + $0x20] sm:$0xf]
      %v4071 = vld [vmem:[%s3 + $0x24] sm:$0xf]
      %v4072 = vld [vmem:[%s3 + $0x28] sm:$0xf]
      %v4073 = vld [vmem:[%s3 + $0x2c] sm:$0xf]
      %v4074 = vld [vmem:[%s3 + $0x30] sm:$0xf]
      %v4075 = vld [vmem:[%s3 + $0x34] sm:$0xf]
      %v4076 = vld [vmem:[%s3 + $0x38] sm:$0xf]
      %v4077 = vld [vmem:[%s3 + $0x3c] sm:$0xf]
      %v4078 = vld [vmem:[%s3 + $0x40] sm:$0xf]
      %v4079 = vld [vmem:[%s3 + $0x44] sm:$0xf]
      %v4080 = vld [vmem:[%s3 + $0x48] sm:$0xf]
      %v4081 = vld [vmem:[%s3 + $0x4c] sm:$0xf]
      %v4082 = vld [vmem:[%s3 + $0x50] sm:$0xf]
      %v4083 = vld [vmem:[%s3 + $0x54] sm:$0xf]
      %v4084 = vld [vmem:[%s3 + $0x58] sm:$0xf]
      %v4085 = vld [vmem:[%s3 + $0x5c] sm:$0xf]
      %v4086 = vld [vmem:[%s3 + $0x60] sm:$0xf]
      %v4087 = vld [vmem:[%s3 + $0x64] sm:$0xf]
      %v4088 = vld [vmem:[%s3 + $0x68] sm:$0xf]
      %v4089 = vld [vmem:[%s3 + $0x6c] sm:$0xf]
      %v4090 = vld [vmem:[%s3 + $0x70] sm:$0xf]
      %v4091 = vld [vmem:[%s3 + $0x74] sm:$0xf]
      %v4092 = vld [vmem:[%s3 + $0x78] sm:$0xf]
      %v4093 = vld [vmem:[%s3 + $0x7c] sm:$0xf]
      %v4094 = vld [vmem:[%s3 + $0x80] sm:$0xf]
      %v4095 = vld [vmem:[%s3 + $0x84] sm:$0xf]
      %v4096 = vld [vmem:[%s3 + $0x88] sm:$0xf]
      %v4097 = vld [vmem:[%s3 + $0x8c] sm:$0xf]
      %v4098 = vld [vmem:[%s3 + $0x90] sm:$0xf]
      %v4099 = vld [vmem:[%s3 + $0x94] sm:$0xf]
      %v4100 = vld [vmem:[%s3 + $0x98] sm:$0xf]
      %v4101 = vld [vmem:[%s3 + $0x9c] sm:$0xf]
      %v4102 = vld [vmem:[%s3 + $0xa0] sm:$0xf]
      %v4103 = vld [vmem:[%s3 + $0xa4] sm:$0xf]
      %v4104 = vld [vmem:[%s3 + $0xa8] sm:$0xf]
      %v4105 = vld [vmem:[%s3 + $0xac] sm:$0xf]
      %v4106 = vld [vmem:[%s3 + $0xb0] sm:$0xf]
      %v4107 = vld [vmem:[%s3 + $0xb4] sm:$0xf]
      %v4108 = vld [vmem:[%s3 + $0xb8] sm:$0xf]
      %v4109 = vld [vmem:[%s3 + $0xbc] sm:$0xf]
      %s4110 = scalar_lea.vmem %s3, 192
      %v4111 = vld [vmem:[%s4110] sm:$0xf]
      %v4112 = vld [vmem:[%s4110 + $0x4] sm:$0xf]
      %v4113 = vld [vmem:[%s4110 + $0x8] sm:$0xf]
      %v4114 = vld [vmem:[%s4110 + $0xc] sm:$0xf]
      %v4115 = vld [vmem:[%s4110 + $0x10] sm:$0xf]
      %v4116 = vld [vmem:[%s4110 + $0x14] sm:$0xf]
      %v4117 = vld [vmem:[%s4110 + $0x18] sm:$0xf]
      %v4118 = vld [vmem:[%s4110 + $0x1c] sm:$0xf]
      %v4119 = vld [vmem:[%s4110 + $0x20] sm:$0xf]
      %v4120 = vld [vmem:[%s4110 + $0x24] sm:$0xf]
      %v4121 = vld [vmem:[%s4110 + $0x28] sm:$0xf]
      %v4122 = vld [vmem:[%s4110 + $0x2c] sm:$0xf]
      %v4123 = vld [vmem:[%s4110 + $0x30] sm:$0xf]
      %v4124 = vld [vmem:[%s4110 + $0x34] sm:$0xf]
      %v4125 = vld [vmem:[%s4110 + $0x38] sm:$0xf]
      %v4126 = vld [vmem:[%s4110 + $0x3c] sm:$0xf]
      %v4127 = vld [vmem:[%s4110 + $0x40] sm:$0xf]
      %v4128 = vld [vmem:[%s4110 + $0x44] sm:$0xf]
      %v4129 = vld [vmem:[%s4110 + $0x48] sm:$0xf]
      %v4130 = vld [vmem:[%s4110 + $0x4c] sm:$0xf]
      %v4131 = vld [vmem:[%s4110 + $0x50] sm:$0xf]
      %v4132 = vld [vmem:[%s4110 + $0x54] sm:$0xf]
      %v4133 = vld [vmem:[%s4110 + $0x58] sm:$0xf]
      %v4134 = vld [vmem:[%s4110 + $0x5c] sm:$0xf]
      %v4135 = vld [vmem:[%s4110 + $0x60] sm:$0xf]
      %v4136 = vld [vmem:[%s4110 + $0x64] sm:$0xf]
      %v4137 = vld [vmem:[%s4110 + $0x68] sm:$0xf]
      %v4138 = vld [vmem:[%s4110 + $0x6c] sm:$0xf]
      %v4139 = vld [vmem:[%s4110 + $0x70] sm:$0xf]
      %v4140 = vld [vmem:[%s4110 + $0x74] sm:$0xf]
      %v4141 = vld [vmem:[%s4110 + $0x78] sm:$0xf]
      %v4142 = vld [vmem:[%s4110 + $0x7c] sm:$0xf]
      %v4143 = vld [vmem:[%s4110 + $0x80] sm:$0xf]
      %v4144 = vld [vmem:[%s4110 + $0x84] sm:$0xf]
      %v4145 = vld [vmem:[%s4110 + $0x88] sm:$0xf]
      %v4146 = vld [vmem:[%s4110 + $0x8c] sm:$0xf]
      %v4147 = vld [vmem:[%s4110 + $0x90] sm:$0xf]
      %v4148 = vld [vmem:[%s4110 + $0x94] sm:$0xf]
      %v4149 = vld [vmem:[%s4110 + $0x98] sm:$0xf]
      %v4150 = vld [vmem:[%s4110 + $0x9c] sm:$0xf]
      %v4151 = vld [vmem:[%s4110 + $0xa0] sm:$0xf]
      %v4152 = vld [vmem:[%s4110 + $0xa4] sm:$0xf]
      %v4153 = vld [vmem:[%s4110 + $0xa8] sm:$0xf]
      %v4154 = vld [vmem:[%s4110 + $0xac] sm:$0xf]
      %v4155 = vld [vmem:[%s4110 + $0xb0] sm:$0xf]
      %v4156 = vld [vmem:[%s4110 + $0xb4] sm:$0xf]
      %v4157 = vld [vmem:[%s4110 + $0xb8] sm:$0xf]
      %v4158 = vld [vmem:[%s4110 + $0xbc] sm:$0xf]
      %v4207 = vunpack.c.l.b16 %v4111
      %v4208 = vunpack.c.l.b16 %v4112
      %v4209 = vunpack.c.l.b16 %v4113
      %v4210 = vunpack.c.l.b16 %v4114
      %v4211 = vunpack.c.l.b16 %v4115
      %v4212 = vunpack.c.l.b16 %v4116
      %v4213 = vunpack.c.l.b16 %v4117
      %v4214 = vunpack.c.l.b16 %v4118
      %v4215 = vunpack.c.l.b16 %v4119
      %v4216 = vunpack.c.l.b16 %v4120
      %v4217 = vunpack.c.l.b16 %v4121
      %v4218 = vunpack.c.l.b16 %v4122
      %v4219 = vunpack.c.l.b16 %v4123
      %v4220 = vunpack.c.l.b16 %v4124
      %v4221 = vunpack.c.l.b16 %v4125
      %v4222 = vunpack.c.l.b16 %v4126
      %v4223 = vunpack.c.l.b16 %v4127
      %v4224 = vunpack.c.l.b16 %v4128
      %v4225 = vunpack.c.l.b16 %v4129
      %v4226 = vunpack.c.l.b16 %v4130
      %v4227 = vunpack.c.l.b16 %v4131
      %v4228 = vunpack.c.l.b16 %v4132
      %v4229 = vunpack.c.l.b16 %v4133
      %v4230 = vunpack.c.l.b16 %v4134
      %v4231 = vunpack.c.l.b16 %v4135
      %v4232 = vunpack.c.l.b16 %v4136
      %v4233 = vunpack.c.l.b16 %v4137
      %v4234 = vunpack.c.l.b16 %v4138
      %v4235 = vunpack.c.l.b16 %v4139
      %v4236 = vunpack.c.l.b16 %v4140
      %v4237 = vunpack.c.l.b16 %v4141
      %v4238 = vunpack.c.l.b16 %v4142
      %v4239 = vunpack.c.l.b16 %v4143
      %v4240 = vunpack.c.l.b16 %v4144
      %v4241 = vunpack.c.l.b16 %v4145
      %v4242 = vunpack.c.l.b16 %v4146
      %v4243 = vunpack.c.l.b16 %v4147
      %v4244 = vunpack.c.l.b16 %v4148
      %v4245 = vunpack.c.l.b16 %v4149
      %v4246 = vunpack.c.l.b16 %v4150
      %v4247 = vunpack.c.l.b16 %v4151
      %v4248 = vunpack.c.l.b16 %v4152
      %v4249 = vunpack.c.l.b16 %v4153
      %v4250 = vunpack.c.l.b16 %v4154
      %v4251 = vunpack.c.l.b16 %v4155
      %v4252 = vunpack.c.l.b16 %v4156
      %v4253 = vunpack.c.l.b16 %v4157
      %v4254 = vunpack.c.l.b16 %v4158
      %v4255 = vpack.c.b16 %v4208, %v4207
      %v4256 = vpack.c.b16 %v4210, %v4209
      %v4257 = vpack.c.b16 %v4212, %v4211
      %v4258 = vpack.c.b16 %v4214, %v4213
      %v4259 = vpack.c.b16 %v4216, %v4215
      %v4260 = vpack.c.b16 %v4218, %v4217
      %v4261 = vpack.c.b16 %v4220, %v4219
      %v4262 = vpack.c.b16 %v4222, %v4221
      %v4263 = vpack.c.b16 %v4224, %v4223
      %v4264 = vpack.c.b16 %v4226, %v4225
      %v4265 = vpack.c.b16 %v4228, %v4227
      %v4266 = vpack.c.b16 %v4230, %v4229
      %v4267 = vpack.c.b16 %v4232, %v4231
      %v4268 = vpack.c.b16 %v4234, %v4233
      %v4269 = vpack.c.b16 %v4236, %v4235
      %v4270 = vpack.c.b16 %v4238, %v4237
      %v4271 = vpack.c.b16 %v4240, %v4239
      %v4272 = vpack.c.b16 %v4242, %v4241
      %v4273 = vpack.c.b16 %v4244, %v4243
      %v4274 = vpack.c.b16 %v4246, %v4245
      %v4275 = vpack.c.b16 %v4248, %v4247
      %v4276 = vpack.c.b16 %v4250, %v4249
      %v4277 = vpack.c.b16 %v4252, %v4251
      %v4278 = vpack.c.b16 %v4254, %v4253
      %4303 = vmatprep.subr.bf16.mxu0 0
      %4304 = vmatpush1.bf16.msra.mxu0 %v4255
      %4305 = vmatprep.subr.bf16.mxu0 0
      %4306 = vmatpush1.bf16.msra.mxu0 %v4256
      %4307 = vmatprep.subr.bf16.mxu0 0
      %4308 = vmatpush1.bf16.msra.mxu0 %v4257
      %4309 = vmatprep.subr.bf16.mxu0 0
      %4310 = vmatpush1.bf16.msra.mxu0 %v4258
      %4311 = vmatprep.subr.bf16.mxu0 0
      %4312 = vmatpush1.bf16.msra.mxu0 %v4259
      %4313 = vmatprep.subr.bf16.mxu0 0
      %4314 = vmatpush1.bf16.msra.mxu0 %v4260
      %4315 = vmatprep.subr.bf16.mxu0 0
      %4316 = vmatpush1.bf16.msra.mxu0 %v4261
      %4317 = vmatprep.subr.bf16.mxu0 0
      %4318 = vmatpush1.bf16.msra.mxu0 %v4262
      %4319 = vmatprep.subr.bf16.mxu0 0
      %4320 = vmatpush1.bf16.msra.mxu0 %v4263
      %4321 = vmatprep.subr.bf16.mxu0 0
      %4322 = vmatpush1.bf16.msra.mxu0 %v4264
      %4323 = vmatprep.subr.bf16.mxu0 0
      %4324 = vmatpush1.bf16.msra.mxu0 %v4265
      %4325 = vmatprep.subr.bf16.mxu0 0
      %4326 = vmatpush1.bf16.msra.mxu0 %v4266
      %4327 = vmatprep.subr.bf16.mxu0 0
      %4328 = vmatpush1.bf16.msra.mxu0 %v4267
      %4329 = vmatprep.subr.bf16.mxu0 0
      %4330 = vmatpush1.bf16.msra.mxu0 %v4268
      %4331 = vmatprep.subr.bf16.mxu0 0
      %4332 = vmatpush1.bf16.msra.mxu0 %v4269
      %4333 = vmatprep.subr.bf16.mxu0 0
      %4334 = vmatpush1.bf16.msra.mxu0 %v4270
      %4335 = vmatprep.mubr.bf16.mxu0 %v3779
      %4336 = vmatmul.mubr.bf16.gmra.mrb[0].mxu0 %v3667
      %v4337 = vpop.f32.mrb[0].mxu0
      %v4338 = vadd.f32 0.0, %v4337
      %v4339 = vpop.f32.mrb[0].mxu0
      %v4340 = vpop.f32.mrb[0].mxu0
      %v4341 = vadd.f32 0.0, %v4340
      %v4342 = vpop.f32.mrb[0].mxu0
      %4343 = vmatprep.mubr.bf16.mxu0 %v3791
      %4344 = vmatmul.mubr.bf16.gmra.mrb[0].mxu0 %v3668
      %v4345 = vpop.f32.mrb[0].mxu0
      %v4346 = vadd.f32 0.0, %v4345
      %v4347 = vpop.f32.mrb[0].mxu0
      %v4348 = vpop.f32.mrb[0].mxu0
      %v4349 = vadd.f32 0.0, %v4348
      %v4350 = vpop.f32.mrb[0].mxu0
      %4351 = vmatprep.mubr.bf16.mxu0 %v3803
      %4352 = vmatmul.mubr.bf16.gmra.mrb[0].mxu0 %v3669
      %v4353 = vpop.f32.mrb[0].mxu0
      %v4354 = vadd.f32 0.0, %v4353
      %v4355 = vpop.f32.mrb[0].mxu0
      %v4356 = vpop.f32.mrb[0].mxu0
      %v4357 = vadd.f32 0.0, %v4356
      %v4358 = vpop.f32.mrb[0].mxu0
      %4359 = vmatprep.mubr.bf16.mxu0 %v3815
      %4360 = vmatmul.mubr.bf16.gmra.mrb[0].mxu0 %v3670
      %v4361 = vpop.f32.mrb[0].mxu0
      %v4362 = vadd.f32 0.0, %v4361
      %v4363 = vpop.f32.mrb[0].mxu0
      %v4364 = vpop.f32.mrb[0].mxu0
      %v4365 = vadd.f32 0.0, %v4364
      %v4366 = vpop.f32.mrb[0].mxu0
      %4367 = vmatprep.mubr.bf16.mxu0 %v3827
      %4368 = vmatmul.mubr.bf16.gmra.mrb[0].mxu0 %v3671
      %v4369 = vpop.f32.mrb[0].mxu0
      %v4370 = vadd.f32 0.0, %v4369
      %v4371 = vpop.f32.mrb[0].mxu0
      %v4372 = vpop.f32.mrb[0].mxu0
      %v4373 = vadd.f32 0.0, %v4372
      %v4374 = vpop.f32.mrb[0].mxu0
      %4375 = vmatprep.mubr.bf16.mxu0 %v3839
      %4376 = vmatmul.mubr.bf16.gmra.mrb[0].mxu0 %v3672
      %v4377 = vpop.f32.mrb[0].mxu0
      %v4378 = vadd.f32 0.0, %v4377
      %v4379 = vpop.f32.mrb[0].mxu0
      %v4380 = vpop.f32.mrb[0].mxu0
      %v4381 = vadd.f32 0.0, %v4380
      %v4382 = vpop.f32.mrb[0].mxu0
      %4383 = vmatprep.mubr.bf16.mxu0 %v3851
      %4384 = vmatmul.mubr.bf16.gmra.mrb[0].mxu0 %v3673
      %v4385 = vpop.f32.mrb[0].mxu0
      %v4386 = vadd.f32 0.0, %v4385
      %v4387 = vpop.f32.mrb[0].mxu0
      %v4388 = vpop.f32.mrb[0].mxu0
      %v4389 = vadd.f32 0.0, %v4388
      %v4390 = vpop.f32.mrb[0].mxu0
      %4391 = vmatprep.mubr.bf16.mxu0 %v3863
      %4392 = vmatmul.mubr.bf16.gmra.mrb[0].mxu0 %v3674
      %v4393 = vpop.f32.mrb[0].mxu0
      %v4394 = vadd.f32 0.0, %v4393
      %v4395 = vpop.f32.mrb[0].mxu0
      %v4396 = vpop.f32.mrb[0].mxu0
      %v4397 = vadd.f32 0.0, %v4396
      %v4398 = vpop.f32.mrb[0].mxu0
      %4399 = vmatprep.mubr.bf16.mxu0 %v3875
      %4400 = vmatmul.mubr.bf16.gmra.mrb[0].mxu0 %v3675
      %v4401 = vpop.f32.mrb[0].mxu0
      %v4402 = vadd.f32 0.0, %v4401
      %v4403 = vpop.f32.mrb[0].mxu0
      %v4404 = vpop.f32.mrb[0].mxu0
      %v4405 = vadd.f32 0.0, %v4404
      %v4406 = vpop.f32.mrb[0].mxu0
      %4407 = vmatprep.mubr.bf16.mxu0 %v3887
      %4408 = vmatmul.mubr.bf16.gmra.mrb[0].mxu0 %v3676
      %v4409 = vpop.f32.mrb[0].mxu0
      %v4410 = vadd.f32 0.0, %v4409
      %v4411 = vpop.f32.mrb[0].mxu0
      %v4412 = vpop.f32.mrb[0].mxu0
      %v4413 = vadd.f32 0.0, %v4412
      %v4414 = vpop.f32.mrb[0].mxu0
      %4415 = vmatprep.mubr.bf16.mxu0 %v3899
      %4416 = vmatmul.mubr.bf16.gmra.mrb[0].mxu0 %v3677
      %v4417 = vpop.f32.mrb[0].mxu0
      %v4418 = vadd.f32 0.0, %v4417
      %v4419 = vpop.f32.mrb[0].mxu0
      %v4420 = vpop.f32.mrb[0].mxu0
      %v4421 = vadd.f32 0.0, %v4420
      %v4422 = vpop.f32.mrb[0].mxu0
      %4423 = vmatprep.mubr.bf16.mxu0 %v3911
      %4424 = vmatmul.mubr.bf16.gmra.mrb[0].mxu0 %v3678
      %v4425 = vpop.f32.mrb[0].mxu0
      %v4426 = vadd.f32 0.0, %v4425
      %v4427 = vpop.f32.mrb[0].mxu0
      %v4428 = vpop.f32.mrb[0].mxu0
      %v4429 = vadd.f32 0.0, %v4428
      %v4430 = vpop.f32.mrb[0].mxu0
      %4431 = vmatprep.mubr.bf16.mxu0 %v3923
      %4432 = vmatmul.mubr.bf16.gmra.mrb[0].mxu0 %v3679
      %v4433 = vpop.f32.mrb[0].mxu0
      %v4434 = vadd.f32 0.0, %v4433
      %v4435 = vpop.f32.mrb[0].mxu0
      %v4436 = vpop.f32.mrb[0].mxu0
      %v4437 = vadd.f32 0.0, %v4436
      %v4438 = vpop.f32.mrb[0].mxu0
      %4439 = vmatprep.mubr.bf16.mxu0 %v3935
      %4440 = vmatmul.mubr.bf16.gmra.mrb[0].mxu0 %v3680
      %v4441 = vpop.f32.mrb[0].mxu0
      %v4442 = vadd.f32 0.0, %v4441
      %v4443 = vpop.f32.mrb[0].mxu0
      %v4444 = vpop.f32.mrb[0].mxu0
      %v4445 = vadd.f32 0.0, %v4444
      %v4446 = vpop.f32.mrb[0].mxu0
      %4447 = vmatprep.mubr.bf16.mxu0 %v3947
      %4448 = vmatmul.mubr.bf16.gmra.mrb[0].mxu0 %v3681
      %v4449 = vpop.f32.mrb[0].mxu0
      %v4450 = vadd.f32 0.0, %v4449
      %v4451 = vpop.f32.mrb[0].mxu0
      %v4452 = vpop.f32.mrb[0].mxu0
      %v4453 = vadd.f32 0.0, %v4452
      %v4454 = vpop.f32.mrb[0].mxu0
      %4455 = vmatprep.mubr.bf16.mxu0 %v3959
      %4456 = vmatmul.mubr.bf16.gmra.mrb[0].mxu0 %v3682
      %v4457 = vpop.f32.mrb[0].mxu0
      %v4458 = vadd.f32 0.0, %v4457
      %v4459 = vpop.f32.mrb[0].mxu0
      %v4460 = vpop.f32.mrb[0].mxu0
      %v4461 = vadd.f32 0.0, %v4460
      %v4462 = vpop.f32.mrb[0].mxu0
      %4463 = vdwg.mxu0
      %4464 = vmatprep.subr.bf16.mxu0 0
      %4465 = vmatpush1.bf16.msra.mxu0 %v4271
      %4466 = vmatprep.subr.bf16.mxu0 0
      %4467 = vmatpush1.bf16.msra.mxu0 %v4272
      %4468 = vmatprep.subr.bf16.mxu0 0
      %4469 = vmatpush1.bf16.msra.mxu0 %v4273
      %4470 = vmatprep.subr.bf16.mxu0 0
      %4471 = vmatpush1.bf16.msra.mxu0 %v4274
      %4472 = vmatprep.subr.bf16.mxu0 0
      %4473 = vmatpush1.bf16.msra.mxu0 %v4275
      %4474 = vmatprep.subr.bf16.mxu0 0
      %4475 = vmatpush1.bf16.msra.mxu0 %v4276
      %4476 = vmatprep.subr.bf16.mxu0 0
      %4477 = vmatpush1.bf16.msra.mxu0 %v4277
      %4478 = vmatprep.subr.bf16.mxu0 0
      %4479 = vmatpush1.bf16.msra.mxu0 %v4278
      %4480 = vmatprep.subr.bf16.mxu0 0
      %4481 = vmatpush1.bf16.msra.mxu0 0
      %4482 = vmatprep.subr.bf16.mxu0 0
      %4483 = vmatpush1.bf16.msra.mxu0 0
      %4484 = vmatprep.subr.bf16.mxu0 0
      %4485 = vmatpush1.bf16.msra.mxu0 0
      %4486 = vmatprep.subr.bf16.mxu0 0
      %4487 = vmatpush1.bf16.msra.mxu0 0
      %4488 = vmatprep.subr.bf16.mxu0 0
      %4489 = vmatpush1.bf16.msra.mxu0 0
      %4490 = vmatprep.subr.bf16.mxu0 0
      %4491 = vmatpush1.bf16.msra.mxu0 0
      %4492 = vmatprep.subr.bf16.mxu0 0
      %4493 = vmatpush1.bf16.msra.mxu0 0
      %4494 = vmatprep.subr.bf16.mxu0 0
      %4495 = vmatpush1.bf16.msra.mxu0 0
      %4496 = vmatprep.mubr.bf16.mxu0 0
      %4497 = vmatmul.mubr.bf16.gmra.mrb[0].mxu0 %v3995
      %v4498 = vpop.f32.mrb[0].mxu0
      %v4499 = vadd.f32 %v4338, %v4498
      %v4500 = vpop.f32.mrb[0].mxu0
      %v4501 = vpop.f32.mrb[0].mxu0
      %v4502 = vadd.f32 %v4341, %v4501
      %v4503 = vpop.f32.mrb[0].mxu0
      %4504 = vmatprep.mubr.bf16.mxu0 0
      %4505 = vmatmul.mubr.bf16.gmra.mrb[0].mxu0 %v3998
      %v4506 = vpop.f32.mrb[0].mxu0
      %v4507 = vadd.f32 %v4346, %v4506
      %v4508 = vpop.f32.mrb[0].mxu0
      %v4509 = vpop.f32.mrb[0].mxu0
      %v4510 = vadd.f32 %v4349, %v4509
      %v4511 = vpop.f32.mrb[0].mxu0
      %4512 = vmatprep.mubr.bf16.mxu0 0
      %4513 = vmatmul.mubr.bf16.gmra.mrb[0].mxu0 %v4001
      %v4514 = vpop.f32.mrb[0].mxu0
      %v4515 = vadd.f32 %v4354, %v4514
      %v4516 = vpop.f32.mrb[0].mxu0
      %v4517 = vpop.f32.mrb[0].mxu0
      %v4518 = vadd.f32 %v4357, %v4517
      %v4519 = vpop.f32.mrb[0].mxu0
      %4520 = vmatprep.mubr.bf16.mxu0 0
      %4521 = vmatmul.mubr.bf16.gmra.mrb[0].mxu0 %v4004
      %v4522 = vpop.f32.mrb[0].mxu0
      %v4523 = vadd.f32 %v4362, %v4522
      %v4524 = vpop.f32.mrb[0].mxu0
      %v4525 = vpop.f32.mrb[0].mxu0
      %v4526 = vadd.f32 %v4365, %v4525
      %v4527 = vpop.f32.mrb[0].mxu0
      %4528 = vmatprep.mubr.bf16.mxu0 0
      %4529 = vmatmul.mubr.bf16.gmra.mrb[0].mxu0 %v4007
      %v4530 = vpop.f32.mrb[0].mxu0
      %v4531 = vadd.f32 %v4370, %v4530
      %v4532 = vpop.f32.mrb[0].mxu0
      %v4533 = vpop.f32.mrb[0].mxu0
      %v4534 = vadd.f32 %v4373, %v4533
      %v4535 = vpop.f32.mrb[0].mxu0
      %4536 = vmatprep.mubr.bf16.mxu0 0
      %4537 = vmatmul.mubr.bf16.gmra.mrb[0].mxu0 %v4010
      %v4538 = vpop.f32.mrb[0].mxu0
      %v4539 = vadd.f32 %v4378, %v4538
      %v4540 = vpop.f32.mrb[0].mxu0
      %v4541 = vpop.f32.mrb[0].mxu0
      %v4542 = vadd.f32 %v4381, %v4541
      %v4543 = vpop.f32.mrb[0].mxu0
      %4544 = vmatprep.mubr.bf16.mxu0 0
      %4545 = vmatmul.mubr.bf16.gmra.mrb[0].mxu0 %v4013
      %v4546 = vpop.f32.mrb[0].mxu0
      %v4547 = vadd.f32 %v4386, %v4546
      %v4548 = vpop.f32.mrb[0].mxu0
      %v4549 = vpop.f32.mrb[0].mxu0
      %v4550 = vadd.f32 %v4389, %v4549
      %v4551 = vpop.f32.mrb[0].mxu0
      %4552 = vmatprep.mubr.bf16.mxu0 0
      %4553 = vmatmul.mubr.bf16.gmra.mrb[0].mxu0 %v4016
      %v4554 = vpop.f32.mrb[0].mxu0
      %v4555 = vadd.f32 %v4394, %v4554
      %v4556 = vpop.f32.mrb[0].mxu0
      %v4557 = vpop.f32.mrb[0].mxu0
      %v4558 = vadd.f32 %v4397, %v4557
      %v4559 = vpop.f32.mrb[0].mxu0
      %4560 = vmatprep.mubr.bf16.mxu0 0
      %4561 = vmatmul.mubr.bf16.gmra.mrb[0].mxu0 %v4019
      %v4562 = vpop.f32.mrb[0].mxu0
      %v4563 = vadd.f32 %v4402, %v4562
      %v4564 = vpop.f32.mrb[0].mxu0
      %v4565 = vpop.f32.mrb[0].mxu0
      %v4566 = vadd.f32 %v4405, %v4565
      %v4567 = vpop.f32.mrb[0].mxu0
      %4568 = vmatprep.mubr.bf16.mxu0 0
      %4569 = vmatmul.mubr.bf16.gmra.mrb[0].mxu0 %v4022
      %v4570 = vpop.f32.mrb[0].mxu0
      %v4571 = vadd.f32 %v4410, %v4570
      %v4572 = vpop.f32.mrb[0].mxu0
      %v4573 = vpop.f32.mrb[0].mxu0
      %v4574 = vadd.f32 %v4413, %v4573
      %v4575 = vpop.f32.mrb[0].mxu0
      %4576 = vmatprep.mubr.bf16.mxu0 0
      %4577 = vmatmul.mubr.bf16.gmra.mrb[0].mxu0 %v4025
      %v4578 = vpop.f32.mrb[0].mxu0
      %v4579 = vadd.f32 %v4418, %v4578
      %v4580 = vpop.f32.mrb[0].mxu0
      %v4581 = vpop.f32.mrb[0].mxu0
      %v4582 = vadd.f32 %v4421, %v4581
      %v4583 = vpop.f32.mrb[0].mxu0
      %4584 = vmatprep.mubr.bf16.mxu0 0
      %4585 = vmatmul.mubr.bf16.gmra.mrb[0].mxu0 %v4028
      %v4586 = vpop.f32.mrb[0].mxu0
      %v4587 = vadd.f32 %v4426, %v4586
      %v4588 = vpop.f32.mrb[0].mxu0
      %v4589 = vpop.f32.mrb[0].mxu0
      %v4590 = vadd.f32 %v4429, %v4589
      %v4591 = vpop.f32.mrb[0].mxu0
      %4592 = vmatprep.mubr.bf16.mxu0 0
      %4593 = vmatmul.mubr.bf16.gmra.mrb[0].mxu0 %v4031
      %v4594 = vpop.f32.mrb[0].mxu0
      %v4595 = vadd.f32 %v4434, %v4594
      %v4596 = vpop.f32.mrb[0].mxu0
      %v4597 = vpop.f32.mrb[0].mxu0
      %v4598 = vadd.f32 %v4437, %v4597
      %v4599 = vpop.f32.mrb[0].mxu0
      %4600 = vmatprep.mubr.bf16.mxu0 0
      %4601 = vmatmul.mubr.bf16.gmra.mrb[0].mxu0 %v4034
      %v4602 = vpop.f32.mrb[0].mxu0
      %v4603 = vadd.f32 %v4442, %v4602
      %v4604 = vpop.f32.mrb[0].mxu0
      %v4605 = vpop.f32.mrb[0].mxu0
      %v4606 = vadd.f32 %v4445, %v4605
      %v4607 = vpop.f32.mrb[0].mxu0
      %4608 = vmatprep.mubr.bf16.mxu0 0
      %4609 = vmatmul.mubr.bf16.gmra.mrb[0].mxu0 %v4037
      %v4610 = vpop.f32.mrb[0].mxu0
      %v4611 = vadd.f32 %v4450, %v4610
      %v4612 = vpop.f32.mrb[0].mxu0
      %v4613 = vpop.f32.mrb[0].mxu0
      %v4614 = vadd.f32 %v4453, %v4613
      %v4615 = vpop.f32.mrb[0].mxu0
      %4616 = vmatprep.mubr.bf16.mxu0 0
      %4617 = vmatmul.mubr.bf16.gmra.mrb[0].mxu0 %v4040
      %v4618 = vpop.f32.mrb[0].mxu0
      %v4619 = vadd.f32 %v4458, %v4618
      %v4620 = vpop.f32.mrb[0].mxu0
      %v4621 = vpop.f32.mrb[0].mxu0
      %v4622 = vadd.f32 %v4461, %v4621
      %v4623 = vpop.f32.mrb[0].mxu0
      %4624 = vdwg.mxu0
      %v4673 = vunpack.c.l.b16 %v4062
      %v4674 = vunpack.c.l.b16 %v4063
      %v4675 = vunpack.c.l.b16 %v4064
      %v4676 = vunpack.c.l.b16 %v4065
      %v4677 = vunpack.c.l.b16 %v4066
      %v4678 = vunpack.c.l.b16 %v4067
      %v4679 = vunpack.c.l.b16 %v4068
      %v4680 = vunpack.c.l.b16 %v4069
      %v4681 = vunpack.c.l.b16 %v4070
      %v4682 = vunpack.c.l.b16 %v4071
      %v4683 = vunpack.c.l.b16 %v4072
      %v4684 = vunpack.c.l.b16 %v4073
      %v4685 = vunpack.c.l.b16 %v4074
      %v4686 = vunpack.c.l.b16 %v4075
      %v4687 = vunpack.c.l.b16 %v4076
      %v4688 = vunpack.c.l.b16 %v4077
      %v4689 = vunpack.c.l.b16 %v4078
      %v4690 = vunpack.c.l.b16 %v4079
      %v4691 = vunpack.c.l.b16 %v4080
      %v4692 = vunpack.c.l.b16 %v4081
      %v4693 = vunpack.c.l.b16 %v4082
      %v4694 = vunpack.c.l.b16 %v4083
      %v4695 = vunpack.c.l.b16 %v4084
      %v4696 = vunpack.c.l.b16 %v4085
      %v4697 = vunpack.c.l.b16 %v4086
      %v4698 = vunpack.c.l.b16 %v4087
      %v4699 = vunpack.c.l.b16 %v4088
      %v4700 = vunpack.c.l.b16 %v4089
      %v4701 = vunpack.c.l.b16 %v4090
      %v4702 = vunpack.c.l.b16 %v4091
      %v4703 = vunpack.c.l.b16 %v4092
      %v4704 = vunpack.c.l.b16 %v4093
      %v4705 = vunpack.c.l.b16 %v4094
      %v4706 = vunpack.c.l.b16 %v4095
      %v4707 = vunpack.c.l.b16 %v4096
      %v4708 = vunpack.c.l.b16 %v4097
      %v4709 = vunpack.c.l.b16 %v4098
      %v4710 = vunpack.c.l.b16 %v4099
      %v4711 = vunpack.c.l.b16 %v4100
      %v4712 = vunpack.c.l.b16 %v4101
      %v4713 = vunpack.c.l.b16 %v4102
      %v4714 = vunpack.c.l.b16 %v4103
      %v4715 = vunpack.c.l.b16 %v4104
      %v4716 = vunpack.c.l.b16 %v4105
      %v4717 = vunpack.c.l.b16 %v4106
      %v4718 = vunpack.c.l.b16 %v4107
      %v4719 = vunpack.c.l.b16 %v4108
      %v4720 = vunpack.c.l.b16 %v4109
      %v4721 = vpack.c.b16 %v4674, %v4673
      %v4722 = vpack.c.b16 %v4676, %v4675
      %v4723 = vpack.c.b16 %v4678, %v4677
      %v4724 = vpack.c.b16 %v4680, %v4679
      %v4725 = vpack.c.b16 %v4682, %v4681
      %v4726 = vpack.c.b16 %v4684, %v4683
      %v4727 = vpack.c.b16 %v4686, %v4685
      %v4728 = vpack.c.b16 %v4688, %v4687
      %v4729 = vpack.c.b16 %v4690, %v4689
      %v4730 = vpack.c.b16 %v4692, %v4691
      %v4731 = vpack.c.b16 %v4694, %v4693
      %v4732 = vpack.c.b16 %v4696, %v4695
      %v4733 = vpack.c.b16 %v4698, %v4697
      %v4734 = vpack.c.b16 %v4700, %v4699
      %v4735 = vpack.c.b16 %v4702, %v4701
      %v4736 = vpack.c.b16 %v4704, %v4703
      %v4737 = vpack.c.b16 %v4706, %v4705
      %v4738 = vpack.c.b16 %v4708, %v4707
      %v4739 = vpack.c.b16 %v4710, %v4709
      %v4740 = vpack.c.b16 %v4712, %v4711
      %v4741 = vpack.c.b16 %v4714, %v4713
      %v4742 = vpack.c.b16 %v4716, %v4715
      %v4743 = vpack.c.b16 %v4718, %v4717
      %v4744 = vpack.c.b16 %v4720, %v4719
      %4769 = vmatprep.subr.bf16.mxu0 0
      %4770 = vmatpush1.bf16.msra.mxu0 %v4721
      %4771 = vmatprep.subr.bf16.mxu0 0
      %4772 = vmatpush1.bf16.msra.mxu0 %v4722
      %4773 = vmatprep.subr.bf16.mxu0 0
      %4774 = vmatpush1.bf16.msra.mxu0 %v4723
      %4775 = vmatprep.subr.bf16.mxu0 0
      %4776 = vmatpush1.bf16.msra.mxu0 %v4724
      %4777 = vmatprep.subr.bf16.mxu0 0
      %4778 = vmatpush1.bf16.msra.mxu0 %v4725
      %4779 = vmatprep.subr.bf16.mxu0 0
      %4780 = vmatpush1.bf16.msra.mxu0 %v4726
      %4781 = vmatprep.subr.bf16.mxu0 0
      %4782 = vmatpush1.bf16.msra.mxu0 %v4727
      %4783 = vmatprep.subr.bf16.mxu0 0
      %4784 = vmatpush1.bf16.msra.mxu0 %v4728
      %4785 = vmatprep.subr.bf16.mxu0 0
      %4786 = vmatpush1.bf16.msra.mxu0 %v4729
      %4787 = vmatprep.subr.bf16.mxu0 0
      %4788 = vmatpush1.bf16.msra.mxu0 %v4730
      %4789 = vmatprep.subr.bf16.mxu0 0
      %4790 = vmatpush1.bf16.msra.mxu0 %v4731
      %4791 = vmatprep.subr.bf16.mxu0 0
      %4792 = vmatpush1.bf16.msra.mxu0 %v4732
      %4793 = vmatprep.subr.bf16.mxu0 0
      %4794 = vmatpush1.bf16.msra.mxu0 %v4733
      %4795 = vmatprep.subr.bf16.mxu0 0
      %4796 = vmatpush1.bf16.msra.mxu0 %v4734
      %4797 = vmatprep.subr.bf16.mxu0 0
      %4798 = vmatpush1.bf16.msra.mxu0 %v4735
      %4799 = vmatprep.subr.bf16.mxu0 0
      %4800 = vmatpush1.bf16.msra.mxu0 %v4736
      %4801 = vmatprep.mubr.bf16.mxu0 %v3767
      %4802 = vmatmul.mubr.bf16.gmra.mrb[0].mxu0 %v3666
      %v4803 = vpop.f32.mrb[0].mxu0
      %v4804 = vadd.f32 %v4499, %v4803
      %v4805 = vpop.f32.mrb[0].mxu0
      %v4806 = vpop.f32.mrb[0].mxu0
      %v4807 = vadd.f32 %v4502, %v4806
      %v4808 = vpop.f32.mrb[0].mxu0
      %4809 = vmatprep.mubr.bf16.mxu0 %v3779
      %4810 = vmatmul.mubr.bf16.gmra.mrb[0].mxu0 %v3667
      %v4811 = vpop.f32.mrb[0].mxu0
      %v4812 = vadd.f32 %v4507, %v4811
      %v4813 = vpop.f32.mrb[0].mxu0
      %v4814 = vpop.f32.mrb[0].mxu0
      %v4815 = vadd.f32 %v4510, %v4814
      %v4816 = vpop.f32.mrb[0].mxu0
      %4817 = vmatprep.mubr.bf16.mxu0 %v3791
      %4818 = vmatmul.mubr.bf16.gmra.mrb[0].mxu0 %v3668
      %v4819 = vpop.f32.mrb[0].mxu0
      %v4820 = vadd.f32 %v4515, %v4819
      %v4821 = vpop.f32.mrb[0].mxu0
      %v4822 = vpop.f32.mrb[0].mxu0
      %v4823 = vadd.f32 %v4518, %v4822
      %v4824 = vpop.f32.mrb[0].mxu0
      %4825 = vmatprep.mubr.bf16.mxu0 %v3803
      %4826 = vmatmul.mubr.bf16.gmra.mrb[0].mxu0 %v3669
      %v4827 = vpop.f32.mrb[0].mxu0
      %v4828 = vadd.f32 %v4523, %v4827
      %v4829 = vpop.f32.mrb[0].mxu0
      %v4830 = vpop.f32.mrb[0].mxu0
      %v4831 = vadd.f32 %v4526, %v4830
      %v4832 = vpop.f32.mrb[0].mxu0
      %4833 = vmatprep.mubr.bf16.mxu0 %v3815
      %4834 = vmatmul.mubr.bf16.gmra.mrb[0].mxu0 %v3670
      %v4835 = vpop.f32.mrb[0].mxu0
      %v4836 = vadd.f32 %v4531, %v4835
      %v4837 = vpop.f32.mrb[0].mxu0
      %v4838 = vpop.f32.mrb[0].mxu0
      %v4839 = vadd.f32 %v4534, %v4838
      %v4840 = vpop.f32.mrb[0].mxu0
      %4841 = vmatprep.mubr.bf16.mxu0 %v3827
      %4842 = vmatmul.mubr.bf16.gmra.mrb[0].mxu0 %v3671
      %v4843 = vpop.f32.mrb[0].mxu0
      %v4844 = vadd.f32 %v4539, %v4843
      %v4845 = vpop.f32.mrb[0].mxu0
      %v4846 = vpop.f32.mrb[0].mxu0
      %v4847 = vadd.f32 %v4542, %v4846
      %v4848 = vpop.f32.mrb[0].mxu0
      %4849 = vmatprep.mubr.bf16.mxu0 %v3839
      %4850 = vmatmul.mubr.bf16.gmra.mrb[0].mxu0 %v3672
      %v4851 = vpop.f32.mrb[0].mxu0
      %v4852 = vadd.f32 %v4547, %v4851
      %v4853 = vpop.f32.mrb[0].mxu0
      %v4854 = vpop.f32.mrb[0].mxu0
      %v4855 = vadd.f32 %v4550, %v4854
      %v4856 = vpop.f32.mrb[0].mxu0
      %4857 = vmatprep.mubr.bf16.mxu0 %v3851
      %4858 = vmatmul.mubr.bf16.gmra.mrb[0].mxu0 %v3673
      %v4859 = vpop.f32.mrb[0].mxu0
      %v4860 = vadd.f32 %v4555, %v4859
      %v4861 = vpop.f32.mrb[0].mxu0
      %v4862 = vpop.f32.mrb[0].mxu0
      %v4863 = vadd.f32 %v4558, %v4862
      %v4864 = vpop.f32.mrb[0].mxu0
      %4865 = vmatprep.mubr.bf16.mxu0 %v3863
      %4866 = vmatmul.mubr.bf16.gmra.mrb[0].mxu0 %v3674
      %v4867 = vpop.f32.mrb[0].mxu0
      %v4868 = vadd.f32 %v4563, %v4867
      %v4869 = vpop.f32.mrb[0].mxu0
      %v4870 = vpop.f32.mrb[0].mxu0
      %v4871 = vadd.f32 %v4566, %v4870
      %v4872 = vpop.f32.mrb[0].mxu0
      %4873 = vmatprep.mubr.bf16.mxu0 %v3875
      %4874 = vmatmul.mubr.bf16.gmra.mrb[0].mxu0 %v3675
      %v4875 = vpop.f32.mrb[0].mxu0
      %v4876 = vadd.f32 %v4571, %v4875
      %v4877 = vpop.f32.mrb[0].mxu0
      %v4878 = vpop.f32.mrb[0].mxu0
      %v4879 = vadd.f32 %v4574, %v4878
      %v4880 = vpop.f32.mrb[0].mxu0
      %4881 = vmatprep.mubr.bf16.mxu0 %v3887
      %4882 = vmatmul.mubr.bf16.gmra.mrb[0].mxu0 %v3676
      %v4883 = vpop.f32.mrb[0].mxu0
      %v4884 = vadd.f32 %v4579, %v4883
      %v4885 = vpop.f32.mrb[0].mxu0
      %v4886 = vpop.f32.mrb[0].mxu0
      %v4887 = vadd.f32 %v4582, %v4886
      %v4888 = vpop.f32.mrb[0].mxu0
      %4889 = vmatprep.mubr.bf16.mxu0 %v3899
      %4890 = vmatmul.mubr.bf16.gmra.mrb[0].mxu0 %v3677
      %v4891 = vpop.f32.mrb[0].mxu0
      %v4892 = vadd.f32 %v4587, %v4891
      %v4893 = vpop.f32.mrb[0].mxu0
      %v4894 = vpop.f32.mrb[0].mxu0
      %v4895 = vadd.f32 %v4590, %v4894
      %v4896 = vpop.f32.mrb[0].mxu0
      %4897 = vmatprep.mubr.bf16.mxu0 %v3911
      %4898 = vmatmul.mubr.bf16.gmra.mrb[0].mxu0 %v3678
      %v4899 = vpop.f32.mrb[0].mxu0
      %v4900 = vadd.f32 %v4595, %v4899
      %v4901 = vpop.f32.mrb[0].mxu0
      %v4902 = vpop.f32.mrb[0].mxu0
      %v4903 = vadd.f32 %v4598, %v4902
      %v4904 = vpop.f32.mrb[0].mxu0
      %4905 = vmatprep.mubr.bf16.mxu0 %v3923
      %4906 = vmatmul.mubr.bf16.gmra.mrb[0].mxu0 %v3679
      %v4907 = vpop.f32.mrb[0].mxu0
      %v4908 = vadd.f32 %v4603, %v4907
      %v4909 = vpop.f32.mrb[0].mxu0
      %v4910 = vpop.f32.mrb[0].mxu0
      %v4911 = vadd.f32 %v4606, %v4910
      %v4912 = vpop.f32.mrb[0].mxu0
      %4913 = vmatprep.mubr.bf16.mxu0 %v3935
      %4914 = vmatmul.mubr.bf16.gmra.mrb[0].mxu0 %v3680
      %v4915 = vpop.f32.mrb[0].mxu0
      %v4916 = vadd.f32 %v4611, %v4915
      %v4917 = vpop.f32.mrb[0].mxu0
      %v4918 = vpop.f32.mrb[0].mxu0
      %v4919 = vadd.f32 %v4614, %v4918
      %v4920 = vpop.f32.mrb[0].mxu0
      %4921 = vmatprep.mubr.bf16.mxu0 %v3947
      %4922 = vmatmul.mubr.bf16.gmra.mrb[0].mxu0 %v3681
      %v4923 = vpop.f32.mrb[0].mxu0
      %v4924 = vadd.f32 %v4619, %v4923
      %v4925 = vpop.f32.mrb[0].mxu0
      %v4926 = vpop.f32.mrb[0].mxu0
      %v4927 = vadd.f32 %v4622, %v4926
      %v4928 = vpop.f32.mrb[0].mxu0
      %4929 = vdwg.mxu0
      %4930 = vmatprep.subr.bf16.mxu0 0
      %4931 = vmatpush1.bf16.msra.mxu0 %v4737
      %4932 = vmatprep.subr.bf16.mxu0 0
      %4933 = vmatpush1.bf16.msra.mxu0 %v4738
      %4934 = vmatprep.subr.bf16.mxu0 0
      %4935 = vmatpush1.bf16.msra.mxu0 %v4739
      %4936 = vmatprep.subr.bf16.mxu0 0
      %4937 = vmatpush1.bf16.msra.mxu0 %v4740
      %4938 = vmatprep.subr.bf16.mxu0 0
      %4939 = vmatpush1.bf16.msra.mxu0 %v4741
      %4940 = vmatprep.subr.bf16.mxu0 0
      %4941 = vmatpush1.bf16.msra.mxu0 %v4742
      %4942 = vmatprep.subr.bf16.mxu0 0
      %4943 = vmatpush1.bf16.msra.mxu0 %v4743
      %4944 = vmatprep.subr.bf16.mxu0 0
      %4945 = vmatpush1.bf16.msra.mxu0 %v4744
      %4946 = vmatprep.subr.bf16.mxu0 0
      %4947 = vmatpush1.bf16.msra.mxu0 0
      %4948 = vmatprep.subr.bf16.mxu0 0
      %4949 = vmatpush1.bf16.msra.mxu0 0
      %4950 = vmatprep.subr.bf16.mxu0 0
      %4951 = vmatpush1.bf16.msra.mxu0 0
      %4952 = vmatprep.subr.bf16.mxu0 0
      %4953 = vmatpush1.bf16.msra.mxu0 0
      %4954 = vmatprep.subr.bf16.mxu0 0
      %4955 = vmatpush1.bf16.msra.mxu0 0
      %4956 = vmatprep.subr.bf16.mxu0 0
      %4957 = vmatpush1.bf16.msra.mxu0 0
      %4958 = vmatprep.subr.bf16.mxu0 0
      %4959 = vmatpush1.bf16.msra.mxu0 0
      %4960 = vmatprep.subr.bf16.mxu0 0
      %4961 = vmatpush1.bf16.msra.mxu0 0
      %4962 = vmatprep.mubr.bf16.mxu0 0
      %4963 = vmatmul.mubr.bf16.gmra.mrb[0].mxu0 %v3992
      %v4964 = vpop.f32.mrb[0].mxu0
      %v4965 = vadd.f32 %v4804, %v4964
      %v4966 = vpop.f32.mrb[0].mxu0
      %v4967 = vpop.f32.mrb[0].mxu0
      %v4968 = vadd.f32 %v4807, %v4967
      %v4969 = vpop.f32.mrb[0].mxu0
      %4970 = vmatprep.mubr.bf16.mxu0 0
      %4971 = vmatmul.mubr.bf16.gmra.mrb[0].mxu0 %v3995
      %v4972 = vpop.f32.mrb[0].mxu0
      %v4973 = vadd.f32 %v4812, %v4972
      %v4974 = vpop.f32.mrb[0].mxu0
      %v4975 = vpop.f32.mrb[0].mxu0
      %v4976 = vadd.f32 %v4815, %v4975
      %v4977 = vpop.f32.mrb[0].mxu0
      %4978 = vmatprep.mubr.bf16.mxu0 0
      %4979 = vmatmul.mubr.bf16.gmra.mrb[0].mxu0 %v3998
      %v4980 = vpop.f32.mrb[0].mxu0
      %v4981 = vadd.f32 %v4820, %v4980
      %v4982 = vpop.f32.mrb[0].mxu0
      %v4983 = vpop.f32.mrb[0].mxu0
      %v4984 = vadd.f32 %v4823, %v4983
      %v4985 = vpop.f32.mrb[0].mxu0
      %4986 = vmatprep.mubr.bf16.mxu0 0
      %4987 = vmatmul.mubr.bf16.gmra.mrb[0].mxu0 %v4001
      %v4988 = vpop.f32.mrb[0].mxu0
      %v4989 = vadd.f32 %v4828, %v4988
      %v4990 = vpop.f32.mrb[0].mxu0
      %v4991 = vpop.f32.mrb[0].mxu0
      %v4992 = vadd.f32 %v4831, %v4991
      %v4993 = vpop.f32.mrb[0].mxu0
      %4994 = vmatprep.mubr.bf16.mxu0 0
      %4995 = vmatmul.mubr.bf16.gmra.mrb[0].mxu0 %v4004
      %v4996 = vpop.f32.mrb[0].mxu0
      %v4997 = vadd.f32 %v4836, %v4996
      %v4998 = vpop.f32.mrb[0].mxu0
      %v4999 = vpop.f32.mrb[0].mxu0
      %v5000 = vadd.f32 %v4839, %v4999
      %v5001 = vpop.f32.mrb[0].mxu0
      %5002 = vmatprep.mubr.bf16.mxu0 0
      %5003 = vmatmul.mubr.bf16.gmra.mrb[0].mxu0 %v4007
      %v5004 = vpop.f32.mrb[0].mxu0
      %v5005 = vadd.f32 %v4844, %v5004
      %v5006 = vpop.f32.mrb[0].mxu0
      %v5007 = vpop.f32.mrb[0].mxu0
      %v5008 = vadd.f32 %v4847, %v5007
      %v5009 = vpop.f32.mrb[0].mxu0
      %5010 = vmatprep.mubr.bf16.mxu0 0
      %5011 = vmatmul.mubr.bf16.gmra.mrb[0].mxu0 %v4010
      %v5012 = vpop.f32.mrb[0].mxu0
      %v5013 = vadd.f32 %v4852, %v5012
      %v5014 = vpop.f32.mrb[0].mxu0
      %v5015 = vpop.f32.mrb[0].mxu0
      %v5016 = vadd.f32 %v4855, %v5015
      %v5017 = vpop.f32.mrb[0].mxu0
      %5018 = vmatprep.mubr.bf16.mxu0 0
      %5019 = vmatmul.mubr.bf16.gmra.mrb[0].mxu0 %v4013
      %v5020 = vpop.f32.mrb[0].mxu0
      %v5021 = vadd.f32 %v4860, %v5020
      %v5022 = vpop.f32.mrb[0].mxu0
      %v5023 = vpop.f32.mrb[0].mxu0
      %v5024 = vadd.f32 %v4863, %v5023
      %v5025 = vpop.f32.mrb[0].mxu0
      %5026 = vmatprep.mubr.bf16.mxu0 0
      %5027 = vmatmul.mubr.bf16.gmra.mrb[0].mxu0 %v4016
      %v5028 = vpop.f32.mrb[0].mxu0
      %v5029 = vadd.f32 %v4868, %v5028
      %v5030 = vpop.f32.mrb[0].mxu0
      %v5031 = vpop.f32.mrb[0].mxu0
      %v5032 = vadd.f32 %v4871, %v5031
      %v5033 = vpop.f32.mrb[0].mxu0
      %5034 = vmatprep.mubr.bf16.mxu0 0
      %5035 = vmatmul.mubr.bf16.gmra.mrb[0].mxu0 %v4019
      %v5036 = vpop.f32.mrb[0].mxu0
      %v5037 = vadd.f32 %v4876, %v5036
      %v5038 = vpop.f32.mrb[0].mxu0
      %v5039 = vpop.f32.mrb[0].mxu0
      %v5040 = vadd.f32 %v4879, %v5039
      %v5041 = vpop.f32.mrb[0].mxu0
      %5042 = vmatprep.mubr.bf16.mxu0 0
      %5043 = vmatmul.mubr.bf16.gmra.mrb[0].mxu0 %v4022
      %v5044 = vpop.f32.mrb[0].mxu0
      %v5045 = vadd.f32 %v4884, %v5044
      %v5046 = vpop.f32.mrb[0].mxu0
      %v5047 = vpop.f32.mrb[0].mxu0
      %v5048 = vadd.f32 %v4887, %v5047
      %v5049 = vpop.f32.mrb[0].mxu0
      %5050 = vmatprep.mubr.bf16.mxu0 0
      %5051 = vmatmul.mubr.bf16.gmra.mrb[0].mxu0 %v4025
      %v5052 = vpop.f32.mrb[0].mxu0
      %v5053 = vadd.f32 %v4892, %v5052
      %v5054 = vpop.f32.mrb[0].mxu0
      %v5055 = vpop.f32.mrb[0].mxu0
      %v5056 = vadd.f32 %v4895, %v5055
      %v5057 = vpop.f32.mrb[0].mxu0
      %5058 = vmatprep.mubr.bf16.mxu0 0
      %5059 = vmatmul.mubr.bf16.gmra.mrb[0].mxu0 %v4028
      %v5060 = vpop.f32.mrb[0].mxu0
      %v5061 = vadd.f32 %v4900, %v5060
      %v5062 = vpop.f32.mrb[0].mxu0
      %v5063 = vpop.f32.mrb[0].mxu0
      %v5064 = vadd.f32 %v4903, %v5063
      %v5065 = vpop.f32.mrb[0].mxu0
      %5066 = vmatprep.mubr.bf16.mxu0 0
      %5067 = vmatmul.mubr.bf16.gmra.mrb[0].mxu0 %v4031
      %v5068 = vpop.f32.mrb[0].mxu0
      %v5069 = vadd.f32 %v4908, %v5068
      %v5070 = vpop.f32.mrb[0].mxu0
      %v5071 = vpop.f32.mrb[0].mxu0
      %v5072 = vadd.f32 %v4911, %v5071
      %v5073 = vpop.f32.mrb[0].mxu0
      %5074 = vmatprep.mubr.bf16.mxu0 0
      %5075 = vmatmul.mubr.bf16.gmra.mrb[0].mxu0 %v4034
      %v5076 = vpop.f32.mrb[0].mxu0
      %v5077 = vadd.f32 %v4916, %v5076
      %v5078 = vpop.f32.mrb[0].mxu0
      %v5079 = vpop.f32.mrb[0].mxu0
      %v5080 = vadd.f32 %v4919, %v5079
      %v5081 = vpop.f32.mrb[0].mxu0
      %5082 = vmatprep.mubr.bf16.mxu0 0
      %5083 = vmatmul.mubr.bf16.gmra.mrb[0].mxu0 %v4037
      %v5084 = vpop.f32.mrb[0].mxu0
      %v5085 = vadd.f32 %v4924, %v5084
      %v5086 = vpop.f32.mrb[0].mxu0
      %v5087 = vpop.f32.mrb[0].mxu0
      %v5088 = vadd.f32 %v4927, %v5087
      %v5089 = vpop.f32.mrb[0].mxu0
      %5090 = vdwg.mxu0
      %s5091 = scalar_lea.vmem %s3, 384
      %v5092 = vld [vmem:[%s5091] sm:$0xf]
      %v5093 = vld [vmem:[%s5091 + $0x4] sm:$0xf]
      %v5094 = vld [vmem:[%s5091 + $0x8] sm:$0xf]
      %v5095 = vld [vmem:[%s5091 + $0xc] sm:$0xf]
      %v5096 = vld [vmem:[%s5091 + $0x10] sm:$0xf]
      %v5097 = vld [vmem:[%s5091 + $0x14] sm:$0xf]
      %v5098 = vld [vmem:[%s5091 + $0x18] sm:$0xf]
      %v5099 = vld [vmem:[%s5091 + $0x1c] sm:$0xf]
      %v5100 = vld [vmem:[%s5091 + $0x20] sm:$0xf]
      %v5101 = vld [vmem:[%s5091 + $0x24] sm:$0xf]
      %v5102 = vld [vmem:[%s5091 + $0x28] sm:$0xf]
      %v5103 = vld [vmem:[%s5091 + $0x2c] sm:$0xf]
      %v5104 = vld [vmem:[%s5091 + $0x30] sm:$0xf]
      %v5105 = vld [vmem:[%s5091 + $0x34] sm:$0xf]
      %v5106 = vld [vmem:[%s5091 + $0x38] sm:$0xf]
      %v5107 = vld [vmem:[%s5091 + $0x3c] sm:$0xf]
      %v5108 = vld [vmem:[%s5091 + $0x40] sm:$0xf]
      %v5109 = vld [vmem:[%s5091 + $0x44] sm:$0xf]
      %v5110 = vld [vmem:[%s5091 + $0x48] sm:$0xf]
      %v5111 = vld [vmem:[%s5091 + $0x4c] sm:$0xf]
      %v5112 = vld [vmem:[%s5091 + $0x50] sm:$0xf]
      %v5113 = vld [vmem:[%s5091 + $0x54] sm:$0xf]
      %v5114 = vld [vmem:[%s5091 + $0x58] sm:$0xf]
      %v5115 = vld [vmem:[%s5091 + $0x5c] sm:$0xf]
      %v5116 = vld [vmem:[%s5091 + $0x60] sm:$0xf]
      %v5117 = vld [vmem:[%s5091 + $0x64] sm:$0xf]
      %v5118 = vld [vmem:[%s5091 + $0x68] sm:$0xf]
      %v5119 = vld [vmem:[%s5091 + $0x6c] sm:$0xf]
      %v5120 = vld [vmem:[%s5091 + $0x70] sm:$0xf]
      %v5121 = vld [vmem:[%s5091 + $0x74] sm:$0xf]
      %v5122 = vld [vmem:[%s5091 + $0x78] sm:$0xf]
      %v5123 = vld [vmem:[%s5091 + $0x7c] sm:$0xf]
      %v5124 = vld [vmem:[%s5091 + $0x80] sm:$0xf]
      %v5125 = vld [vmem:[%s5091 + $0x84] sm:$0xf]
      %v5126 = vld [vmem:[%s5091 + $0x88] sm:$0xf]
      %v5127 = vld [vmem:[%s5091 + $0x8c] sm:$0xf]
      %v5128 = vld [vmem:[%s5091 + $0x90] sm:$0xf]
      %v5129 = vld [vmem:[%s5091 + $0x94] sm:$0xf]
      %v5130 = vld [vmem:[%s5091 + $0x98] sm:$0xf]
      %v5131 = vld [vmem:[%s5091 + $0x9c] sm:$0xf]
      %v5132 = vld [vmem:[%s5091 + $0xa0] sm:$0xf]
      %v5133 = vld [vmem:[%s5091 + $0xa4] sm:$0xf]
      %v5134 = vld [vmem:[%s5091 + $0xa8] sm:$0xf]
      %v5135 = vld [vmem:[%s5091 + $0xac] sm:$0xf]
      %v5136 = vld [vmem:[%s5091 + $0xb0] sm:$0xf]
      %v5137 = vld [vmem:[%s5091 + $0xb4] sm:$0xf]
      %v5138 = vld [vmem:[%s5091 + $0xb8] sm:$0xf]
      %v5139 = vld [vmem:[%s5091 + $0xbc] sm:$0xf]
      %v5188 = vunpack.c.l.b16 %v5092
      %v5189 = vunpack.c.l.b16 %v5093
      %v5190 = vunpack.c.l.b16 %v5094
      %v5191 = vunpack.c.l.b16 %v5095
      %v5192 = vunpack.c.l.b16 %v5096
      %v5193 = vunpack.c.l.b16 %v5097
      %v5194 = vunpack.c.l.b16 %v5098
      %v5195 = vunpack.c.l.b16 %v5099
      %v5196 = vunpack.c.l.b16 %v5100
      %v5197 = vunpack.c.l.b16 %v5101
      %v5198 = vunpack.c.l.b16 %v5102
      %v5199 = vunpack.c.l.b16 %v5103
      %v5200 = vunpack.c.l.b16 %v5104
      %v5201 = vunpack.c.l.b16 %v5105
      %v5202 = vunpack.c.l.b16 %v5106
      %v5203 = vunpack.c.l.b16 %v5107
      %v5204 = vunpack.c.l.b16 %v5108
      %v5205 = vunpack.c.l.b16 %v5109
      %v5206 = vunpack.c.l.b16 %v5110
      %v5207 = vunpack.c.l.b16 %v5111
      %v5208 = vunpack.c.l.b16 %v5112
      %v5209 = vunpack.c.l.b16 %v5113
      %v5210 = vunpack.c.l.b16 %v5114
      %v5211 = vunpack.c.l.b16 %v5115
      %v5212 = vunpack.c.l.b16 %v5116
      %v5213 = vunpack.c.l.b16 %v5117
      %v5214 = vunpack.c.l.b16 %v5118
      %v5215 = vunpack.c.l.b16 %v5119
      %v5216 = vunpack.c.l.b16 %v5120
      %v5217 = vunpack.c.l.b16 %v5121
      %v5218 = vunpack.c.l.b16 %v5122
      %v5219 = vunpack.c.l.b16 %v5123
      %v5220 = vunpack.c.l.b16 %v5124
      %v5221 = vunpack.c.l.b16 %v5125
      %v5222 = vunpack.c.l.b16 %v5126
      %v5223 = vunpack.c.l.b16 %v5127
      %v5224 = vunpack.c.l.b16 %v5128
      %v5225 = vunpack.c.l.b16 %v5129
      %v5226 = vunpack.c.l.b16 %v5130
      %v5227 = vunpack.c.l.b16 %v5131
      %v5228 = vunpack.c.l.b16 %v5132
      %v5229 = vunpack.c.l.b16 %v5133
      %v5230 = vunpack.c.l.b16 %v5134
      %v5231 = vunpack.c.l.b16 %v5135
      %v5232 = vunpack.c.l.b16 %v5136
      %v5233 = vunpack.c.l.b16 %v5137
      %v5234 = vunpack.c.l.b16 %v5138
      %v5235 = vunpack.c.l.b16 %v5139
      %v5236 = vpack.c.b16 %v5189, %v5188
      %v5237 = vpack.c.b16 %v5191, %v5190
      %v5238 = vpack.c.b16 %v5193, %v5192
      %v5239 = vpack.c.b16 %v5195, %v5194
      %v5240 = vpack.c.b16 %v5197, %v5196
      %v5241 = vpack.c.b16 %v5199, %v5198
      %v5242 = vpack.c.b16 %v5201, %v5200
      %v5243 = vpack.c.b16 %v5203, %v5202
      %v5244 = vpack.c.b16 %v5205, %v5204
      %v5245 = vpack.c.b16 %v5207, %v5206
      %v5246 = vpack.c.b16 %v5209, %v5208
      %v5247 = vpack.c.b16 %v5211, %v5210
      %v5248 = vpack.c.b16 %v5213, %v5212
      %v5249 = vpack.c.b16 %v5215, %v5214
      %v5250 = vpack.c.b16 %v5217, %v5216
      %v5251 = vpack.c.b16 %v5219, %v5218
      %v5252 = vpack.c.b16 %v5221, %v5220
      %v5253 = vpack.c.b16 %v5223, %v5222
      %v5254 = vpack.c.b16 %v5225, %v5224
      %v5255 = vpack.c.b16 %v5227, %v5226
      %v5256 = vpack.c.b16 %v5229, %v5228
      %v5257 = vpack.c.b16 %v5231, %v5230
      %v5258 = vpack.c.b16 %v5233, %v5232
      %v5259 = vpack.c.b16 %v5235, %v5234
      %5284 = vmatprep.subr.bf16.mxu0 0
      %5285 = vmatpush1.bf16.msra.mxu0 %v5236
      %5286 = vmatprep.subr.bf16.mxu0 0
      %5287 = vmatpush1.bf16.msra.mxu0 %v5237
      %5288 = vmatprep.subr.bf16.mxu0 0
      %5289 = vmatpush1.bf16.msra.mxu0 %v5238
      %5290 = vmatprep.subr.bf16.mxu0 0
      %5291 = vmatpush1.bf16.msra.mxu0 %v5239
      %5292 = vmatprep.subr.bf16.mxu0 0
      %5293 = vmatpush1.bf16.msra.mxu0 %v5240
      %5294 = vmatprep.subr.bf16.mxu0 0
      %5295 = vmatpush1.bf16.msra.mxu0 %v5241
      %5296 = vmatprep.subr.bf16.mxu0 0
      %5297 = vmatpush1.bf16.msra.mxu0 %v5242
      %5298 = vmatprep.subr.bf16.mxu0 0
      %5299 = vmatpush1.bf16.msra.mxu0 %v5243
      %5300 = vmatprep.subr.bf16.mxu0 0
      %5301 = vmatpush1.bf16.msra.mxu0 %v5244
      %5302 = vmatprep.subr.bf16.mxu0 0
      %5303 = vmatpush1.bf16.msra.mxu0 %v5245
      %5304 = vmatprep.subr.bf16.mxu0 0
      %5305 = vmatpush1.bf16.msra.mxu0 %v5246
      %5306 = vmatprep.subr.bf16.mxu0 0
      %5307 = vmatpush1.bf16.msra.mxu0 %v5247
      %5308 = vmatprep.subr.bf16.mxu0 0
      %5309 = vmatpush1.bf16.msra.mxu0 %v5248
      %5310 = vmatprep.subr.bf16.mxu0 0
      %5311 = vmatpush1.bf16.msra.mxu0 %v5249
      %5312 = vmatprep.subr.bf16.mxu0 0
      %5313 = vmatpush1.bf16.msra.mxu0 %v5250
      %5314 = vmatprep.subr.bf16.mxu0 0
      %5315 = vmatpush1.bf16.msra.mxu0 %v5251
      %5316 = vmatprep.mubr.bf16.mxu0 %v3791
      %5317 = vmatmul.mubr.bf16.gmra.mrb[0].mxu0 %v3668
      %v5318 = vpop.f32.mrb[0].mxu0
      %v5319 = vadd.f32 0.0, %v5318
      %v5320 = vpop.f32.mrb[0].mxu0
      %v5321 = vpop.f32.mrb[0].mxu0
      %v5322 = vadd.f32 0.0, %v5321
      %v5323 = vpop.f32.mrb[0].mxu0
      %5324 = vmatprep.mubr.bf16.mxu0 %v3803
      %5325 = vmatmul.mubr.bf16.gmra.mrb[0].mxu0 %v3669
      %v5326 = vpop.f32.mrb[0].mxu0
      %v5327 = vadd.f32 0.0, %v5326
      %v5328 = vpop.f32.mrb[0].mxu0
      %v5329 = vpop.f32.mrb[0].mxu0
      %v5330 = vadd.f32 0.0, %v5329
      %v5331 = vpop.f32.mrb[0].mxu0
      %5332 = vmatprep.mubr.bf16.mxu0 %v3815
      %5333 = vmatmul.mubr.bf16.gmra.mrb[0].mxu0 %v3670
      %v5334 = vpop.f32.mrb[0].mxu0
      %v5335 = vadd.f32 0.0, %v5334
      %v5336 = vpop.f32.mrb[0].mxu0
      %v5337 = vpop.f32.mrb[0].mxu0
      %v5338 = vadd.f32 0.0, %v5337
      %v5339 = vpop.f32.mrb[0].mxu0
      %5340 = vmatprep.mubr.bf16.mxu0 %v3827
      %5341 = vmatmul.mubr.bf16.gmra.mrb[0].mxu0 %v3671
      %v5342 = vpop.f32.mrb[0].mxu0
      %v5343 = vadd.f32 0.0, %v5342
      %v5344 = vpop.f32.mrb[0].mxu0
      %v5345 = vpop.f32.mrb[0].mxu0
      %v5346 = vadd.f32 0.0, %v5345
      %v5347 = vpop.f32.mrb[0].mxu0
      %5348 = vmatprep.mubr.bf16.mxu0 %v3839
      %5349 = vmatmul.mubr.bf16.gmra.mrb[0].mxu0 %v3672
      %v5350 = vpop.f32.mrb[0].mxu0
      %v5351 = vadd.f32 0.0, %v5350
      %v5352 = vpop.f32.mrb[0].mxu0
      %v5353 = vpop.f32.mrb[0].mxu0
      %v5354 = vadd.f32 0.0, %v5353
      %v5355 = vpop.f32.mrb[0].mxu0
      %5356 = vmatprep.mubr.bf16.mxu0 %v3851
      %5357 = vmatmul.mubr.bf16.gmra.mrb[0].mxu0 %v3673
      %v5358 = vpop.f32.mrb[0].mxu0
      %v5359 = vadd.f32 0.0, %v5358
      %v5360 = vpop.f32.mrb[0].mxu0
      %v5361 = vpop.f32.mrb[0].mxu0
      %v5362 = vadd.f32 0.0, %v5361
      %v5363 = vpop.f32.mrb[0].mxu0
      %5364 = vmatprep.mubr.bf16.mxu0 %v3863
      %5365 = vmatmul.mubr.bf16.gmra.mrb[0].mxu0 %v3674
      %v5366 = vpop.f32.mrb[0].mxu0
      %v5367 = vadd.f32 0.0, %v5366
      %v5368 = vpop.f32.mrb[0].mxu0
      %v5369 = vpop.f32.mrb[0].mxu0
      %v5370 = vadd.f32 0.0, %v5369
      %v5371 = vpop.f32.mrb[0].mxu0
      %5372 = vmatprep.mubr.bf16.mxu0 %v3875
      %5373 = vmatmul.mubr.bf16.gmra.mrb[0].mxu0 %v3675
      %v5374 = vpop.f32.mrb[0].mxu0
      %v5375 = vadd.f32 0.0, %v5374
      %v5376 = vpop.f32.mrb[0].mxu0
      %v5377 = vpop.f32.mrb[0].mxu0
      %v5378 = vadd.f32 0.0, %v5377
      %v5379 = vpop.f32.mrb[0].mxu0
      %5380 = vmatprep.mubr.bf16.mxu0 %v3887
      %5381 = vmatmul.mubr.bf16.gmra.mrb[0].mxu0 %v3676
      %v5382 = vpop.f32.mrb[0].mxu0
      %v5383 = vadd.f32 0.0, %v5382
      %v5384 = vpop.f32.mrb[0].mxu0
      %v5385 = vpop.f32.mrb[0].mxu0
      %v5386 = vadd.f32 0.0, %v5385
      %v5387 = vpop.f32.mrb[0].mxu0
      %5388 = vmatprep.mubr.bf16.mxu0 %v3899
      %5389 = vmatmul.mubr.bf16.gmra.mrb[0].mxu0 %v3677
      %v5390 = vpop.f32.mrb[0].mxu0
      %v5391 = vadd.f32 0.0, %v5390
      %v5392 = vpop.f32.mrb[0].mxu0
      %v5393 = vpop.f32.mrb[0].mxu0
      %v5394 = vadd.f32 0.0, %v5393
      %v5395 = vpop.f32.mrb[0].mxu0
      %5396 = vmatprep.mubr.bf16.mxu0 %v3911
      %5397 = vmatmul.mubr.bf16.gmra.mrb[0].mxu0 %v3678
      %v5398 = vpop.f32.mrb[0].mxu0
      %v5399 = vadd.f32 0.0, %v5398
      %v5400 = vpop.f32.mrb[0].mxu0
      %v5401 = vpop.f32.mrb[0].mxu0
      %v5402 = vadd.f32 0.0, %v5401
      %v5403 = vpop.f32.mrb[0].mxu0
      %5404 = vmatprep.mubr.bf16.mxu0 %v3923
      %5405 = vmatmul.mubr.bf16.gmra.mrb[0].mxu0 %v3679
      %v5406 = vpop.f32.mrb[0].mxu0
      %v5407 = vadd.f32 0.0, %v5406
      %v5408 = vpop.f32.mrb[0].mxu0
      %v5409 = vpop.f32.mrb[0].mxu0
      %v5410 = vadd.f32 0.0, %v5409
      %v5411 = vpop.f32.mrb[0].mxu0
      %5412 = vmatprep.mubr.bf16.mxu0 %v3935
      %5413 = vmatmul.mubr.bf16.gmra.mrb[0].mxu0 %v3680
      %v5414 = vpop.f32.mrb[0].mxu0
      %v5415 = vadd.f32 0.0, %v5414
      %v5416 = vpop.f32.mrb[0].mxu0
      %v5417 = vpop.f32.mrb[0].mxu0
      %v5418 = vadd.f32 0.0, %v5417
      %v5419 = vpop.f32.mrb[0].mxu0
      %5420 = vmatprep.mubr.bf16.mxu0 %v3947
      %5421 = vmatmul.mubr.bf16.gmra.mrb[0].mxu0 %v3681
      %v5422 = vpop.f32.mrb[0].mxu0
      %v5423 = vadd.f32 0.0, %v5422
      %v5424 = vpop.f32.mrb[0].mxu0
      %v5425 = vpop.f32.mrb[0].mxu0
      %v5426 = vadd.f32 0.0, %v5425
      %v5427 = vpop.f32.mrb[0].mxu0
      %5428 = vmatprep.mubr.bf16.mxu0 %v3959
      %5429 = vmatmul.mubr.bf16.gmra.mrb[0].mxu0 %v3682
      %v5430 = vpop.f32.mrb[0].mxu0
      %v5431 = vadd.f32 0.0, %v5430
      %v5432 = vpop.f32.mrb[0].mxu0
      %v5433 = vpop.f32.mrb[0].mxu0
      %v5434 = vadd.f32 0.0, %v5433
      %v5435 = vpop.f32.mrb[0].mxu0
      %5436 = vmatprep.mubr.bf16.mxu0 %v3971
      %5437 = vmatmul.mubr.bf16.gmra.mrb[0].mxu0 %v3683
      %v5438 = vpop.f32.mrb[0].mxu0
      %v5439 = vadd.f32 0.0, %v5438
      %v5440 = vpop.f32.mrb[0].mxu0
      %v5441 = vpop.f32.mrb[0].mxu0
      %v5442 = vadd.f32 0.0, %v5441
      %v5443 = vpop.f32.mrb[0].mxu0
      %5444 = vdwg.mxu0
      %5445 = vmatprep.subr.bf16.mxu0 0
      %5446 = vmatpush1.bf16.msra.mxu0 %v5252
      %5447 = vmatprep.subr.bf16.mxu0 0
      %5448 = vmatpush1.bf16.msra.mxu0 %v5253
      %5449 = vmatprep.subr.bf16.mxu0 0
      %5450 = vmatpush1.bf16.msra.mxu0 %v5254
      %5451 = vmatprep.subr.bf16.mxu0 0
      %5452 = vmatpush1.bf16.msra.mxu0 %v5255
      %5453 = vmatprep.subr.bf16.mxu0 0
      %5454 = vmatpush1.bf16.msra.mxu0 %v5256
      %5455 = vmatprep.subr.bf16.mxu0 0
      %5456 = vmatpush1.bf16.msra.mxu0 %v5257
      %5457 = vmatprep.subr.bf16.mxu0 0
      %5458 = vmatpush1.bf16.msra.mxu0 %v5258
      %5459 = vmatprep.subr.bf16.mxu0 0
      %5460 = vmatpush1.bf16.msra.mxu0 %v5259
      %5461 = vmatprep.subr.bf16.mxu0 0
      %5462 = vmatpush1.bf16.msra.mxu0 0
      %5463 = vmatprep.subr.bf16.mxu0 0
      %5464 = vmatpush1.bf16.msra.mxu0 0
      %5465 = vmatprep.subr.bf16.mxu0 0
      %5466 = vmatpush1.bf16.msra.mxu0 0
      %5467 = vmatprep.subr.bf16.mxu0 0
      %5468 = vmatpush1.bf16.msra.mxu0 0
      %5469 = vmatprep.subr.bf16.mxu0 0
      %5470 = vmatpush1.bf16.msra.mxu0 0
      %5471 = vmatprep.subr.bf16.mxu0 0
      %5472 = vmatpush1.bf16.msra.mxu0 0
      %5473 = vmatprep.subr.bf16.mxu0 0
      %5474 = vmatpush1.bf16.msra.mxu0 0
      %5475 = vmatprep.subr.bf16.mxu0 0
      %5476 = vmatpush1.bf16.msra.mxu0 0
      %5477 = vmatprep.mubr.bf16.mxu0 0
      %5478 = vmatmul.mubr.bf16.gmra.mrb[0].mxu0 %v3998
      %v5479 = vpop.f32.mrb[0].mxu0
      %v5480 = vadd.f32 %v5319, %v5479
      %v5481 = vpop.f32.mrb[0].mxu0
      %v5482 = vpop.f32.mrb[0].mxu0
      %v5483 = vadd.f32 %v5322, %v5482
      %v5484 = vpop.f32.mrb[0].mxu0
      %5485 = vmatprep.mubr.bf16.mxu0 0
      %5486 = vmatmul.mubr.bf16.gmra.mrb[0].mxu0 %v4001
      %v5487 = vpop.f32.mrb[0].mxu0
      %v5488 = vadd.f32 %v5327, %v5487
      %v5489 = vpop.f32.mrb[0].mxu0
      %v5490 = vpop.f32.mrb[0].mxu0
      %v5491 = vadd.f32 %v5330, %v5490
      %v5492 = vpop.f32.mrb[0].mxu0
      %5493 = vmatprep.mubr.bf16.mxu0 0
      %5494 = vmatmul.mubr.bf16.gmra.mrb[0].mxu0 %v4004
      %v5495 = vpop.f32.mrb[0].mxu0
      %v5496 = vadd.f32 %v5335, %v5495
      %v5497 = vpop.f32.mrb[0].mxu0
      %v5498 = vpop.f32.mrb[0].mxu0
      %v5499 = vadd.f32 %v5338, %v5498
      %v5500 = vpop.f32.mrb[0].mxu0
      %5501 = vmatprep.mubr.bf16.mxu0 0
      %5502 = vmatmul.mubr.bf16.gmra.mrb[0].mxu0 %v4007
      %v5503 = vpop.f32.mrb[0].mxu0
      %v5504 = vadd.f32 %v5343, %v5503
      %v5505 = vpop.f32.mrb[0].mxu0
      %v5506 = vpop.f32.mrb[0].mxu0
      %v5507 = vadd.f32 %v5346, %v5506
      %v5508 = vpop.f32.mrb[0].mxu0
      %5509 = vmatprep.mubr.bf16.mxu0 0
      %5510 = vmatmul.mubr.bf16.gmra.mrb[0].mxu0 %v4010
      %v5511 = vpop.f32.mrb[0].mxu0
      %v5512 = vadd.f32 %v5351, %v5511
      %v5513 = vpop.f32.mrb[0].mxu0
      %v5514 = vpop.f32.mrb[0].mxu0
      %v5515 = vadd.f32 %v5354, %v5514
      %v5516 = vpop.f32.mrb[0].mxu0
      %5517 = vmatprep.mubr.bf16.mxu0 0
      %5518 = vmatmul.mubr.bf16.gmra.mrb[0].mxu0 %v4013
      %v5519 = vpop.f32.mrb[0].mxu0
      %v5520 = vadd.f32 %v5359, %v5519
      %v5521 = vpop.f32.mrb[0].mxu0
      %v5522 = vpop.f32.mrb[0].mxu0
      %v5523 = vadd.f32 %v5362, %v5522
      %v5524 = vpop.f32.mrb[0].mxu0
      %5525 = vmatprep.mubr.bf16.mxu0 0
      %5526 = vmatmul.mubr.bf16.gmra.mrb[0].mxu0 %v4016
      %v5527 = vpop.f32.mrb[0].mxu0
      %v5528 = vadd.f32 %v5367, %v5527
      %v5529 = vpop.f32.mrb[0].mxu0
      %v5530 = vpop.f32.mrb[0].mxu0
      %v5531 = vadd.f32 %v5370, %v5530
      %v5532 = vpop.f32.mrb[0].mxu0
      %5533 = vmatprep.mubr.bf16.mxu0 0
      %5534 = vmatmul.mubr.bf16.gmra.mrb[0].mxu0 %v4019
      %v5535 = vpop.f32.mrb[0].mxu0
      %v5536 = vadd.f32 %v5375, %v5535
      %v5537 = vpop.f32.mrb[0].mxu0
      %v5538 = vpop.f32.mrb[0].mxu0
      %v5539 = vadd.f32 %v5378, %v5538
      %v5540 = vpop.f32.mrb[0].mxu0
      %5541 = vmatprep.mubr.bf16.mxu0 0
      %5542 = vmatmul.mubr.bf16.gmra.mrb[0].mxu0 %v4022
      %v5543 = vpop.f32.mrb[0].mxu0
      %v5544 = vadd.f32 %v5383, %v5543
      %v5545 = vpop.f32.mrb[0].mxu0
      %v5546 = vpop.f32.mrb[0].mxu0
      %v5547 = vadd.f32 %v5386, %v5546
      %v5548 = vpop.f32.mrb[0].mxu0
      %5549 = vmatprep.mubr.bf16.mxu0 0
      %5550 = vmatmul.mubr.bf16.gmra.mrb[0].mxu0 %v4025
      %v5551 = vpop.f32.mrb[0].mxu0
      %v5552 = vadd.f32 %v5391, %v5551
      %v5553 = vpop.f32.mrb[0].mxu0
      %v5554 = vpop.f32.mrb[0].mxu0
      %v5555 = vadd.f32 %v5394, %v5554
      %v5556 = vpop.f32.mrb[0].mxu0
      %5557 = vmatprep.mubr.bf16.mxu0 0
      %5558 = vmatmul.mubr.bf16.gmra.mrb[0].mxu0 %v4028
      %v5559 = vpop.f32.mrb[0].mxu0
      %v5560 = vadd.f32 %v5399, %v5559
      %v5561 = vpop.f32.mrb[0].mxu0
      %v5562 = vpop.f32.mrb[0].mxu0
      %v5563 = vadd.f32 %v5402, %v5562
      %v5564 = vpop.f32.mrb[0].mxu0
      %5565 = vmatprep.mubr.bf16.mxu0 0
      %5566 = vmatmul.mubr.bf16.gmra.mrb[0].mxu0 %v4031
      %v5567 = vpop.f32.mrb[0].mxu0
      %v5568 = vadd.f32 %v5407, %v5567
      %v5569 = vpop.f32.mrb[0].mxu0
      %v5570 = vpop.f32.mrb[0].mxu0
      %v5571 = vadd.f32 %v5410, %v5570
      %v5572 = vpop.f32.mrb[0].mxu0
      %5573 = vmatprep.mubr.bf16.mxu0 0
      %5574 = vmatmul.mubr.bf16.gmra.mrb[0].mxu0 %v4034
      %v5575 = vpop.f32.mrb[0].mxu0
      %v5576 = vadd.f32 %v5415, %v5575
      %v5577 = vpop.f32.mrb[0].mxu0
      %v5578 = vpop.f32.mrb[0].mxu0
      %v5579 = vadd.f32 %v5418, %v5578
      %v5580 = vpop.f32.mrb[0].mxu0
      %5581 = vmatprep.mubr.bf16.mxu0 0
      %5582 = vmatmul.mubr.bf16.gmra.mrb[0].mxu0 %v4037
      %v5583 = vpop.f32.mrb[0].mxu0
      %v5584 = vadd.f32 %v5423, %v5583
      %v5585 = vpop.f32.mrb[0].mxu0
      %v5586 = vpop.f32.mrb[0].mxu0
      %v5587 = vadd.f32 %v5426, %v5586
      %v5588 = vpop.f32.mrb[0].mxu0
      %5589 = vmatprep.mubr.bf16.mxu0 0
      %5590 = vmatmul.mubr.bf16.gmra.mrb[0].mxu0 %v4040
      %v5591 = vpop.f32.mrb[0].mxu0
      %v5592 = vadd.f32 %v5431, %v5591
      %v5593 = vpop.f32.mrb[0].mxu0
      %v5594 = vpop.f32.mrb[0].mxu0
      %v5595 = vadd.f32 %v5434, %v5594
      %v5596 = vpop.f32.mrb[0].mxu0
      %5597 = vmatprep.mubr.bf16.mxu0 0
      %5598 = vmatmul.mubr.bf16.gmra.mrb[0].mxu0 %v4043
      %v5599 = vpop.f32.mrb[0].mxu0
      %v5600 = vadd.f32 %v5439, %v5599
      %v5601 = vpop.f32.mrb[0].mxu0
      %v5602 = vpop.f32.mrb[0].mxu0
      %v5603 = vadd.f32 %v5442, %v5602
      %v5604 = vpop.f32.mrb[0].mxu0
      %5605 = vdwg.mxu0
      %v5606 = vadd.f32 %v4965, %v5480
      %v5607 = vadd.f32 %v4968, %v5483
      %v5608 = vadd.f32 %v4973, %v5488
      %v5609 = vadd.f32 %v4976, %v5491
      %v5610 = vadd.f32 %v4981, %v5496
      %v5611 = vadd.f32 %v4984, %v5499
      %v5612 = vadd.f32 %v4989, %v5504
      %v5613 = vadd.f32 %v4992, %v5507
      %v5614 = vadd.f32 %v4997, %v5512
      %v5615 = vadd.f32 %v5000, %v5515
      %v5616 = vadd.f32 %v5005, %v5520
      %v5617 = vadd.f32 %v5008, %v5523
      %v5618 = vadd.f32 %v5013, %v5528
      %v5619 = vadd.f32 %v5016, %v5531
      %v5620 = vadd.f32 %v5021, %v5536
      %v5621 = vadd.f32 %v5024, %v5539
      %v5622 = vadd.f32 %v5029, %v5544
      %v5623 = vadd.f32 %v5032, %v5547
      %v5624 = vadd.f32 %v5037, %v5552
      %v5625 = vadd.f32 %v5040, %v5555
      %v5626 = vadd.f32 %v5045, %v5560
      %v5627 = vadd.f32 %v5048, %v5563
      %v5628 = vadd.f32 %v5053, %v5568
      %v5629 = vadd.f32 %v5056, %v5571
      %v5630 = vadd.f32 %v5061, %v5576
      %v5631 = vadd.f32 %v5064, %v5579
      %v5632 = vadd.f32 %v5069, %v5584
      %v5633 = vadd.f32 %v5072, %v5587
      %v5634 = vadd.f32 %v5077, %v5592
      %v5635 = vadd.f32 %v5080, %v5595
      %v5636 = vadd.f32 %v5085, %v5600
      %v5637 = vadd.f32 %v5088, %v5603
      %v5639 = vlaneseq
      %v5640 = vshrl.u32 %v5639, 7
      %v5641 = vsub.s32 0, %v5640
      %v5642 = vrot.slane %v3593, %v5641
      %v5644 = vadd.f32 %v5606, %v5642
      %v5645 = vadd.f32 %v5607, %v5642
      %v5646 = vadd.f32 %v5608, %v5642
      %v5647 = vadd.f32 %v5609, %v5642
      %v5648 = vadd.f32 %v5610, %v5642
      %v5649 = vadd.f32 %v5611, %v5642
      %v5650 = vadd.f32 %v5612, %v5642
      %v5651 = vadd.f32 %v5613, %v5642
      %v5652 = vadd.f32 %v5614, %v5642
      %v5653 = vadd.f32 %v5615, %v5642
      %v5654 = vadd.f32 %v5616, %v5642
      %v5655 = vadd.f32 %v5617, %v5642
      %v5656 = vadd.f32 %v5618, %v5642
      %v5657 = vadd.f32 %v5619, %v5642
      %v5658 = vadd.f32 %v5620, %v5642
      %v5659 = vadd.f32 %v5621, %v5642
      %v5660 = vadd.f32 %v5622, %v5642
      %v5661 = vadd.f32 %v5623, %v5642
      %v5662 = vadd.f32 %v5624, %v5642
      %v5663 = vadd.f32 %v5625, %v5642
      %v5664 = vadd.f32 %v5626, %v5642
      %v5665 = vadd.f32 %v5627, %v5642
      %v5666 = vadd.f32 %v5628, %v5642
      %v5667 = vadd.f32 %v5629, %v5642
      %v5668 = vadd.f32 %v5630, %v5642
      %v5669 = vadd.f32 %v5631, %v5642
      %v5670 = vadd.f32 %v5632, %v5642
      %v5671 = vadd.f32 %v5633, %v5642
      %v5672 = vadd.f32 %v5634, %v5642
      %v5673 = vadd.f32 %v5635, %v5642
      %v5674 = vadd.f32 %v5636, %v5642
      %v5675 = vadd.f32 %v5637, %v5642
      %v5676 = vadd.f32 %v5644, %v3507
      %v5677 = vadd.f32 %v5645, %v3508
      %v5678 = vadd.f32 %v5646, %v3509
      %v5679 = vadd.f32 %v5647, %v3510
      %v5680 = vadd.f32 %v5648, %v3511
      %v5681 = vadd.f32 %v5649, %v3512
      %v5682 = vadd.f32 %v5650, %v3513
      %v5683 = vadd.f32 %v5651, %v3514
      %v5684 = vadd.f32 %v5652, %v3515
      %v5685 = vadd.f32 %v5653, %v3516
      %v5686 = vadd.f32 %v5654, %v3517
      %v5687 = vadd.f32 %v5655, %v3518
      %v5688 = vadd.f32 %v5656, %v3519
      %v5689 = vadd.f32 %v5657, %v3520
      %v5690 = vadd.f32 %v5658, %v3521
      %v5691 = vadd.f32 %v5659, %v3522
      %v5692 = vadd.f32 %v5660, %v3523
      %v5693 = vadd.f32 %v5661, %v3524
      %v5694 = vadd.f32 %v5662, %v3525
      %v5695 = vadd.f32 %v5663, %v3526
      %v5696 = vadd.f32 %v5664, %v3527
      %v5697 = vadd.f32 %v5665, %v3528
      %v5698 = vadd.f32 %v5666, %v3529
      %v5699 = vadd.f32 %v5667, %v3530
      %v5700 = vadd.f32 %v5668, %v3531
      %v5701 = vadd.f32 %v5669, %v3532
      %v5702 = vadd.f32 %v5670, %v3533
      %v5703 = vadd.f32 %v5671, %v3534
      %v5704 = vadd.f32 %v5672, %v3535
      %v5705 = vadd.f32 %v5673, %v3536
      %v5706 = vadd.f32 %v5674, %v3537
      %v5707 = vadd.f32 %v5675, %v3538
      %v5708 = vmax.f32 %v5676, 0.0
      %v5709 = vmax.f32 %v5677, 0.0
      %v5710 = vmax.f32 %v5678, 0.0
      %v5711 = vmax.f32 %v5679, 0.0
      %v5712 = vmax.f32 %v5680, 0.0
      %v5713 = vmax.f32 %v5681, 0.0
      %v5714 = vmax.f32 %v5682, 0.0
      %v5715 = vmax.f32 %v5683, 0.0
      %v5716 = vmax.f32 %v5684, 0.0
      %v5717 = vmax.f32 %v5685, 0.0
      %v5718 = vmax.f32 %v5686, 0.0
      %v5719 = vmax.f32 %v5687, 0.0
      %v5720 = vmax.f32 %v5688, 0.0
      %v5721 = vmax.f32 %v5689, 0.0
      %v5722 = vmax.f32 %v5690, 0.0
      %v5723 = vmax.f32 %v5691, 0.0
      %v5724 = vmax.f32 %v5692, 0.0
      %v5725 = vmax.f32 %v5693, 0.0
      %v5726 = vmax.f32 %v5694, 0.0
      %v5727 = vmax.f32 %v5695, 0.0
      %v5728 = vmax.f32 %v5696, 0.0
      %v5729 = vmax.f32 %v5697, 0.0
      %v5730 = vmax.f32 %v5698, 0.0
      %v5731 = vmax.f32 %v5699, 0.0
      %v5732 = vmax.f32 %v5700, 0.0
      %v5733 = vmax.f32 %v5701, 0.0
      %v5734 = vmax.f32 %v5702, 0.0
      %v5735 = vmax.f32 %v5703, 0.0
      %v5736 = vmax.f32 %v5704, 0.0
      %v5737 = vmax.f32 %v5705, 0.0
      %v5738 = vmax.f32 %v5706, 0.0
      %v5739 = vmax.f32 %v5707, 0.0
      %v5740 = vpack.c.bf16 %v5709, %v5708
      %v5741 = vpack.c.bf16 %v5711, %v5710
      %v5742 = vpack.c.bf16 %v5713, %v5712
      %v5743 = vpack.c.bf16 %v5715, %v5714
      %v5744 = vpack.c.bf16 %v5717, %v5716
      %v5745 = vpack.c.bf16 %v5719, %v5718
      %v5746 = vpack.c.bf16 %v5721, %v5720
      %v5747 = vpack.c.bf16 %v5723, %v5722
      %v5748 = vpack.c.bf16 %v5725, %v5724
      %v5749 = vpack.c.bf16 %v5727, %v5726
      %v5750 = vpack.c.bf16 %v5729, %v5728
      %v5751 = vpack.c.bf16 %v5731, %v5730
      %v5752 = vpack.c.bf16 %v5733, %v5732
      %v5753 = vpack.c.bf16 %v5735, %v5734
      %v5754 = vpack.c.bf16 %v5737, %v5736
      %v5755 = vpack.c.bf16 %v5739, %v5738
      %v5772 = vunpack.c.l.b16 %v5740
      %v5773 = vunpack.c.h.b16 %v5740
      %v5774 = vunpack.c.l.b16 %v5741
      %v5775 = vunpack.c.h.b16 %v5741
      %v5776 = vunpack.c.l.b16 %v5742
      %v5777 = vunpack.c.h.b16 %v5742
      %v5778 = vunpack.c.l.b16 %v5743
      %v5779 = vunpack.c.h.b16 %v5743
      %v5780 = vunpack.c.l.b16 %v5744
      %v5781 = vunpack.c.h.b16 %v5744
      %v5782 = vunpack.c.l.b16 %v5745
      %v5783 = vunpack.c.h.b16 %v5745
      %v5784 = vunpack.c.l.b16 %v5746
      %v5785 = vunpack.c.h.b16 %v5746
      %v5786 = vunpack.c.l.b16 %v5747
      %v5787 = vunpack.c.h.b16 %v5747
      %v5788 = vunpack.c.l.b16 %v5748
      %v5789 = vunpack.c.h.b16 %v5748
      %v5790 = vunpack.c.l.b16 %v5749
      %v5791 = vunpack.c.h.b16 %v5749
      %v5792 = vunpack.c.l.b16 %v5750
      %v5793 = vunpack.c.h.b16 %v5750
      %v5794 = vunpack.c.l.b16 %v5751
      %v5795 = vunpack.c.h.b16 %v5751
      %v5796 = vunpack.c.l.b16 %v5752
      %v5797 = vunpack.c.h.b16 %v5752
      %v5798 = vunpack.c.l.b16 %v5753
      %v5799 = vunpack.c.h.b16 %v5753
      %v5800 = vunpack.c.l.b16 %v5754
      %v5801 = vunpack.c.h.b16 %v5754
      %v5802 = vunpack.c.l.b16 %v5755
      %v5803 = vunpack.c.h.b16 %v5755
      %v5804 = vpack.c.b16 %v5772, %v5772
      %v5805 = vpack.c.b16 %v5773, %v5773
      %v5806 = vpack.c.b16 %v5774, %v5774
      %v5807 = vpack.c.b16 %v5775, %v5775
      %v5808 = vpack.c.b16 %v5776, %v5776
      %v5809 = vpack.c.b16 %v5777, %v5777
      %v5810 = vpack.c.b16 %v5778, %v5778
      %v5811 = vpack.c.b16 %v5779, %v5779
      %v5812 = vpack.c.b16 %v5780, %v5780
      %v5813 = vpack.c.b16 %v5781, %v5781
      %v5814 = vpack.c.b16 %v5782, %v5782
      %v5815 = vpack.c.b16 %v5783, %v5783
      %v5816 = vpack.c.b16 %v5784, %v5784
      %v5817 = vpack.c.b16 %v5785, %v5785
      %v5818 = vpack.c.b16 %v5786, %v5786
      %v5819 = vpack.c.b16 %v5787, %v5787
      %v5820 = vpack.c.b16 %v5788, %v5788
      %v5821 = vpack.c.b16 %v5789, %v5789
      %v5822 = vpack.c.b16 %v5790, %v5790
      %v5823 = vpack.c.b16 %v5791, %v5791
      %v5824 = vpack.c.b16 %v5792, %v5792
      %v5825 = vpack.c.b16 %v5793, %v5793
      %v5826 = vpack.c.b16 %v5794, %v5794
      %v5827 = vpack.c.b16 %v5795, %v5795
      %v5828 = vpack.c.b16 %v5796, %v5796
      %v5829 = vpack.c.b16 %v5797, %v5797
      %v5830 = vpack.c.b16 %v5798, %v5798
      %v5831 = vpack.c.b16 %v5799, %v5799
      %v5832 = vpack.c.b16 %v5800, %v5800
      %v5833 = vpack.c.b16 %v5801, %v5801
      %v5834 = vpack.c.b16 %v5802, %v5802
      %v5835 = vpack.c.b16 %v5803, %v5803
      %5868 = vst [vmem:[%s224] sm:$0xf] %v5804
      %5869 = vst [vmem:[%s224 + $0x4] sm:$0xf] %v5805
      %5870 = vst [vmem:[%s224 + $0x8] sm:$0xf] %v5806
      %5871 = vst [vmem:[%s224 + $0xc] sm:$0xf] %v5807
      %5872 = vst [vmem:[%s224 + $0x10] sm:$0xf] %v5808
      %5873 = vst [vmem:[%s224 + $0x14] sm:$0xf] %v5809
      %5874 = vst [vmem:[%s224 + $0x18] sm:$0xf] %v5810
      %5875 = vst [vmem:[%s224 + $0x1c] sm:$0xf] %v5811
      %5876 = vst [vmem:[%s224 + $0x20] sm:$0xf] %v5812
      %5877 = vst [vmem:[%s224 + $0x24] sm:$0xf] %v5813
      %5878 = vst [vmem:[%s224 + $0x28] sm:$0xf] %v5814
      %5879 = vst [vmem:[%s224 + $0x2c] sm:$0xf] %v5815
      %5880 = vst [vmem:[%s224 + $0x30] sm:$0xf] %v5816
      %5881 = vst [vmem:[%s224 + $0x34] sm:$0xf] %v5817
      %5882 = vst [vmem:[%s224 + $0x38] sm:$0xf] %v5818
      %5883 = vst [vmem:[%s224 + $0x3c] sm:$0xf] %v5819
      %5884 = vst [vmem:[%s224 + $0x40] sm:$0xf] %v5820
      %5885 = vst [vmem:[%s224 + $0x44] sm:$0xf] %v5821
      %5886 = vst [vmem:[%s224 + $0x48] sm:$0xf] %v5822
      %5887 = vst [vmem:[%s224 + $0x4c] sm:$0xf] %v5823
      %5888 = vst [vmem:[%s224 + $0x50] sm:$0xf] %v5824
      %5889 = vst [vmem:[%s224 + $0x54] sm:$0xf] %v5825
      %5890 = vst [vmem:[%s224 + $0x58] sm:$0xf] %v5826
      %5891 = vst [vmem:[%s224 + $0x5c] sm:$0xf] %v5827
      %5892 = vst [vmem:[%s224 + $0x60] sm:$0xf] %v5828
      %5893 = vst [vmem:[%s224 + $0x64] sm:$0xf] %v5829
      %5894 = vst [vmem:[%s224 + $0x68] sm:$0xf] %v5830
      %5895 = vst [vmem:[%s224 + $0x6c] sm:$0xf] %v5831
      %5896 = vst [vmem:[%s224 + $0x70] sm:$0xf] %v5832
      %5897 = vst [vmem:[%s224 + $0x74] sm:$0xf] %v5833
      %5898 = vst [vmem:[%s224 + $0x78] sm:$0xf] %v5834
      %5899 = vst [vmem:[%s224 + $0x7c] sm:$0xf] %v5835
      %p5900 = scmp.lt.s32.totalorder %s16, 1
      %s5901 = scalar_select %p5900, %s16, 1
      %s5902 = smul.addr %s5901, 32
      %s5903 = smul.addr %s5902, 4
      %s5904 = scalar_lea.vmem %s5, %s5903
      // Predicated region
      $region41: #{_lambda_.1} parent=39 // pred_check
        %p5905 = pneg %p144
      $region42: #{_lambda_.1} parent=39 // pred_check_branch
        %5907 = sbr.rel (%p5905) target = $region44
      $region43: #{_lambda_.1} parent=39 // pred_region
        _
      $region44: #{_lambda_.1} parent=39 // pred_fallthru
        _
    $region40: #{_lambda_.1} parent=5 // pred_fallthru
      _
    %p5908 = scmp.le.s32.totalorder 2, %s11
    // Predicated region
    $region45: #{_lambda_.1} parent=5 // pred_check
      %p5909 = pneg %p5908
    $region46: #{_lambda_.1} parent=5 // pred_check_branch
      %5911 = sbr.rel (%p5909) target = $region48
    $region47: #{_lambda_.1} parent=5 // pred_region
      %s5912 = ssub.s32 %s11, 2
      // Predicated region
      $region49: #{_lambda_.1} parent=47 // pred_check
        %p5913 = pneg %p150
      $region50: #{_lambda_.1} parent=47 // pred_check_branch
        %5915 = sbr.rel (%p5913) target = $region52
      $region51: #{_lambda_.1} parent=47 // pred_region
        %p5916 = scmp.lt.s32.totalorder %s17, 1
        %s5917 = scalar_select %p5916, %s17, 1
        %s5918 = smul.addr %s5917, 32
        %s5919 = smul.addr %s5918, 4
        %s5920 = scalar_lea.vmem %s5, %s5919
      $region52: #{_lambda_.1} parent=47 // pred_fallthru
        _
    $region48: #{_lambda_.1} parent=5 // pred_fallthru
      _
  $region6: #{_lambda_.1} parent=0 // loop_footer
    %s15 = sadd.s32 1, %s11
  $region7: #{_lambda_.1} parent=0 // loop_footer_branch
    %10 = sbr.rel target = $region3
  $region8: #{_lambda_.1} parent=0 // loop_exit
    _

</llo_original>
